<compile_context>
chip_gen: v7x
topology: tpu7x:2x2x1
jax: 0.10.0
libtpu: 0.0.40
codegen_flags: <defaults>
</compile_context>

<pallas_src>
import math

import jax
import jax.numpy as jnp
from jax.experimental import pallas as pl
from jax.experimental.pallas import tpu as pltpu

# ----------------------------- model config (small, synthetic) ----------------
B = 2            # batch
S = 8            # sequence length
BS = B * S       # flattened token count
H = 32           # hidden size
NH = 2           # attention heads
HD = H // NH     # head dim
I = 64           # FFN intermediate size
L = 2            # number of transformer layers
VOCAB = 100
TYPES = 2
LN_EPS = 1e-12

_WEIGHT_NAMES = ("wqkv", "bqkv", "wo", "bo", "ln1g", "ln1b",
                 "w1", "b1", "w2", "b2", "ln2g", "ln2b")


# ----------------------------- in-kernel helpers ------------------------------
def _layer_norm(x, g, b):
    mu = jnp.mean(x, axis=-1, keepdims=True)
    var = jnp.mean((x - mu) * (x - mu), axis=-1, keepdims=True)
    return (x - mu) * jax.lax.rsqrt(var + LN_EPS) * g + b


_ERF_P = 0.3275911
_ERF_A = (0.254829592, -0.284496736, 1.421413741, -1.453152027, 1.061405429)


def _erf(x):
    # Abramowitz & Stegun 7.1.26 (|err| < 1.5e-7): exact-GELU fidelity without
    # relying on a lax.erf lowering inside Mosaic.
    sgn = jnp.where(x >= 0.0, 1.0, -1.0)
    a = jnp.abs(x)
    t = 1.0 / (1.0 + _ERF_P * a)
    poly = t * (_ERF_A[0] + t * (_ERF_A[1] + t * (_ERF_A[2]
               + t * (_ERF_A[3] + t * _ERF_A[4]))))
    return sgn * (1.0 - poly * jnp.exp(-a * a))


def _gelu_exact(x):
    # matches torch nn.GELU (erf form), not the tanh approximation
    return 0.5 * x * (1.0 + _erf(x * (1.0 / math.sqrt(2.0))))


# ----------------------------- fused encoder kernel ---------------------------
def encoder_kernel(x_ref, amask_ref, pool_ref,
                   wqkv_ref, bqkv_ref, wo_ref, bo_ref,
                   ln1g_ref, ln1b_ref, w1_ref, b1_ref,
                   w2_ref, b2_ref, ln2g_ref, ln2b_ref,
                   out_ref):
    x = x_ref[0]              # (B*S, H)   token activations, batch flattened
    add_mask = amask_ref[0]   # (B*S, B*S) block-diag additive attention bias
    pool = pool_ref[0]        # (B, B*S)   masked mean-pooling matrix
    scale = 1.0 / math.sqrt(HD)

    for l in range(L):        # static unrolled layer loop; everything stays in VMEM
        # fused QKV projection: one (B*S,H)x(H,3H) matmul
        qkv = jnp.dot(x, wqkv_ref[0, l],
                      preferred_element_type=jnp.float32) + bqkv_ref[0, l]

        ctx_heads = []
        for h in range(NH):   # static unrolled head loop (NH=2)
            qh = qkv[:, h * HD:(h + 1) * HD]                    # (B*S, HD)
            kh = qkv[:, H + h * HD:H + (h + 1) * HD]
            vh = qkv[:, 2 * H + h * HD:2 * H + (h + 1) * HD]
            s = jnp.dot(qh, kh.T,
                        preferred_element_type=jnp.float32) * scale + add_mask
            s = s - jnp.max(s, axis=-1, keepdims=True)
            p = jnp.exp(s)
            p = p * pl.reciprocal(jnp.sum(p, axis=-1, keepdims=True), approx=True)
            ctx_heads.append(jnp.dot(p, vh, preferred_element_type=jnp.float32))
        ctx = jnp.concatenate(ctx_heads, axis=-1)               # (B*S, H)

        attn_out = jnp.dot(ctx, wo_ref[0, l],
                           preferred_element_type=jnp.float32) + bo_ref[0, l]
        h1 = _layer_norm(x + attn_out, ln1g_ref[0, l], ln1b_ref[0, l])

        ffn = jnp.dot(h1, w1_ref[0, l],
                      preferred_element_type=jnp.float32) + b1_ref[0, l]
        ffn = _gelu_exact(ffn)
        ffn = jnp.dot(ffn, w2_ref[0, l],
                      preferred_element_type=jnp.float32) + b2_ref[0, l]
        x = _layer_norm(h1 + ffn, ln2g_ref[0, l], ln2b_ref[0, l])

    # masked mean pooling (one (B,B*S)x(B*S,H) matmul) + L2 normalize
    summed = jnp.dot(pool, x, preferred_element_type=jnp.float32)        # (B, H)
    denom = jnp.maximum(jnp.sum(pool, axis=-1, keepdims=True), 1e-9)     # (B, 1)
    pooled = summed * pl.reciprocal(denom, approx=True)
    sumsq = jnp.sum(pooled * pooled, axis=-1, keepdims=True)
    # F.normalize(p=2, dim=1): x / max(||x||, 1e-12)
    out_ref[0] = pooled * jax.lax.rsqrt(jnp.maximum(sumsq, 1e-24))


# ----------------------------- JAX glue (embeddings, masks) -------------------
def _layernorm_jax(x, g, b):
    mu = jnp.mean(x, axis=-1, keepdims=True)
    var = jnp.mean((x - mu) ** 2, axis=-1, keepdims=True)
    return (x - mu) * jax.lax.rsqrt(var + LN_EPS) * g + b


def _embed(enc, ids, token_type_ids):
    # embedding-table gathers are glue -> plain JAX
    x = (enc["word_emb"][ids]
         + enc["pos_emb"][None, :, :]
         + enc["type_emb"][token_type_ids])
    x = _layernorm_jax(x, enc["emb_ln_g"], enc["emb_ln_b"])
    return x.astype(jnp.float32).reshape(BS, H)


def _attn_bias(mask):
    # block-diagonal additive bias: 0 where (same batch AND key is a real token),
    # -1e9 elsewhere (padded keys / cross-batch positions).
    m = mask.astype(jnp.float32).reshape(BS)
    bidx = jnp.arange(BS) // S
    same = bidx[:, None] == bidx[None, :]
    valid = m[None, :] > 0.5
    return jnp.where(same & valid, 0.0, -1e9).astype(jnp.float32)        # (BS, BS)


def _pool_matrix(mask):
    # pool[b, b*S + s] = mask[b, s]; zero off-block -> masked mean via one matmul
    m = mask.astype(jnp.float32).reshape(BS)
    bidx = jnp.arange(BS) // S
    sel = (jnp.arange(B)[:, None] == bidx[None, :]).astype(jnp.float32)  # (B, BS)
    return sel * m[None, :]


# ----------------------------- fused pallas_call wrapper ----------------------
def _enc_block_spec(arr):
    shape = arr.shape
    ndim = len(shape)
    return pl.BlockSpec((1,) + shape[1:], lambda e, _n=ndim: (e,) + (0,) * (_n - 1))


def encode_fused(encoders, ids_list, mask_list, tt_list):
    """Run 1..E independent sentence encoders in a single pallas_call.

    Grid axis = encoder index, marked 'parallel' -> the two encoders of the
    mode=None path run on the two TensorCores on v7x (serial loop elsewhere).
    """
    E = len(encoders)
    xs = jnp.stack([_embed(enc, ids, tt)
                    for enc, ids, tt in zip(encoders, ids_list, tt_list)])   # (E,BS,H)
    amasks = jnp.stack([_attn_bias(m) for m in mask_list])                   # (E,BS,BS)
    pools = jnp.stack([_pool_matrix(m) for m in mask_list])                  # (E,B,BS)
    weights = [jnp.stack([enc[name] for enc in encoders])
               for name in _WEIGHT_NAMES]                                    # (E,L,...)

    in_arrays = [xs, amasks, pools] + weights
    out = pl.pallas_call(
        encoder_kernel,
        out_shape=jax.ShapeDtypeStruct((E, B, H), jnp.float32),
        grid_spec=pltpu.PrefetchScalarGridSpec(
            num_scalar_prefetch=0, grid=(E,),
            in_specs=[_enc_block_spec(a) for a in in_arrays],
            out_specs=pl.BlockSpec((1, B, H), lambda e: (e, 0, 0))),
        compiler_params=pltpu.CompilerParams(dimension_semantics=("parallel",)),
    )(*in_arrays)
    return out                                                               # (E, B, H)


# ----------------------------- pair_sbert_freeze_key --------------------------
def pair_sbert_freeze_key_forward(params, inputs, mode=None):
    # NOTE: key encoder is "frozen" in the original module (requires_grad=False);
    # this only affects training, forward semantics are identical.
    if mode is not None:
        enc = params["query"] if mode == "query" else params["key"]
        out = encode_fused([enc], [inputs["ids"]], [inputs["mask"]],
                           [inputs["token_type_ids"]])
        return out[0]
    out = encode_fused(
        [params["query"], params["key"]],
        [inputs["query"]["ids"], inputs["key"]["ids"]],
        [inputs["query"]["mask"], inputs["key"]["mask"]],
        [inputs["query"]["token_type_ids"], inputs["key"]["token_type_ids"]])
    return {"query": out[0], "key": out[1]}


# ----------------------------- deterministic param init -----------------------
def init_encoder(seed):
    # TODO(synk): real module loads HF pretrained weights; synthetic init here.
    root = jax.random.PRNGKey(seed)
    keys = jax.random.split(root, 3 + L)

    def nrm(k, shape):
        return 0.02 * jax.random.normal(k, shape, dtype=jnp.float32)

    enc = {
        "word_emb": nrm(keys[0], (VOCAB, H)),
        "pos_emb": nrm(keys[1], (S, H)),
        "type_emb": nrm(keys[2], (TYPES, H)),
        "emb_ln_g": jnp.ones((H,), jnp.float32),
        "emb_ln_b": jnp.zeros((H,), jnp.float32),
    }
    wqkv, wo, w1, w2 = [], [], [], []
    for l in range(L):
        lk = jax.random.split(keys[3 + l], 6)
        # fused QKV weight = [Wq | Wk | Wv]  -> (H, 3H)
        wqkv.append(jnp.concatenate(
            [nrm(lk[0], (H, H)), nrm(lk[1], (H, H)), nrm(lk[2], (H, H))], axis=-1))
        wo.append(nrm(lk[3], (H, H)))
        w1.append(nrm(lk[4], (H, I)))
        w2.append(nrm(lk[5], (I, H)))
    enc.update({
        "wqkv": jnp.stack(wqkv), "bqkv": jnp.zeros((L, 1, 3 * H), jnp.float32),
        "wo": jnp.stack(wo), "bo": jnp.zeros((L, 1, H), jnp.float32),
        "ln1g": jnp.ones((L, 1, H), jnp.float32),
        "ln1b": jnp.zeros((L, 1, H), jnp.float32),
        "w1": jnp.stack(w1), "b1": jnp.zeros((L, 1, I), jnp.float32),
        "w2": jnp.stack(w2), "b2": jnp.zeros((L, 1, H), jnp.float32),
        "ln2g": jnp.ones((L, 1, H), jnp.float32),
        "ln2b": jnp.zeros((L, 1, H), jnp.float32),
    })
    return enc


# ----------------------------- main --------------------------------------------
if __name__ == "__main__":
    params = {"query": init_encoder(0), "key": init_encoder(1)}

    rk = jax.random.PRNGKey(0)
    k1, k2 = jax.random.split(rk, 2)
    q_ids = jax.random.randint(k1, (B, S), 0, VOCAB, dtype=jnp.int32)
    t_ids = jax.random.randint(k2, (B, S), 0, VOCAB, dtype=jnp.int32)
    # masks with some padding at the tail
    q_mask = (jnp.arange(S)[None, :] < jnp.array([[S], [S - 2]])).astype(jnp.float32)
    t_mask = (jnp.arange(S)[None, :] < jnp.array([[S - 3], [S]])).astype(jnp.float32)
    q_tt = jnp.zeros((B, S), jnp.int32)
    t_tt = jnp.zeros((B, S), jnp.int32)

    inputs = {
        "query": {"ids": q_ids, "mask": q_mask, "token_type_ids": q_tt},
        "key":   {"ids": t_ids, "mask": t_mask, "token_type_ids": t_tt},
    }

    out = pair_sbert_freeze_key_forward(params, inputs)        # mode=None path
    out_q_only = pair_sbert_freeze_key_forward(
        params, inputs["query"], mode="query")                 # mode='query' path

    jax.block_until_ready(out["query"])
    jax.block_until_ready(out["key"])
    jax.block_until_ready(out_q_only)

    assert out["query"].shape == (B, H) and out["key"].shape == (B, H)
    assert out_q_only.shape == (B, H)
    # sentence embeddings are L2-normalized
    assert jnp.allclose(jnp.linalg.norm(out["query"], axis=1), 1.0, atol=1e-4)
    assert jnp.allclose(jnp.linalg.norm(out["key"], axis=1), 1.0, atol=1e-4)
    # single-encoder path agrees with the fused two-encoder path
    assert jnp.allclose(out_q_only, out["query"], atol=1e-5)

    print("KERNEL_OK")
</pallas_src>

<mosaic_0001>
module attributes {stable_mosaic.version = 11 : i64} {
  func.func @encoder_kernel(%arg0: i32, %arg1: memref<1x16x32xf32, #tpu.memory_space<vmem>>, %arg2: memref<1x16x16xf32, #tpu.memory_space<vmem>>, %arg3: memref<1x2x16xf32, #tpu.memory_space<vmem>>, %arg4: memref<1x2x32x96xf32, #tpu.memory_space<vmem>>, %arg5: memref<1x2x1x96xf32, #tpu.memory_space<vmem>>, %arg6: memref<1x2x32x32xf32, #tpu.memory_space<vmem>>, %arg7: memref<1x2x1x32xf32, #tpu.memory_space<vmem>>, %arg8: memref<1x2x1x32xf32, #tpu.memory_space<vmem>>, %arg9: memref<1x2x1x32xf32, #tpu.memory_space<vmem>>, %arg10: memref<1x2x32x64xf32, #tpu.memory_space<vmem>>, %arg11: memref<1x2x1x64xf32, #tpu.memory_space<vmem>>, %arg12: memref<1x2x64x32xf32, #tpu.memory_space<vmem>>, %arg13: memref<1x2x1x32xf32, #tpu.memory_space<vmem>>, %arg14: memref<1x2x1x32xf32, #tpu.memory_space<vmem>>, %arg15: memref<1x2x1x32xf32, #tpu.memory_space<vmem>>, %arg16: memref<1x2x32xf32, #tpu.memory_space<vmem>>) attributes {dimension_semantics = [#tpu.dimension_semantics<parallel>], iteration_bounds = array<i64: 2>, scalar_prefetch = 0 : i64, scratch_operands = 0 : i64, tpu.core_type = #tpu.core_type<tc>, window_params = [{transform_indices = @transform_0, window_bounds = array<i64: 1, 16, 32>}, {transform_indices = @transform_1, window_bounds = array<i64: 1, 16, 16>}, {transform_indices = @transform_2, window_bounds = array<i64: 1, 2, 16>}, {transform_indices = @transform_3, window_bounds = array<i64: 1, 2, 32, 96>}, {transform_indices = @transform_4, window_bounds = array<i64: 1, 2, 1, 96>}, {transform_indices = @transform_5, window_bounds = array<i64: 1, 2, 32, 32>}, {transform_indices = @transform_6, window_bounds = array<i64: 1, 2, 1, 32>}, {transform_indices = @transform_7, window_bounds = array<i64: 1, 2, 1, 32>}, {transform_indices = @transform_8, window_bounds = array<i64: 1, 2, 1, 32>}, {transform_indices = @transform_9, window_bounds = array<i64: 1, 2, 32, 64>}, {transform_indices = @transform_10, window_bounds = array<i64: 1, 2, 1, 64>}, {transform_indices = @transform_11, window_bounds = array<i64: 1, 2, 64, 32>}, {transform_indices = @transform_12, window_bounds = array<i64: 1, 2, 1, 32>}, {transform_indices = @transform_13, window_bounds = array<i64: 1, 2, 1, 32>}, {transform_indices = @transform_14, window_bounds = array<i64: 1, 2, 1, 32>}, {transform_indices = @transform_15, window_bounds = array<i64: 1, 2, 32>}]} {
    %c0 = arith.constant 0 : index
    %c0_0 = arith.constant 0 : index
    %c0_1 = arith.constant 0 : index
    %0 = vector.load %arg1[%c0, %c0_0, %c0_1] : memref<1x16x32xf32, #tpu.memory_space<vmem>>, vector<1x16x32xf32>
    %1 = vector.shape_cast %0 : vector<1x16x32xf32> to vector<16x32xf32>
    %c0_2 = arith.constant 0 : index
    %c0_3 = arith.constant 0 : index
    %c0_4 = arith.constant 0 : index
    %2 = vector.load %arg2[%c0_2, %c0_3, %c0_4] : memref<1x16x16xf32, #tpu.memory_space<vmem>>, vector<1x16x16xf32>
    %3 = vector.shape_cast %2 : vector<1x16x16xf32> to vector<16x16xf32>
    %c0_5 = arith.constant 0 : index
    %c0_6 = arith.constant 0 : index
    %c0_7 = arith.constant 0 : index
    %4 = vector.load %arg3[%c0_5, %c0_6, %c0_7] : memref<1x2x16xf32, #tpu.memory_space<vmem>>, vector<1x2x16xf32>
    %5 = vector.shape_cast %4 : vector<1x2x16xf32> to vector<2x16xf32>
    %c0_8 = arith.constant 0 : index
    %c0_9 = arith.constant 0 : index
    %c0_10 = arith.constant 0 : index
    %c0_11 = arith.constant 0 : index
    %6 = vector.load %arg4[%c0_8, %c0_9, %c0_10, %c0_11] : memref<1x2x32x96xf32, #tpu.memory_space<vmem>>, vector<1x1x32x96xf32>
    %7 = vector.shape_cast %6 : vector<1x1x32x96xf32> to vector<32x96xf32>
    %cst = arith.constant dense<0.000000e+00> : vector<16x96xf32>
    %8 = tpu.matmul %1, %7, %cst {dimension_numbers = #tpu.dot_dimension_numbers<[1], [0], [0], [1], [0, 0, 1, 1], [], []>} : vector<16x32xf32>, vector<32x96xf32>, vector<16x96xf32> -> vector<16x96xf32>
    %c0_12 = arith.constant 0 : index
    %c0_13 = arith.constant 0 : index
    %c0_14 = arith.constant 0 : index
    %c0_15 = arith.constant 0 : index
    %9 = vector.load %arg5[%c0_12, %c0_13, %c0_14, %c0_15] : memref<1x2x1x96xf32, #tpu.memory_space<vmem>>, vector<1x1x1x96xf32>
    %10 = vector.shape_cast %9 : vector<1x1x1x96xf32> to vector<1x96xf32>
    %11 = vector.broadcast %10 : vector<1x96xf32> to vector<16x96xf32>
    %12 = arith.addf %8, %11 : vector<16x96xf32>
    %13 = vector.extract_strided_slice %12 {offsets = [0, 0], sizes = [16, 16], strides = [1, 1]} : vector<16x96xf32> to vector<16x16xf32>
    %14 = vector.extract_strided_slice %12 {offsets = [0, 32], sizes = [16, 16], strides = [1, 1]} : vector<16x96xf32> to vector<16x16xf32>
    %15 = vector.extract_strided_slice %12 {offsets = [0, 64], sizes = [16, 16], strides = [1, 1]} : vector<16x96xf32> to vector<16x16xf32>
    %16 = tpu.transpose %14, [1, 0] : vector<16x16xf32> -> vector<16x16xf32>
    %cst_16 = arith.constant dense<0.000000e+00> : vector<16x16xf32>
    %17 = tpu.matmul %13, %16, %cst_16 {dimension_numbers = #tpu.dot_dimension_numbers<[1], [0], [0], [1], [0, 0, 1, 1], [], []>} : vector<16x16xf32>, vector<16x16xf32>, vector<16x16xf32> -> vector<16x16xf32>
    %cst_17 = arith.constant 2.500000e-01 : f32
    %18 = vector.broadcast %cst_17 : f32 to vector<16x16xf32>
    %19 = arith.mulf %17, %18 : vector<16x16xf32>
    %20 = arith.addf %19, %3 : vector<16x16xf32>
    %cst_18 = arith.constant dense<0xFF800000> : vector<16xf32>
    %21 = vector.multi_reduction <maximumf>, %20, %cst_18 [1] : vector<16x16xf32> to vector<16xf32>
    %22 = vector.shape_cast %21 : vector<16xf32> to vector<16x1xf32>
    %23 = vector.broadcast %22 : vector<16x1xf32> to vector<16x16xf32>
    %24 = arith.subf %20, %23 : vector<16x16xf32>
    %25 = math.exp %24 : vector<16x16xf32>
    %cst_19 = arith.constant dense<0.000000e+00> : vector<16xf32>
    %26 = vector.multi_reduction <add>, %25, %cst_19 [1] : vector<16x16xf32> to vector<16xf32>
    %27 = vector.shape_cast %26 : vector<16xf32> to vector<16x1xf32>
    %28 = tpu.reciprocal %27 {approx = true} : vector<16x1xf32> -> vector<16x1xf32>
    %29 = vector.broadcast %28 : vector<16x1xf32> to vector<16x16xf32>
    %30 = arith.mulf %25, %29 : vector<16x16xf32>
    %cst_20 = arith.constant dense<0.000000e+00> : vector<16x16xf32>
    %31 = tpu.matmul %30, %15, %cst_20 {dimension_numbers = #tpu.dot_dimension_numbers<[1], [0], [0], [1], [0, 0, 1, 1], [], []>} : vector<16x16xf32>, vector<16x16xf32>, vector<16x16xf32> -> vector<16x16xf32>
    %32 = vector.extract_strided_slice %12 {offsets = [0, 16], sizes = [16, 16], strides = [1, 1]} : vector<16x96xf32> to vector<16x16xf32>
    %33 = vector.extract_strided_slice %12 {offsets = [0, 48], sizes = [16, 16], strides = [1, 1]} : vector<16x96xf32> to vector<16x16xf32>
    %34 = vector.extract_strided_slice %12 {offsets = [0, 80], sizes = [16, 16], strides = [1, 1]} : vector<16x96xf32> to vector<16x16xf32>
    %35 = tpu.transpose %33, [1, 0] : vector<16x16xf32> -> vector<16x16xf32>
    %cst_21 = arith.constant dense<0.000000e+00> : vector<16x16xf32>
    %36 = tpu.matmul %32, %35, %cst_21 {dimension_numbers = #tpu.dot_dimension_numbers<[1], [0], [0], [1], [0, 0, 1, 1], [], []>} : vector<16x16xf32>, vector<16x16xf32>, vector<16x16xf32> -> vector<16x16xf32>
    %cst_22 = arith.constant 2.500000e-01 : f32
    %37 = vector.broadcast %cst_22 : f32 to vector<16x16xf32>
    %38 = arith.mulf %36, %37 : vector<16x16xf32>
    %39 = arith.addf %38, %3 : vector<16x16xf32>
    %cst_23 = arith.constant dense<0xFF800000> : vector<16xf32>
    %40 = vector.multi_reduction <maximumf>, %39, %cst_23 [1] : vector<16x16xf32> to vector<16xf32>
    %41 = vector.shape_cast %40 : vector<16xf32> to vector<16x1xf32>
    %42 = vector.broadcast %41 : vector<16x1xf32> to vector<16x16xf32>
    %43 = arith.subf %39, %42 : vector<16x16xf32>
    %44 = math.exp %43 : vector<16x16xf32>
    %cst_24 = arith.constant dense<0.000000e+00> : vector<16xf32>
    %45 = vector.multi_reduction <add>, %44, %cst_24 [1] : vector<16x16xf32> to vector<16xf32>
    %46 = vector.shape_cast %45 : vector<16xf32> to vector<16x1xf32>
    %47 = tpu.reciprocal %46 {approx = true} : vector<16x1xf32> -> vector<16x1xf32>
    %48 = vector.broadcast %47 : vector<16x1xf32> to vector<16x16xf32>
    %49 = arith.mulf %44, %48 : vector<16x16xf32>
    %cst_25 = arith.constant dense<0.000000e+00> : vector<16x16xf32>
    %50 = tpu.matmul %49, %34, %cst_25 {dimension_numbers = #tpu.dot_dimension_numbers<[1], [0], [0], [1], [0, 0, 1, 1], [], []>} : vector<16x16xf32>, vector<16x16xf32>, vector<16x16xf32> -> vector<16x16xf32>
    %51 = tpu.concatenate %31, %50 in 1 : vector<16x16xf32>, vector<16x16xf32> -> vector<16x32xf32>
    %c0_26 = arith.constant 0 : index
    %c0_27 = arith.constant 0 : index
    %c0_28 = arith.constant 0 : index
    %c0_29 = arith.constant 0 : index
    %52 = vector.load %arg6[%c0_26, %c0_27, %c0_28, %c0_29] : memref<1x2x32x32xf32, #tpu.memory_space<vmem>>, vector<1x1x32x32xf32>
    %53 = vector.shape_cast %52 : vector<1x1x32x32xf32> to vector<32x32xf32>
    %cst_30 = arith.constant dense<0.000000e+00> : vector<16x32xf32>
    %54 = tpu.matmul %51, %53, %cst_30 {dimension_numbers = #tpu.dot_dimension_numbers<[1], [0], [0], [1], [0, 0, 1, 1], [], []>} : vector<16x32xf32>, vector<32x32xf32>, vector<16x32xf32> -> vector<16x32xf32>
    %c0_31 = arith.constant 0 : index
    %c0_32 = arith.constant 0 : index
    %c0_33 = arith.constant 0 : index
    %c0_34 = arith.constant 0 : index
    %55 = vector.load %arg7[%c0_31, %c0_32, %c0_33, %c0_34] : memref<1x2x1x32xf32, #tpu.memory_space<vmem>>, vector<1x1x1x32xf32>
    %56 = vector.shape_cast %55 : vector<1x1x1x32xf32> to vector<1x32xf32>
    %57 = vector.broadcast %56 : vector<1x32xf32> to vector<16x32xf32>
    %58 = arith.addf %54, %57 : vector<16x32xf32>
    %59 = arith.addf %1, %58 : vector<16x32xf32>
    %c0_35 = arith.constant 0 : index
    %c0_36 = arith.constant 0 : index
    %c0_37 = arith.constant 0 : index
    %c0_38 = arith.constant 0 : index
    %60 = vector.load %arg8[%c0_35, %c0_36, %c0_37, %c0_38] : memref<1x2x1x32xf32, #tpu.memory_space<vmem>>, vector<1x1x1x32xf32>
    %61 = vector.shape_cast %60 : vector<1x1x1x32xf32> to vector<1x32xf32>
    %c0_39 = arith.constant 0 : index
    %c0_40 = arith.constant 0 : index
    %c0_41 = arith.constant 0 : index
    %c0_42 = arith.constant 0 : index
    %62 = vector.load %arg9[%c0_39, %c0_40, %c0_41, %c0_42] : memref<1x2x1x32xf32, #tpu.memory_space<vmem>>, vector<1x1x1x32xf32>
    %63 = vector.shape_cast %62 : vector<1x1x1x32xf32> to vector<1x32xf32>
    %cst_43 = arith.constant dense<0.000000e+00> : vector<16xf32>
    %64 = vector.multi_reduction <add>, %59, %cst_43 [1] : vector<16x32xf32> to vector<16xf32>
    %65 = vector.shape_cast %64 : vector<16xf32> to vector<16x1xf32>
    %cst_44 = arith.constant 3.200000e+01 : f32
    %66 = vector.broadcast %cst_44 : f32 to vector<16x1xf32>
    %67 = arith.divf %65, %66 : vector<16x1xf32>
    %68 = vector.broadcast %67 : vector<16x1xf32> to vector<16x32xf32>
    %69 = arith.subf %59, %68 : vector<16x32xf32>
    %70 = vector.broadcast %67 : vector<16x1xf32> to vector<16x32xf32>
    %71 = arith.subf %59, %70 : vector<16x32xf32>
    %72 = arith.mulf %69, %71 : vector<16x32xf32>
    %cst_45 = arith.constant dense<0.000000e+00> : vector<16xf32>
    %73 = vector.multi_reduction <add>, %72, %cst_45 [1] : vector<16x32xf32> to vector<16xf32>
    %74 = vector.shape_cast %73 : vector<16xf32> to vector<16x1xf32>
    %cst_46 = arith.constant 3.200000e+01 : f32
    %75 = vector.broadcast %cst_46 : f32 to vector<16x1xf32>
    %76 = arith.divf %74, %75 : vector<16x1xf32>
    %77 = vector.broadcast %67 : vector<16x1xf32> to vector<16x32xf32>
    %78 = arith.subf %59, %77 : vector<16x32xf32>
    %cst_47 = arith.constant 9.99999996E-13 : f32
    %79 = vector.broadcast %cst_47 : f32 to vector<16x1xf32>
    %80 = arith.addf %76, %79 : vector<16x1xf32>
    %81 = math.rsqrt %80 : vector<16x1xf32>
    %82 = vector.broadcast %81 : vector<16x1xf32> to vector<16x32xf32>
    %83 = arith.mulf %78, %82 : vector<16x32xf32>
    %84 = vector.broadcast %61 : vector<1x32xf32> to vector<16x32xf32>
    %85 = arith.mulf %83, %84 : vector<16x32xf32>
    %86 = vector.broadcast %63 : vector<1x32xf32> to vector<16x32xf32>
    %87 = arith.addf %85, %86 : vector<16x32xf32>
    %c0_48 = arith.constant 0 : index
    %c0_49 = arith.constant 0 : index
    %c0_50 = arith.constant 0 : index
    %c0_51 = arith.constant 0 : index
    %88 = vector.load %arg10[%c0_48, %c0_49, %c0_50, %c0_51] : memref<1x2x32x64xf32, #tpu.memory_space<vmem>>, vector<1x1x32x64xf32>
    %89 = vector.shape_cast %88 : vector<1x1x32x64xf32> to vector<32x64xf32>
    %cst_52 = arith.constant dense<0.000000e+00> : vector<16x64xf32>
    %90 = tpu.matmul %87, %89, %cst_52 {dimension_numbers = #tpu.dot_dimension_numbers<[1], [0], [0], [1], [0, 0, 1, 1], [], []>} : vector<16x32xf32>, vector<32x64xf32>, vector<16x64xf32> -> vector<16x64xf32>
    %c0_53 = arith.constant 0 : index
    %c0_54 = arith.constant 0 : index
    %c0_55 = arith.constant 0 : index
    %c0_56 = arith.constant 0 : index
    %91 = vector.load %arg11[%c0_53, %c0_54, %c0_55, %c0_56] : memref<1x2x1x64xf32, #tpu.memory_space<vmem>>, vector<1x1x1x64xf32>
    %92 = vector.shape_cast %91 : vector<1x1x1x64xf32> to vector<1x64xf32>
    %93 = vector.broadcast %92 : vector<1x64xf32> to vector<16x64xf32>
    %94 = arith.addf %90, %93 : vector<16x64xf32>
    %cst_57 = arith.constant 5.000000e-01 : f32
    %95 = vector.broadcast %cst_57 : f32 to vector<16x64xf32>
    %96 = arith.mulf %95, %94 : vector<16x64xf32>
    %cst_58 = arith.constant 0.707106769 : f32
    %97 = vector.broadcast %cst_58 : f32 to vector<16x64xf32>
    %98 = arith.mulf %94, %97 : vector<16x64xf32>
    %cst_59 = arith.constant 0.000000e+00 : f32
    %99 = vector.broadcast %cst_59 : f32 to vector<16x64xf32>
    %100 = arith.cmpf oge, %98, %99 : vector<16x64xf32>
    %cst_60 = arith.constant 1.000000e+00 : f32
    %cst_61 = arith.constant -1.000000e+00 : f32
    %101 = vector.broadcast %cst_60 : f32 to vector<16x64xf32>
    %102 = vector.broadcast %cst_61 : f32 to vector<16x64xf32>
    %103 = arith.select %100, %101, %102 : vector<16x64xi1>, vector<16x64xf32>
    %104 = math.absf %98 : vector<16x64xf32>
    %cst_62 = arith.constant 0.327591091 : f32
    %105 = vector.broadcast %cst_62 : f32 to vector<16x64xf32>
    %106 = arith.mulf %105, %104 : vector<16x64xf32>
    %cst_63 = arith.constant 1.000000e+00 : f32
    %107 = vector.broadcast %cst_63 : f32 to vector<16x64xf32>
    %108 = arith.addf %107, %106 : vector<16x64xf32>
    %cst_64 = arith.constant 1.000000e+00 : f32
    %109 = vector.broadcast %cst_64 : f32 to vector<16x64xf32>
    %110 = arith.divf %109, %108 : vector<16x64xf32>
    %cst_65 = arith.constant 1.06140542 : f32
    %111 = vector.broadcast %cst_65 : f32 to vector<16x64xf32>
    %112 = arith.mulf %110, %111 : vector<16x64xf32>
    %cst_66 = arith.constant -1.45315206 : f32
    %113 = vector.broadcast %cst_66 : f32 to vector<16x64xf32>
    %114 = arith.addf %113, %112 : vector<16x64xf32>
    %115 = arith.mulf %110, %114 : vector<16x64xf32>
    %cst_67 = arith.constant 1.42141378 : f32
    %116 = vector.broadcast %cst_67 : f32 to vector<16x64xf32>
    %117 = arith.addf %116, %115 : vector<16x64xf32>
    %118 = arith.mulf %110, %117 : vector<16x64xf32>
    %cst_68 = arith.constant -0.284496725 : f32
    %119 = vector.broadcast %cst_68 : f32 to vector<16x64xf32>
    %120 = arith.addf %119, %118 : vector<16x64xf32>
    %121 = arith.mulf %110, %120 : vector<16x64xf32>
    %cst_69 = arith.constant 0.254829586 : f32
    %122 = vector.broadcast %cst_69 : f32 to vector<16x64xf32>
    %123 = arith.addf %122, %121 : vector<16x64xf32>
    %124 = arith.mulf %110, %123 : vector<16x64xf32>
    %cst_70 = arith.constant 0.000000e+00 : f32
    %125 = vector.broadcast %cst_70 : f32 to vector<16x64xf32>
    %126 = arith.subf %125, %104 : vector<16x64xf32>
    %127 = arith.mulf %126, %104 : vector<16x64xf32>
    %128 = math.exp %127 : vector<16x64xf32>
    %129 = arith.mulf %124, %128 : vector<16x64xf32>
    %cst_71 = arith.constant 1.000000e+00 : f32
    %130 = vector.broadcast %cst_71 : f32 to vector<16x64xf32>
    %131 = arith.subf %130, %129 : vector<16x64xf32>
    %132 = arith.mulf %103, %131 : vector<16x64xf32>
    %cst_72 = arith.constant 1.000000e+00 : f32
    %133 = vector.broadcast %cst_72 : f32 to vector<16x64xf32>
    %134 = arith.addf %133, %132 : vector<16x64xf32>
    %135 = arith.mulf %96, %134 : vector<16x64xf32>
    %c0_73 = arith.constant 0 : index
    %c0_74 = arith.constant 0 : index
    %c0_75 = arith.constant 0 : index
    %c0_76 = arith.constant 0 : index
    %136 = vector.load %arg12[%c0_73, %c0_74, %c0_75, %c0_76] : memref<1x2x64x32xf32, #tpu.memory_space<vmem>>, vector<1x1x64x32xf32>
    %137 = vector.shape_cast %136 : vector<1x1x64x32xf32> to vector<64x32xf32>
    %cst_77 = arith.constant dense<0.000000e+00> : vector<16x32xf32>
    %138 = tpu.matmul %135, %137, %cst_77 {dimension_numbers = #tpu.dot_dimension_numbers<[1], [0], [0], [1], [0, 0, 1, 1], [], []>} : vector<16x64xf32>, vector<64x32xf32>, vector<16x32xf32> -> vector<16x32xf32>
    %c0_78 = arith.constant 0 : index
    %c0_79 = arith.constant 0 : index
    %c0_80 = arith.constant 0 : index
    %c0_81 = arith.constant 0 : index
    %139 = vector.load %arg13[%c0_78, %c0_79, %c0_80, %c0_81] : memref<1x2x1x32xf32, #tpu.memory_space<vmem>>, vector<1x1x1x32xf32>
    %140 = vector.shape_cast %139 : vector<1x1x1x32xf32> to vector<1x32xf32>
    %141 = vector.broadcast %140 : vector<1x32xf32> to vector<16x32xf32>
    %142 = arith.addf %138, %141 : vector<16x32xf32>
    %143 = arith.addf %87, %142 : vector<16x32xf32>
    %c0_82 = arith.constant 0 : index
    %c0_83 = arith.constant 0 : index
    %c0_84 = arith.constant 0 : index
    %c0_85 = arith.constant 0 : index
    %144 = vector.load %arg14[%c0_82, %c0_83, %c0_84, %c0_85] : memref<1x2x1x32xf32, #tpu.memory_space<vmem>>, vector<1x1x1x32xf32>
    %145 = vector.shape_cast %144 : vector<1x1x1x32xf32> to vector<1x32xf32>
    %c0_86 = arith.constant 0 : index
    %c0_87 = arith.constant 0 : index
    %c0_88 = arith.constant 0 : index
    %c0_89 = arith.constant 0 : index
    %146 = vector.load %arg15[%c0_86, %c0_87, %c0_88, %c0_89] : memref<1x2x1x32xf32, #tpu.memory_space<vmem>>, vector<1x1x1x32xf32>
    %147 = vector.shape_cast %146 : vector<1x1x1x32xf32> to vector<1x32xf32>
    %cst_90 = arith.constant dense<0.000000e+00> : vector<16xf32>
    %148 = vector.multi_reduction <add>, %143, %cst_90 [1] : vector<16x32xf32> to vector<16xf32>
    %149 = vector.shape_cast %148 : vector<16xf32> to vector<16x1xf32>
    %cst_91 = arith.constant 3.200000e+01 : f32
    %150 = vector.broadcast %cst_91 : f32 to vector<16x1xf32>
    %151 = arith.divf %149, %150 : vector<16x1xf32>
    %152 = vector.broadcast %151 : vector<16x1xf32> to vector<16x32xf32>
    %153 = arith.subf %143, %152 : vector<16x32xf32>
    %154 = vector.broadcast %151 : vector<16x1xf32> to vector<16x32xf32>
    %155 = arith.subf %143, %154 : vector<16x32xf32>
    %156 = arith.mulf %153, %155 : vector<16x32xf32>
    %cst_92 = arith.constant dense<0.000000e+00> : vector<16xf32>
    %157 = vector.multi_reduction <add>, %156, %cst_92 [1] : vector<16x32xf32> to vector<16xf32>
    %158 = vector.shape_cast %157 : vector<16xf32> to vector<16x1xf32>
    %cst_93 = arith.constant 3.200000e+01 : f32
    %159 = vector.broadcast %cst_93 : f32 to vector<16x1xf32>
    %160 = arith.divf %158, %159 : vector<16x1xf32>
    %161 = vector.broadcast %151 : vector<16x1xf32> to vector<16x32xf32>
    %162 = arith.subf %143, %161 : vector<16x32xf32>
    %cst_94 = arith.constant 9.99999996E-13 : f32
    %163 = vector.broadcast %cst_94 : f32 to vector<16x1xf32>
    %164 = arith.addf %160, %163 : vector<16x1xf32>
    %165 = math.rsqrt %164 : vector<16x1xf32>
    %166 = vector.broadcast %165 : vector<16x1xf32> to vector<16x32xf32>
    %167 = arith.mulf %162, %166 : vector<16x32xf32>
    %168 = vector.broadcast %145 : vector<1x32xf32> to vector<16x32xf32>
    %169 = arith.mulf %167, %168 : vector<16x32xf32>
    %170 = vector.broadcast %147 : vector<1x32xf32> to vector<16x32xf32>
    %171 = arith.addf %169, %170 : vector<16x32xf32>
    %c0_95 = arith.constant 0 : index
    %c1 = arith.constant 1 : index
    %c0_96 = arith.constant 0 : index
    %c0_97 = arith.constant 0 : index
    %172 = vector.load %arg4[%c0_95, %c1, %c0_96, %c0_97] : memref<1x2x32x96xf32, #tpu.memory_space<vmem>>, vector<1x1x32x96xf32>
    %173 = vector.shape_cast %172 : vector<1x1x32x96xf32> to vector<32x96xf32>
    %cst_98 = arith.constant dense<0.000000e+00> : vector<16x96xf32>
    %174 = tpu.matmul %171, %173, %cst_98 {dimension_numbers = #tpu.dot_dimension_numbers<[1], [0], [0], [1], [0, 0, 1, 1], [], []>} : vector<16x32xf32>, vector<32x96xf32>, vector<16x96xf32> -> vector<16x96xf32>
    %c0_99 = arith.constant 0 : index
    %c1_100 = arith.constant 1 : index
    %c0_101 = arith.constant 0 : index
    %c0_102 = arith.constant 0 : index
    %175 = vector.load %arg5[%c0_99, %c1_100, %c0_101, %c0_102] : memref<1x2x1x96xf32, #tpu.memory_space<vmem>>, vector<1x1x1x96xf32>
    %176 = vector.shape_cast %175 : vector<1x1x1x96xf32> to vector<1x96xf32>
    %177 = vector.broadcast %176 : vector<1x96xf32> to vector<16x96xf32>
    %178 = arith.addf %174, %177 : vector<16x96xf32>
    %179 = vector.extract_strided_slice %178 {offsets = [0, 0], sizes = [16, 16], strides = [1, 1]} : vector<16x96xf32> to vector<16x16xf32>
    %180 = vector.extract_strided_slice %178 {offsets = [0, 32], sizes = [16, 16], strides = [1, 1]} : vector<16x96xf32> to vector<16x16xf32>
    %181 = vector.extract_strided_slice %178 {offsets = [0, 64], sizes = [16, 16], strides = [1, 1]} : vector<16x96xf32> to vector<16x16xf32>
    %182 = tpu.transpose %180, [1, 0] : vector<16x16xf32> -> vector<16x16xf32>
    %cst_103 = arith.constant dense<0.000000e+00> : vector<16x16xf32>
    %183 = tpu.matmul %179, %182, %cst_103 {dimension_numbers = #tpu.dot_dimension_numbers<[1], [0], [0], [1], [0, 0, 1, 1], [], []>} : vector<16x16xf32>, vector<16x16xf32>, vector<16x16xf32> -> vector<16x16xf32>
    %cst_104 = arith.constant 2.500000e-01 : f32
    %184 = vector.broadcast %cst_104 : f32 to vector<16x16xf32>
    %185 = arith.mulf %183, %184 : vector<16x16xf32>
    %186 = arith.addf %185, %3 : vector<16x16xf32>
    %cst_105 = arith.constant dense<0xFF800000> : vector<16xf32>
    %187 = vector.multi_reduction <maximumf>, %186, %cst_105 [1] : vector<16x16xf32> to vector<16xf32>
    %188 = vector.shape_cast %187 : vector<16xf32> to vector<16x1xf32>
    %189 = vector.broadcast %188 : vector<16x1xf32> to vector<16x16xf32>
    %190 = arith.subf %186, %189 : vector<16x16xf32>
    %191 = math.exp %190 : vector<16x16xf32>
    %cst_106 = arith.constant dense<0.000000e+00> : vector<16xf32>
    %192 = vector.multi_reduction <add>, %191, %cst_106 [1] : vector<16x16xf32> to vector<16xf32>
    %193 = vector.shape_cast %192 : vector<16xf32> to vector<16x1xf32>
    %194 = tpu.reciprocal %193 {approx = true} : vector<16x1xf32> -> vector<16x1xf32>
    %195 = vector.broadcast %194 : vector<16x1xf32> to vector<16x16xf32>
    %196 = arith.mulf %191, %195 : vector<16x16xf32>
    %cst_107 = arith.constant dense<0.000000e+00> : vector<16x16xf32>
    %197 = tpu.matmul %196, %181, %cst_107 {dimension_numbers = #tpu.dot_dimension_numbers<[1], [0], [0], [1], [0, 0, 1, 1], [], []>} : vector<16x16xf32>, vector<16x16xf32>, vector<16x16xf32> -> vector<16x16xf32>
    %198 = vector.extract_strided_slice %178 {offsets = [0, 16], sizes = [16, 16], strides = [1, 1]} : vector<16x96xf32> to vector<16x16xf32>
    %199 = vector.extract_strided_slice %178 {offsets = [0, 48], sizes = [16, 16], strides = [1, 1]} : vector<16x96xf32> to vector<16x16xf32>
    %200 = vector.extract_strided_slice %178 {offsets = [0, 80], sizes = [16, 16], strides = [1, 1]} : vector<16x96xf32> to vector<16x16xf32>
    %201 = tpu.transpose %199, [1, 0] : vector<16x16xf32> -> vector<16x16xf32>
    %cst_108 = arith.constant dense<0.000000e+00> : vector<16x16xf32>
    %202 = tpu.matmul %198, %201, %cst_108 {dimension_numbers = #tpu.dot_dimension_numbers<[1], [0], [0], [1], [0, 0, 1, 1], [], []>} : vector<16x16xf32>, vector<16x16xf32>, vector<16x16xf32> -> vector<16x16xf32>
    %cst_109 = arith.constant 2.500000e-01 : f32
    %203 = vector.broadcast %cst_109 : f32 to vector<16x16xf32>
    %204 = arith.mulf %202, %203 : vector<16x16xf32>
    %205 = arith.addf %204, %3 : vector<16x16xf32>
    %cst_110 = arith.constant dense<0xFF800000> : vector<16xf32>
    %206 = vector.multi_reduction <maximumf>, %205, %cst_110 [1] : vector<16x16xf32> to vector<16xf32>
    %207 = vector.shape_cast %206 : vector<16xf32> to vector<16x1xf32>
    %208 = vector.broadcast %207 : vector<16x1xf32> to vector<16x16xf32>
    %209 = arith.subf %205, %208 : vector<16x16xf32>
    %210 = math.exp %209 : vector<16x16xf32>
    %cst_111 = arith.constant dense<0.000000e+00> : vector<16xf32>
    %211 = vector.multi_reduction <add>, %210, %cst_111 [1] : vector<16x16xf32> to vector<16xf32>
    %212 = vector.shape_cast %211 : vector<16xf32> to vector<16x1xf32>
    %213 = tpu.reciprocal %212 {approx = true} : vector<16x1xf32> -> vector<16x1xf32>
    %214 = vector.broadcast %213 : vector<16x1xf32> to vector<16x16xf32>
    %215 = arith.mulf %210, %214 : vector<16x16xf32>
    %cst_112 = arith.constant dense<0.000000e+00> : vector<16x16xf32>
    %216 = tpu.matmul %215, %200, %cst_112 {dimension_numbers = #tpu.dot_dimension_numbers<[1], [0], [0], [1], [0, 0, 1, 1], [], []>} : vector<16x16xf32>, vector<16x16xf32>, vector<16x16xf32> -> vector<16x16xf32>
    %217 = tpu.concatenate %197, %216 in 1 : vector<16x16xf32>, vector<16x16xf32> -> vector<16x32xf32>
    %c0_113 = arith.constant 0 : index
    %c1_114 = arith.constant 1 : index
    %c0_115 = arith.constant 0 : index
    %c0_116 = arith.constant 0 : index
    %218 = vector.load %arg6[%c0_113, %c1_114, %c0_115, %c0_116] : memref<1x2x32x32xf32, #tpu.memory_space<vmem>>, vector<1x1x32x32xf32>
    %219 = vector.shape_cast %218 : vector<1x1x32x32xf32> to vector<32x32xf32>
    %cst_117 = arith.constant dense<0.000000e+00> : vector<16x32xf32>
    %220 = tpu.matmul %217, %219, %cst_117 {dimension_numbers = #tpu.dot_dimension_numbers<[1], [0], [0], [1], [0, 0, 1, 1], [], []>} : vector<16x32xf32>, vector<32x32xf32>, vector<16x32xf32> -> vector<16x32xf32>
    %c0_118 = arith.constant 0 : index
    %c1_119 = arith.constant 1 : index
    %c0_120 = arith.constant 0 : index
    %c0_121 = arith.constant 0 : index
    %221 = vector.load %arg7[%c0_118, %c1_119, %c0_120, %c0_121] : memref<1x2x1x32xf32, #tpu.memory_space<vmem>>, vector<1x1x1x32xf32>
    %222 = vector.shape_cast %221 : vector<1x1x1x32xf32> to vector<1x32xf32>
    %223 = vector.broadcast %222 : vector<1x32xf32> to vector<16x32xf32>
    %224 = arith.addf %220, %223 : vector<16x32xf32>
    %225 = arith.addf %171, %224 : vector<16x32xf32>
    %c0_122 = arith.constant 0 : index
    %c1_123 = arith.constant 1 : index
    %c0_124 = arith.constant 0 : index
    %c0_125 = arith.constant 0 : index
    %226 = vector.load %arg8[%c0_122, %c1_123, %c0_124, %c0_125] : memref<1x2x1x32xf32, #tpu.memory_space<vmem>>, vector<1x1x1x32xf32>
    %227 = vector.shape_cast %226 : vector<1x1x1x32xf32> to vector<1x32xf32>
    %c0_126 = arith.constant 0 : index
    %c1_127 = arith.constant 1 : index
    %c0_128 = arith.constant 0 : index
    %c0_129 = arith.constant 0 : index
    %228 = vector.load %arg9[%c0_126, %c1_127, %c0_128, %c0_129] : memref<1x2x1x32xf32, #tpu.memory_space<vmem>>, vector<1x1x1x32xf32>
    %229 = vector.shape_cast %228 : vector<1x1x1x32xf32> to vector<1x32xf32>
    %cst_130 = arith.constant dense<0.000000e+00> : vector<16xf32>
    %230 = vector.multi_reduction <add>, %225, %cst_130 [1] : vector<16x32xf32> to vector<16xf32>
    %231 = vector.shape_cast %230 : vector<16xf32> to vector<16x1xf32>
    %cst_131 = arith.constant 3.200000e+01 : f32
    %232 = vector.broadcast %cst_131 : f32 to vector<16x1xf32>
    %233 = arith.divf %231, %232 : vector<16x1xf32>
    %234 = vector.broadcast %233 : vector<16x1xf32> to vector<16x32xf32>
    %235 = arith.subf %225, %234 : vector<16x32xf32>
    %236 = vector.broadcast %233 : vector<16x1xf32> to vector<16x32xf32>
    %237 = arith.subf %225, %236 : vector<16x32xf32>
    %238 = arith.mulf %235, %237 : vector<16x32xf32>
    %cst_132 = arith.constant dense<0.000000e+00> : vector<16xf32>
    %239 = vector.multi_reduction <add>, %238, %cst_132 [1] : vector<16x32xf32> to vector<16xf32>
    %240 = vector.shape_cast %239 : vector<16xf32> to vector<16x1xf32>
    %cst_133 = arith.constant 3.200000e+01 : f32
    %241 = vector.broadcast %cst_133 : f32 to vector<16x1xf32>
    %242 = arith.divf %240, %241 : vector<16x1xf32>
    %243 = vector.broadcast %233 : vector<16x1xf32> to vector<16x32xf32>
    %244 = arith.subf %225, %243 : vector<16x32xf32>
    %cst_134 = arith.constant 9.99999996E-13 : f32
    %245 = vector.broadcast %cst_134 : f32 to vector<16x1xf32>
    %246 = arith.addf %242, %245 : vector<16x1xf32>
    %247 = math.rsqrt %246 : vector<16x1xf32>
    %248 = vector.broadcast %247 : vector<16x1xf32> to vector<16x32xf32>
    %249 = arith.mulf %244, %248 : vector<16x32xf32>
    %250 = vector.broadcast %227 : vector<1x32xf32> to vector<16x32xf32>
    %251 = arith.mulf %249, %250 : vector<16x32xf32>
    %252 = vector.broadcast %229 : vector<1x32xf32> to vector<16x32xf32>
    %253 = arith.addf %251, %252 : vector<16x32xf32>
    %c0_135 = arith.constant 0 : index
    %c1_136 = arith.constant 1 : index
    %c0_137 = arith.constant 0 : index
    %c0_138 = arith.constant 0 : index
    %254 = vector.load %arg10[%c0_135, %c1_136, %c0_137, %c0_138] : memref<1x2x32x64xf32, #tpu.memory_space<vmem>>, vector<1x1x32x64xf32>
    %255 = vector.shape_cast %254 : vector<1x1x32x64xf32> to vector<32x64xf32>
    %cst_139 = arith.constant dense<0.000000e+00> : vector<16x64xf32>
    %256 = tpu.matmul %253, %255, %cst_139 {dimension_numbers = #tpu.dot_dimension_numbers<[1], [0], [0], [1], [0, 0, 1, 1], [], []>} : vector<16x32xf32>, vector<32x64xf32>, vector<16x64xf32> -> vector<16x64xf32>
    %c0_140 = arith.constant 0 : index
    %c1_141 = arith.constant 1 : index
    %c0_142 = arith.constant 0 : index
    %c0_143 = arith.constant 0 : index
    %257 = vector.load %arg11[%c0_140, %c1_141, %c0_142, %c0_143] : memref<1x2x1x64xf32, #tpu.memory_space<vmem>>, vector<1x1x1x64xf32>
    %258 = vector.shape_cast %257 : vector<1x1x1x64xf32> to vector<1x64xf32>
    %259 = vector.broadcast %258 : vector<1x64xf32> to vector<16x64xf32>
    %260 = arith.addf %256, %259 : vector<16x64xf32>
    %cst_144 = arith.constant 5.000000e-01 : f32
    %261 = vector.broadcast %cst_144 : f32 to vector<16x64xf32>
    %262 = arith.mulf %261, %260 : vector<16x64xf32>
    %cst_145 = arith.constant 0.707106769 : f32
    %263 = vector.broadcast %cst_145 : f32 to vector<16x64xf32>
    %264 = arith.mulf %260, %263 : vector<16x64xf32>
    %cst_146 = arith.constant 0.000000e+00 : f32
    %265 = vector.broadcast %cst_146 : f32 to vector<16x64xf32>
    %266 = arith.cmpf oge, %264, %265 : vector<16x64xf32>
    %cst_147 = arith.constant 1.000000e+00 : f32
    %cst_148 = arith.constant -1.000000e+00 : f32
    %267 = vector.broadcast %cst_147 : f32 to vector<16x64xf32>
    %268 = vector.broadcast %cst_148 : f32 to vector<16x64xf32>
    %269 = arith.select %266, %267, %268 : vector<16x64xi1>, vector<16x64xf32>
    %270 = math.absf %264 : vector<16x64xf32>
    %cst_149 = arith.constant 0.327591091 : f32
    %271 = vector.broadcast %cst_149 : f32 to vector<16x64xf32>
    %272 = arith.mulf %271, %270 : vector<16x64xf32>
    %cst_150 = arith.constant 1.000000e+00 : f32
    %273 = vector.broadcast %cst_150 : f32 to vector<16x64xf32>
    %274 = arith.addf %273, %272 : vector<16x64xf32>
    %cst_151 = arith.constant 1.000000e+00 : f32
    %275 = vector.broadcast %cst_151 : f32 to vector<16x64xf32>
    %276 = arith.divf %275, %274 : vector<16x64xf32>
    %cst_152 = arith.constant 1.06140542 : f32
    %277 = vector.broadcast %cst_152 : f32 to vector<16x64xf32>
    %278 = arith.mulf %276, %277 : vector<16x64xf32>
    %cst_153 = arith.constant -1.45315206 : f32
    %279 = vector.broadcast %cst_153 : f32 to vector<16x64xf32>
    %280 = arith.addf %279, %278 : vector<16x64xf32>
    %281 = arith.mulf %276, %280 : vector<16x64xf32>
    %cst_154 = arith.constant 1.42141378 : f32
    %282 = vector.broadcast %cst_154 : f32 to vector<16x64xf32>
    %283 = arith.addf %282, %281 : vector<16x64xf32>
    %284 = arith.mulf %276, %283 : vector<16x64xf32>
    %cst_155 = arith.constant -0.284496725 : f32
    %285 = vector.broadcast %cst_155 : f32 to vector<16x64xf32>
    %286 = arith.addf %285, %284 : vector<16x64xf32>
    %287 = arith.mulf %276, %286 : vector<16x64xf32>
    %cst_156 = arith.constant 0.254829586 : f32
    %288 = vector.broadcast %cst_156 : f32 to vector<16x64xf32>
    %289 = arith.addf %288, %287 : vector<16x64xf32>
    %290 = arith.mulf %276, %289 : vector<16x64xf32>
    %cst_157 = arith.constant 0.000000e+00 : f32
    %291 = vector.broadcast %cst_157 : f32 to vector<16x64xf32>
    %292 = arith.subf %291, %270 : vector<16x64xf32>
    %293 = arith.mulf %292, %270 : vector<16x64xf32>
    %294 = math.exp %293 : vector<16x64xf32>
    %295 = arith.mulf %290, %294 : vector<16x64xf32>
    %cst_158 = arith.constant 1.000000e+00 : f32
    %296 = vector.broadcast %cst_158 : f32 to vector<16x64xf32>
    %297 = arith.subf %296, %295 : vector<16x64xf32>
    %298 = arith.mulf %269, %297 : vector<16x64xf32>
    %cst_159 = arith.constant 1.000000e+00 : f32
    %299 = vector.broadcast %cst_159 : f32 to vector<16x64xf32>
    %300 = arith.addf %299, %298 : vector<16x64xf32>
    %301 = arith.mulf %262, %300 : vector<16x64xf32>
    %c0_160 = arith.constant 0 : index
    %c1_161 = arith.constant 1 : index
    %c0_162 = arith.constant 0 : index
    %c0_163 = arith.constant 0 : index
    %302 = vector.load %arg12[%c0_160, %c1_161, %c0_162, %c0_163] : memref<1x2x64x32xf32, #tpu.memory_space<vmem>>, vector<1x1x64x32xf32>
    %303 = vector.shape_cast %302 : vector<1x1x64x32xf32> to vector<64x32xf32>
    %cst_164 = arith.constant dense<0.000000e+00> : vector<16x32xf32>
    %304 = tpu.matmul %301, %303, %cst_164 {dimension_numbers = #tpu.dot_dimension_numbers<[1], [0], [0], [1], [0, 0, 1, 1], [], []>} : vector<16x64xf32>, vector<64x32xf32>, vector<16x32xf32> -> vector<16x32xf32>
    %c0_165 = arith.constant 0 : index
    %c1_166 = arith.constant 1 : index
    %c0_167 = arith.constant 0 : index
    %c0_168 = arith.constant 0 : index
    %305 = vector.load %arg13[%c0_165, %c1_166, %c0_167, %c0_168] : memref<1x2x1x32xf32, #tpu.memory_space<vmem>>, vector<1x1x1x32xf32>
    %306 = vector.shape_cast %305 : vector<1x1x1x32xf32> to vector<1x32xf32>
    %307 = vector.broadcast %306 : vector<1x32xf32> to vector<16x32xf32>
    %308 = arith.addf %304, %307 : vector<16x32xf32>
    %309 = arith.addf %253, %308 : vector<16x32xf32>
    %c0_169 = arith.constant 0 : index
    %c1_170 = arith.constant 1 : index
    %c0_171 = arith.constant 0 : index
    %c0_172 = arith.constant 0 : index
    %310 = vector.load %arg14[%c0_169, %c1_170, %c0_171, %c0_172] : memref<1x2x1x32xf32, #tpu.memory_space<vmem>>, vector<1x1x1x32xf32>
    %311 = vector.shape_cast %310 : vector<1x1x1x32xf32> to vector<1x32xf32>
    %c0_173 = arith.constant 0 : index
    %c1_174 = arith.constant 1 : index
    %c0_175 = arith.constant 0 : index
    %c0_176 = arith.constant 0 : index
    %312 = vector.load %arg15[%c0_173, %c1_174, %c0_175, %c0_176] : memref<1x2x1x32xf32, #tpu.memory_space<vmem>>, vector<1x1x1x32xf32>
    %313 = vector.shape_cast %312 : vector<1x1x1x32xf32> to vector<1x32xf32>
    %cst_177 = arith.constant dense<0.000000e+00> : vector<16xf32>
    %314 = vector.multi_reduction <add>, %309, %cst_177 [1] : vector<16x32xf32> to vector<16xf32>
    %315 = vector.shape_cast %314 : vector<16xf32> to vector<16x1xf32>
    %cst_178 = arith.constant 3.200000e+01 : f32
    %316 = vector.broadcast %cst_178 : f32 to vector<16x1xf32>
    %317 = arith.divf %315, %316 : vector<16x1xf32>
    %318 = vector.broadcast %317 : vector<16x1xf32> to vector<16x32xf32>
    %319 = arith.subf %309, %318 : vector<16x32xf32>
    %320 = vector.broadcast %317 : vector<16x1xf32> to vector<16x32xf32>
    %321 = arith.subf %309, %320 : vector<16x32xf32>
    %322 = arith.mulf %319, %321 : vector<16x32xf32>
    %cst_179 = arith.constant dense<0.000000e+00> : vector<16xf32>
    %323 = vector.multi_reduction <add>, %322, %cst_179 [1] : vector<16x32xf32> to vector<16xf32>
    %324 = vector.shape_cast %323 : vector<16xf32> to vector<16x1xf32>
    %cst_180 = arith.constant 3.200000e+01 : f32
    %325 = vector.broadcast %cst_180 : f32 to vector<16x1xf32>
    %326 = arith.divf %324, %325 : vector<16x1xf32>
    %327 = vector.broadcast %317 : vector<16x1xf32> to vector<16x32xf32>
    %328 = arith.subf %309, %327 : vector<16x32xf32>
    %cst_181 = arith.constant 9.99999996E-13 : f32
    %329 = vector.broadcast %cst_181 : f32 to vector<16x1xf32>
    %330 = arith.addf %326, %329 : vector<16x1xf32>
    %331 = math.rsqrt %330 : vector<16x1xf32>
    %332 = vector.broadcast %331 : vector<16x1xf32> to vector<16x32xf32>
    %333 = arith.mulf %328, %332 : vector<16x32xf32>
    %334 = vector.broadcast %311 : vector<1x32xf32> to vector<16x32xf32>
    %335 = arith.mulf %333, %334 : vector<16x32xf32>
    %336 = vector.broadcast %313 : vector<1x32xf32> to vector<16x32xf32>
    %337 = arith.addf %335, %336 : vector<16x32xf32>
    %cst_182 = arith.constant dense<0.000000e+00> : vector<2x32xf32>
    %338 = tpu.matmul %5, %337, %cst_182 {dimension_numbers = #tpu.dot_dimension_numbers<[1], [0], [0], [1], [0, 0, 1, 1], [], []>} : vector<2x16xf32>, vector<16x32xf32>, vector<2x32xf32> -> vector<2x32xf32>
    %cst_183 = arith.constant dense<0.000000e+00> : vector<2xf32>
    %339 = vector.multi_reduction <add>, %5, %cst_183 [1] : vector<2x16xf32> to vector<2xf32>
    %340 = vector.shape_cast %339 : vector<2xf32> to vector<2x1xf32>
    %cst_184 = arith.constant 9.99999971E-10 : f32
    %341 = vector.broadcast %cst_184 : f32 to vector<2x1xf32>
    %342 = arith.maximumf %340, %341 : vector<2x1xf32>
    %343 = tpu.reciprocal %342 {approx = true} : vector<2x1xf32> -> vector<2x1xf32>
    %344 = vector.broadcast %343 : vector<2x1xf32> to vector<2x32xf32>
    %345 = arith.mulf %338, %344 : vector<2x32xf32>
    %346 = arith.mulf %345, %345 : vector<2x32xf32>
    %cst_185 = arith.constant dense<0.000000e+00> : vector<2xf32>
    %347 = vector.multi_reduction <add>, %346, %cst_185 [1] : vector<2x32xf32> to vector<2xf32>
    %348 = vector.shape_cast %347 : vector<2xf32> to vector<2x1xf32>
    %cst_186 = arith.constant 1.000000e-24 : f32
    %349 = vector.broadcast %cst_186 : f32 to vector<2x1xf32>
    %350 = arith.maximumf %348, %349 : vector<2x1xf32>
    %351 = math.rsqrt %350 : vector<2x1xf32>
    %352 = vector.broadcast %351 : vector<2x1xf32> to vector<2x32xf32>
    %353 = arith.mulf %345, %352 : vector<2x32xf32>
    %c0_187 = arith.constant 0 : index
    %c0_188 = arith.constant 0 : index
    %c0_189 = arith.constant 0 : index
    %354 = vector.load %arg16[%c0_187, %c0_188, %c0_189] : memref<1x2x32xf32, #tpu.memory_space<vmem>>, vector<1x2x32xf32>
    %355 = vector.shape_cast %354 : vector<1x2x32xf32> to vector<2x32xf32>
    %356 = vector.shape_cast %353 : vector<2x32xf32> to vector<1x2x32xf32>
    tpu.vector_store %arg16[%c0_187, %c0_188, %c0_189], %356 {strides = array<i32>} : memref<1x2x32xf32, #tpu.memory_space<vmem>>, vector<1x2x32xf32>,
    return
  }
  func.func @transform_0(%arg0: i32) -> (i32, i32, i32) {
    %c0_i32 = arith.constant 0 : i32
    %c0_i32_0 = arith.constant 0 : i32
    %c0_i32_1 = arith.constant 0 : i32
    return %arg0, %c0_i32, %c0_i32_0 : i32, i32, i32
  }
  func.func @transform_1(%arg0: i32) -> (i32, i32, i32) {
    %c0_i32 = arith.constant 0 : i32
    %c0_i32_0 = arith.constant 0 : i32
    %c0_i32_1 = arith.constant 0 : i32
    return %arg0, %c0_i32, %c0_i32_0 : i32, i32, i32
  }
  func.func @transform_2(%arg0: i32) -> (i32, i32, i32) {
    %c0_i32 = arith.constant 0 : i32
    %c0_i32_0 = arith.constant 0 : i32
    %c0_i32_1 = arith.constant 0 : i32
    return %arg0, %c0_i32, %c0_i32_0 : i32, i32, i32
  }
  func.func @transform_3(%arg0: i32) -> (i32, i32, i32, i32) {
    %c0_i32 = arith.constant 0 : i32
    %c0_i32_0 = arith.constant 0 : i32
    %c0_i32_1 = arith.constant 0 : i32
    %c0_i32_2 = arith.constant 0 : i32
    return %arg0, %c0_i32, %c0_i32_0, %c0_i32_1 : i32, i32, i32, i32
  }
  func.func @transform_4(%arg0: i32) -> (i32, i32, i32, i32) {
    %c0_i32 = arith.constant 0 : i32
    %c0_i32_0 = arith.constant 0 : i32
    %c0_i32_1 = arith.constant 0 : i32
    %c0_i32_2 = arith.constant 0 : i32
    return %arg0, %c0_i32, %c0_i32_0, %c0_i32_1 : i32, i32, i32, i32
  }
  func.func @transform_5(%arg0: i32) -> (i32, i32, i32, i32) {
    %c0_i32 = arith.constant 0 : i32
    %c0_i32_0 = arith.constant 0 : i32
    %c0_i32_1 = arith.constant 0 : i32
    %c0_i32_2 = arith.constant 0 : i32
    return %arg0, %c0_i32, %c0_i32_0, %c0_i32_1 : i32, i32, i32, i32
  }
  func.func @transform_6(%arg0: i32) -> (i32, i32, i32, i32) {
    %c0_i32 = arith.constant 0 : i32
    %c0_i32_0 = arith.constant 0 : i32
    %c0_i32_1 = arith.constant 0 : i32
    %c0_i32_2 = arith.constant 0 : i32
    return %arg0, %c0_i32, %c0_i32_0, %c0_i32_1 : i32, i32, i32, i32
  }
  func.func @transform_7(%arg0: i32) -> (i32, i32, i32, i32) {
    %c0_i32 = arith.constant 0 : i32
    %c0_i32_0 = arith.constant 0 : i32
    %c0_i32_1 = arith.constant 0 : i32
    %c0_i32_2 = arith.constant 0 : i32
    return %arg0, %c0_i32, %c0_i32_0, %c0_i32_1 : i32, i32, i32, i32
  }
  func.func @transform_8(%arg0: i32) -> (i32, i32, i32, i32) {
    %c0_i32 = arith.constant 0 : i32
    %c0_i32_0 = arith.constant 0 : i32
    %c0_i32_1 = arith.constant 0 : i32
    %c0_i32_2 = arith.constant 0 : i32
    return %arg0, %c0_i32, %c0_i32_0, %c0_i32_1 : i32, i32, i32, i32
  }
  func.func @transform_9(%arg0: i32) -> (i32, i32, i32, i32) {
    %c0_i32 = arith.constant 0 : i32
    %c0_i32_0 = arith.constant 0 : i32
    %c0_i32_1 = arith.constant 0 : i32
    %c0_i32_2 = arith.constant 0 : i32
    return %arg0, %c0_i32, %c0_i32_0, %c0_i32_1 : i32, i32, i32, i32
  }
  func.func @transform_10(%arg0: i32) -> (i32, i32, i32, i32) {
    %c0_i32 = arith.constant 0 : i32
    %c0_i32_0 = arith.constant 0 : i32
    %c0_i32_1 = arith.constant 0 : i32
    %c0_i32_2 = arith.constant 0 : i32
    return %arg0, %c0_i32, %c0_i32_0, %c0_i32_1 : i32, i32, i32, i32
  }
  func.func @transform_11(%arg0: i32) -> (i32, i32, i32, i32) {
    %c0_i32 = arith.constant 0 : i32
    %c0_i32_0 = arith.constant 0 : i32
    %c0_i32_1 = arith.constant 0 : i32
    %c0_i32_2 = arith.constant 0 : i32
    return %arg0, %c0_i32, %c0_i32_0, %c0_i32_1 : i32, i32, i32, i32
  }
  func.func @transform_12(%arg0: i32) -> (i32, i32, i32, i32) {
    %c0_i32 = arith.constant 0 : i32
    %c0_i32_0 = arith.constant 0 : i32
    %c0_i32_1 = arith.constant 0 : i32
    %c0_i32_2 = arith.constant 0 : i32
    return %arg0, %c0_i32, %c0_i32_0, %c0_i32_1 : i32, i32, i32, i32
  }
  func.func @transform_13(%arg0: i32) -> (i32, i32, i32, i32) {
    %c0_i32 = arith.constant 0 : i32
    %c0_i32_0 = arith.constant 0 : i32
    %c0_i32_1 = arith.constant 0 : i32
    %c0_i32_2 = arith.constant 0 : i32
    return %arg0, %c0_i32, %c0_i32_0, %c0_i32_1 : i32, i32, i32, i32
  }
  func.func @transform_14(%arg0: i32) -> (i32, i32, i32, i32) {
    %c0_i32 = arith.constant 0 : i32
    %c0_i32_0 = arith.constant 0 : i32
    %c0_i32_1 = arith.constant 0 : i32
    %c0_i32_2 = arith.constant 0 : i32
    return %arg0, %c0_i32, %c0_i32_0, %c0_i32_1 : i32, i32, i32, i32
  }
  func.func @transform_15(%arg0: i32) -> (i32, i32, i32) {
    %c0_i32 = arith.constant 0 : i32
    %c0_i32_0 = arith.constant 0 : i32
    %c0_i32_1 = arith.constant 0 : i32
    return %arg0, %c0_i32, %c0_i32_0 : i32, i32, i32
  }
}

</mosaic_0001>

<llo_original>
// kernel: tpu_custom_call.1
$region0: #{tpu_custom_call.1}
  #allocation0 [shape = 'u32[]', space=smem, size = 0x4, offset = 0x4, fixed_abs, tag = 'smem constant byte address 0x4 - core index']
  #allocation1 [shape = 'u32[144,128]{1,0:T(1,128)}', space=vmem, size = 0x12000, scoped, tag = 'internal scratch']
  %s0 = inlined_call_operand.hbm [shape: f32[2,16,32], index: 0, kind: input, shape index: {}]
  %s1 = inlined_call_operand.hbm [shape: f32[2,16,16], index: 1, kind: input, shape index: {}]
  %s2 = inlined_call_operand.vmem [shape: f32[2,2,16], index: 2, kind: input, shape index: {}]
  %s3 = inlined_call_operand.vmem [shape: f32[2,2,32,96], index: 3, kind: input, shape index: {}]
  %s4 = inlined_call_operand.vmem [shape: f32[2,2,1,96], index: 4, kind: input, shape index: {}]
  %s5 = inlined_call_operand.vmem [shape: f32[2,2,32,32], index: 5, kind: input, shape index: {}]
  %s6 = inlined_call_operand.vmem [shape: f32[2,2,1,32], index: 6, kind: input, shape index: {}]
  %s7 = inlined_call_operand.vmem [shape: f32[2,2,1,32], index: 7, kind: input, shape index: {}]
  %s8 = inlined_call_operand.vmem [shape: f32[2,2,1,32], index: 8, kind: input, shape index: {}]
  %s9 = inlined_call_operand.vmem [shape: f32[2,2,32,64], index: 9, kind: input, shape index: {}]
  %s10 = inlined_call_operand.vmem [shape: f32[2,2,1,64], index: 10, kind: input, shape index: {}]
  %s11 = inlined_call_operand.vmem [shape: f32[2,2,64,32], index: 11, kind: input, shape index: {}]
  %s12 = inlined_call_operand.vmem [shape: f32[2,2,1,32], index: 12, kind: input, shape index: {}]
  %s13 = inlined_call_operand.vmem [shape: f32[2,2,1,32], index: 13, kind: input, shape index: {}]
  %s14 = inlined_call_operand.vmem [shape: f32[2,2,1,32], index: 14, kind: input, shape index: {}]
  %s15 = inlined_call_operand.hbm [shape: f32[2,2,32], index: 15, kind: output, shape index: {}]
  %s16 = sld [smem:[#allocation0]]
  $region101: #{tpu_custom_call.1} parent=0
    _
  %s18 = ssub.s32 1, %s16
  %s19 = scalar_select 0, %s18, %s16
  $region1: #{tpu_custom_call.1} parent=0
    #allocation2 [shape = 'u8[16384]{0}', space=vmem, size = 0x4000, scoped, tag = 'input window, operand 0']
    #allocation3 [shape = 's32[2]{0}', space=sflag, size = 0x8, scoped, tag = 'scoped memory for tpu_custom_call.1']
    #allocation4 [shape = 's32[2]{0}', space=sflag, size = 0x8, scoped, tag = 'scoped memory for tpu_custom_call.1']
    #allocation5 [shape = 'u8[16384]{0}', space=vmem, size = 0x4000, scoped, tag = 'input window, operand 1']
    #allocation6 [shape = 's32[2]{0}', space=sflag, size = 0x8, scoped, tag = 'scoped memory for tpu_custom_call.1']
    #allocation7 [shape = 'u8[2048]{0}', space=vmem, size = 0x800, scoped, tag = 'output window, operand 0']
    %20 = vsyncpa [#allocation3], 0
    %s21 = scalar_lea.sflag [#allocation3], 1
    %22 = vsyncpa %s21, 0
    %23 = vsyncpa [#allocation6], 0
    %s24 = scalar_lea.sflag [#allocation6], 1
    %25 = vsyncpa %s24, 0
    %26 = vsyncpa [#allocation4], 0
    %s27 = scalar_lea.sflag [#allocation4], 1
    %28 = vsyncpa %s27, 0
    loop: start=0, step=1, limit=4
    $region2: #{tpu_custom_call.1} parent=1 // loop_pre_header
      _
    $region3: #{tpu_custom_call.1} parent=1 // loop_header
      %s30 = sphi 0, %s34
      %p31 = scmp.ge.s32.totalorder %s30, 4
      %s40 = sphi 0, %s42
      %s43 = sphi 0, %s40
      %s44 = sphi 0, %s43
      %s60 = sphi 0, %s44
      %s66 = sphi 0, %s68
      %s69 = sphi 0, %s66
      %s70 = sphi 0, %s69
      %s86 = sphi 0, %s70
      %s92 = sphi 0, %s94
      %s95 = sphi 0, %s92
      %s96 = sphi 0, %s95
      %s112 = sphi 0, %s96
      %s118 = sphi 0, %s120
      %s121 = sphi 0, %s118
      %s122 = sphi 0, %s121
      %s138 = sphi 0, %s122
      %s144 = sphi 0, %s146
      %s147 = sphi 0, %s144
      %s148 = sphi 0, %s147
      %s164 = sphi 0, %s148
      %s170 = sphi 0, %s172
      %s173 = sphi 0, %s170
      %s174 = sphi 0, %s173
      %s190 = sphi 0, %s174
      %s196 = sphi 0, %s198
      %s199 = sphi 0, %s196
      %s200 = sphi 0, %s199
      %s216 = sphi 0, %s200
      %s222 = sphi 0, %s224
      %s225 = sphi 0, %s222
      %s226 = sphi 0, %s225
      %s242 = sphi 0, %s226
      %s248 = sphi 0, %s250
      %s251 = sphi 0, %s248
      %s252 = sphi 0, %s251
      %s268 = sphi 0, %s252
      %s274 = sphi 0, %s276
      %s277 = sphi 0, %s274
      %s278 = sphi 0, %s277
      %s294 = sphi 0, %s278
      %s300 = sphi 0, %s302
      %s303 = sphi 0, %s300
      %s304 = sphi 0, %s303
      %s320 = sphi 0, %s304
      %s326 = sphi 0, %s328
      %s329 = sphi 0, %s326
      %s330 = sphi 0, %s329
      %s346 = sphi 0, %s330
      %s352 = sphi 0, %s354
      %s355 = sphi 0, %s352
      %s356 = sphi 0, %s355
      %s372 = sphi 0, %s356
      %s378 = sphi 0, %s380
      %s381 = sphi 0, %s378
      %s382 = sphi 0, %s381
      %s398 = sphi 0, %s382
      %s404 = sphi 0, %s406
      %s407 = sphi 0, %s404
      %s408 = sphi 0, %s407
      %s424 = sphi 0, %s408
      %s430 = sphi 0, %s432
      %s433 = sphi 0, %s430
      %s434 = sphi 0, %s433
      %s450 = sphi 0, %s434
    $region4: #{tpu_custom_call.1} parent=1 // loop_header_branch
      %33 = sbr.rel (%p31) target = $region8
    $region5: #{tpu_custom_call.1} parent=1 // loop_body
      %s35 = ssub.s32 %s30, 1
      %s36 = ssub.s32 %s30, 2
      %s37 = sadd.s32 %s30, 1
      %s38 = ssub.s32 %s30, %s37
      %p39 = scmp.eq.s32.totalorder %s38, 0
      %s41 = sadd.s32 %s40, 1
      %s42 = scalar_select %p39, %s40, %s41
      %p45 = pneg %p39
      %p46 = scmp.eq.s32.totalorder %s30, 1
      %p47 = por %p45, %p46
      %p48 = scmp.ne.s32.totalorder %s40, %s43
      %p49 = scmp.eq.s32.totalorder %s30, 0
      %p50 = por %p48, %p49
      %p51 = scmp.ne.s32.totalorder %s40, %s43
      %p52 = scmp.eq.s32.totalorder %s35, 1
      %p53 = por %p51, %p52
      %p54 = scmp.ne.s32.totalorder %s43, %s44
      %p55 = scmp.eq.s32.totalorder %s35, 0
      %p56 = por %p54, %p55
      %p57 = scmp.ne.s32.totalorder %s43, %s44
      %p58 = scmp.eq.s32.totalorder %s36, 1
      %p59 = por %p57, %p58
      %p61 = scmp.ne.s32.totalorder %s44, %s60
      %p62 = scmp.eq.s32.totalorder %s36, 0
      %p63 = por %p61, %p62
      %s64 = ssub.s32 %s30, %s37
      %p65 = scmp.eq.s32.totalorder %s64, 0
      %s67 = sadd.s32 %s66, 1
      %s68 = scalar_select %p65, %s66, %s67
      %p71 = pneg %p65
      %p72 = scmp.eq.s32.totalorder %s30, 1
      %p73 = por %p71, %p72
      %p74 = scmp.ne.s32.totalorder %s66, %s69
      %p75 = scmp.eq.s32.totalorder %s30, 0
      %p76 = por %p74, %p75
      %p77 = scmp.ne.s32.totalorder %s66, %s69
      %p78 = scmp.eq.s32.totalorder %s35, 1
      %p79 = por %p77, %p78
      %p80 = scmp.ne.s32.totalorder %s69, %s70
      %p81 = scmp.eq.s32.totalorder %s35, 0
      %p82 = por %p80, %p81
      %p83 = scmp.ne.s32.totalorder %s69, %s70
      %p84 = scmp.eq.s32.totalorder %s36, 1
      %p85 = por %p83, %p84
      %p87 = scmp.ne.s32.totalorder %s70, %s86
      %p88 = scmp.eq.s32.totalorder %s36, 0
      %p89 = por %p87, %p88
      %s90 = ssub.s32 %s30, %s37
      %p91 = scmp.eq.s32.totalorder %s90, 0
      %s93 = sadd.s32 %s92, 1
      %s94 = scalar_select %p91, %s92, %s93
      %p97 = pneg %p91
      %p98 = scmp.eq.s32.totalorder %s30, 1
      %p99 = por %p97, %p98
      %p100 = scmp.ne.s32.totalorder %s92, %s95
      %p101 = scmp.eq.s32.totalorder %s30, 0
      %p102 = por %p100, %p101
      %p103 = scmp.ne.s32.totalorder %s92, %s95
      %p104 = scmp.eq.s32.totalorder %s35, 1
      %p105 = por %p103, %p104
      %p106 = scmp.ne.s32.totalorder %s95, %s96
      %p107 = scmp.eq.s32.totalorder %s35, 0
      %p108 = por %p106, %p107
      %p109 = scmp.ne.s32.totalorder %s95, %s96
      %p110 = scmp.eq.s32.totalorder %s36, 1
      %p111 = por %p109, %p110
      %p113 = scmp.ne.s32.totalorder %s96, %s112
      %p114 = scmp.eq.s32.totalorder %s36, 0
      %p115 = por %p113, %p114
      %s116 = ssub.s32 %s30, %s37
      %p117 = scmp.eq.s32.totalorder %s116, 0
      %s119 = sadd.s32 %s118, 1
      %s120 = scalar_select %p117, %s118, %s119
      %p123 = pneg %p117
      %p124 = scmp.eq.s32.totalorder %s30, 1
      %p125 = por %p123, %p124
      %p126 = scmp.ne.s32.totalorder %s118, %s121
      %p127 = scmp.eq.s32.totalorder %s30, 0
      %p128 = por %p126, %p127
      %p129 = scmp.ne.s32.totalorder %s118, %s121
      %p130 = scmp.eq.s32.totalorder %s35, 1
      %p131 = por %p129, %p130
      %p132 = scmp.ne.s32.totalorder %s121, %s122
      %p133 = scmp.eq.s32.totalorder %s35, 0
      %p134 = por %p132, %p133
      %p135 = scmp.ne.s32.totalorder %s121, %s122
      %p136 = scmp.eq.s32.totalorder %s36, 1
      %p137 = por %p135, %p136
      %p139 = scmp.ne.s32.totalorder %s122, %s138
      %p140 = scmp.eq.s32.totalorder %s36, 0
      %p141 = por %p139, %p140
      %s142 = ssub.s32 %s30, %s37
      %p143 = scmp.eq.s32.totalorder %s142, 0
      %s145 = sadd.s32 %s144, 1
      %s146 = scalar_select %p143, %s144, %s145
      %p149 = pneg %p143
      %p150 = scmp.eq.s32.totalorder %s30, 1
      %p151 = por %p149, %p150
      %p152 = scmp.ne.s32.totalorder %s144, %s147
      %p153 = scmp.eq.s32.totalorder %s30, 0
      %p154 = por %p152, %p153
      %p155 = scmp.ne.s32.totalorder %s144, %s147
      %p156 = scmp.eq.s32.totalorder %s35, 1
      %p157 = por %p155, %p156
      %p158 = scmp.ne.s32.totalorder %s147, %s148
      %p159 = scmp.eq.s32.totalorder %s35, 0
      %p160 = por %p158, %p159
      %p161 = scmp.ne.s32.totalorder %s147, %s148
      %p162 = scmp.eq.s32.totalorder %s36, 1
      %p163 = por %p161, %p162
      %p165 = scmp.ne.s32.totalorder %s148, %s164
      %p166 = scmp.eq.s32.totalorder %s36, 0
      %p167 = por %p165, %p166
      %s168 = ssub.s32 %s30, %s37
      %p169 = scmp.eq.s32.totalorder %s168, 0
      %s171 = sadd.s32 %s170, 1
      %s172 = scalar_select %p169, %s170, %s171
      %p175 = pneg %p169
      %p176 = scmp.eq.s32.totalorder %s30, 1
      %p177 = por %p175, %p176
      %p178 = scmp.ne.s32.totalorder %s170, %s173
      %p179 = scmp.eq.s32.totalorder %s30, 0
      %p180 = por %p178, %p179
      %p181 = scmp.ne.s32.totalorder %s170, %s173
      %p182 = scmp.eq.s32.totalorder %s35, 1
      %p183 = por %p181, %p182
      %p184 = scmp.ne.s32.totalorder %s173, %s174
      %p185 = scmp.eq.s32.totalorder %s35, 0
      %p186 = por %p184, %p185
      %p187 = scmp.ne.s32.totalorder %s173, %s174
      %p188 = scmp.eq.s32.totalorder %s36, 1
      %p189 = por %p187, %p188
      %p191 = scmp.ne.s32.totalorder %s174, %s190
      %p192 = scmp.eq.s32.totalorder %s36, 0
      %p193 = por %p191, %p192
      %s194 = ssub.s32 %s30, %s37
      %p195 = scmp.eq.s32.totalorder %s194, 0
      %s197 = sadd.s32 %s196, 1
      %s198 = scalar_select %p195, %s196, %s197
      %p201 = pneg %p195
      %p202 = scmp.eq.s32.totalorder %s30, 1
      %p203 = por %p201, %p202
      %p204 = scmp.ne.s32.totalorder %s196, %s199
      %p205 = scmp.eq.s32.totalorder %s30, 0
      %p206 = por %p204, %p205
      %p207 = scmp.ne.s32.totalorder %s196, %s199
      %p208 = scmp.eq.s32.totalorder %s35, 1
      %p209 = por %p207, %p208
      %p210 = scmp.ne.s32.totalorder %s199, %s200
      %p211 = scmp.eq.s32.totalorder %s35, 0
      %p212 = por %p210, %p211
      %p213 = scmp.ne.s32.totalorder %s199, %s200
      %p214 = scmp.eq.s32.totalorder %s36, 1
      %p215 = por %p213, %p214
      %p217 = scmp.ne.s32.totalorder %s200, %s216
      %p218 = scmp.eq.s32.totalorder %s36, 0
      %p219 = por %p217, %p218
      %s220 = ssub.s32 %s30, %s37
      %p221 = scmp.eq.s32.totalorder %s220, 0
      %s223 = sadd.s32 %s222, 1
      %s224 = scalar_select %p221, %s222, %s223
      %p227 = pneg %p221
      %p228 = scmp.eq.s32.totalorder %s30, 1
      %p229 = por %p227, %p228
      %p230 = scmp.ne.s32.totalorder %s222, %s225
      %p231 = scmp.eq.s32.totalorder %s30, 0
      %p232 = por %p230, %p231
      %p233 = scmp.ne.s32.totalorder %s222, %s225
      %p234 = scmp.eq.s32.totalorder %s35, 1
      %p235 = por %p233, %p234
      %p236 = scmp.ne.s32.totalorder %s225, %s226
      %p237 = scmp.eq.s32.totalorder %s35, 0
      %p238 = por %p236, %p237
      %p239 = scmp.ne.s32.totalorder %s225, %s226
      %p240 = scmp.eq.s32.totalorder %s36, 1
      %p241 = por %p239, %p240
      %p243 = scmp.ne.s32.totalorder %s226, %s242
      %p244 = scmp.eq.s32.totalorder %s36, 0
      %p245 = por %p243, %p244
      %s246 = ssub.s32 %s30, %s37
      %p247 = scmp.eq.s32.totalorder %s246, 0
      %s249 = sadd.s32 %s248, 1
      %s250 = scalar_select %p247, %s248, %s249
      %p253 = pneg %p247
      %p254 = scmp.eq.s32.totalorder %s30, 1
      %p255 = por %p253, %p254
      %p256 = scmp.ne.s32.totalorder %s248, %s251
      %p257 = scmp.eq.s32.totalorder %s30, 0
      %p258 = por %p256, %p257
      %p259 = scmp.ne.s32.totalorder %s248, %s251
      %p260 = scmp.eq.s32.totalorder %s35, 1
      %p261 = por %p259, %p260
      %p262 = scmp.ne.s32.totalorder %s251, %s252
      %p263 = scmp.eq.s32.totalorder %s35, 0
      %p264 = por %p262, %p263
      %p265 = scmp.ne.s32.totalorder %s251, %s252
      %p266 = scmp.eq.s32.totalorder %s36, 1
      %p267 = por %p265, %p266
      %p269 = scmp.ne.s32.totalorder %s252, %s268
      %p270 = scmp.eq.s32.totalorder %s36, 0
      %p271 = por %p269, %p270
      %s272 = ssub.s32 %s30, %s37
      %p273 = scmp.eq.s32.totalorder %s272, 0
      %s275 = sadd.s32 %s274, 1
      %s276 = scalar_select %p273, %s274, %s275
      %p279 = pneg %p273
      %p280 = scmp.eq.s32.totalorder %s30, 1
      %p281 = por %p279, %p280
      %p282 = scmp.ne.s32.totalorder %s274, %s277
      %p283 = scmp.eq.s32.totalorder %s30, 0
      %p284 = por %p282, %p283
      %p285 = scmp.ne.s32.totalorder %s274, %s277
      %p286 = scmp.eq.s32.totalorder %s35, 1
      %p287 = por %p285, %p286
      %p288 = scmp.ne.s32.totalorder %s277, %s278
      %p289 = scmp.eq.s32.totalorder %s35, 0
      %p290 = por %p288, %p289
      %p291 = scmp.ne.s32.totalorder %s277, %s278
      %p292 = scmp.eq.s32.totalorder %s36, 1
      %p293 = por %p291, %p292
      %p295 = scmp.ne.s32.totalorder %s278, %s294
      %p296 = scmp.eq.s32.totalorder %s36, 0
      %p297 = por %p295, %p296
      %s298 = ssub.s32 %s30, %s37
      %p299 = scmp.eq.s32.totalorder %s298, 0
      %s301 = sadd.s32 %s300, 1
      %s302 = scalar_select %p299, %s300, %s301
      %p305 = pneg %p299
      %p306 = scmp.eq.s32.totalorder %s30, 1
      %p307 = por %p305, %p306
      %p308 = scmp.ne.s32.totalorder %s300, %s303
      %p309 = scmp.eq.s32.totalorder %s30, 0
      %p310 = por %p308, %p309
      %p311 = scmp.ne.s32.totalorder %s300, %s303
      %p312 = scmp.eq.s32.totalorder %s35, 1
      %p313 = por %p311, %p312
      %p314 = scmp.ne.s32.totalorder %s303, %s304
      %p315 = scmp.eq.s32.totalorder %s35, 0
      %p316 = por %p314, %p315
      %p317 = scmp.ne.s32.totalorder %s303, %s304
      %p318 = scmp.eq.s32.totalorder %s36, 1
      %p319 = por %p317, %p318
      %p321 = scmp.ne.s32.totalorder %s304, %s320
      %p322 = scmp.eq.s32.totalorder %s36, 0
      %p323 = por %p321, %p322
      %s324 = ssub.s32 %s30, %s37
      %p325 = scmp.eq.s32.totalorder %s324, 0
      %s327 = sadd.s32 %s326, 1
      %s328 = scalar_select %p325, %s326, %s327
      %p331 = pneg %p325
      %p332 = scmp.eq.s32.totalorder %s30, 1
      %p333 = por %p331, %p332
      %p334 = scmp.ne.s32.totalorder %s326, %s329
      %p335 = scmp.eq.s32.totalorder %s30, 0
      %p336 = por %p334, %p335
      %p337 = scmp.ne.s32.totalorder %s326, %s329
      %p338 = scmp.eq.s32.totalorder %s35, 1
      %p339 = por %p337, %p338
      %p340 = scmp.ne.s32.totalorder %s329, %s330
      %p341 = scmp.eq.s32.totalorder %s35, 0
      %p342 = por %p340, %p341
      %p343 = scmp.ne.s32.totalorder %s329, %s330
      %p344 = scmp.eq.s32.totalorder %s36, 1
      %p345 = por %p343, %p344
      %p347 = scmp.ne.s32.totalorder %s330, %s346
      %p348 = scmp.eq.s32.totalorder %s36, 0
      %p349 = por %p347, %p348
      %s350 = ssub.s32 %s30, %s37
      %p351 = scmp.eq.s32.totalorder %s350, 0
      %s353 = sadd.s32 %s352, 1
      %s354 = scalar_select %p351, %s352, %s353
      %p357 = pneg %p351
      %p358 = scmp.eq.s32.totalorder %s30, 1
      %p359 = por %p357, %p358
      %p360 = scmp.ne.s32.totalorder %s352, %s355
      %p361 = scmp.eq.s32.totalorder %s30, 0
      %p362 = por %p360, %p361
      %p363 = scmp.ne.s32.totalorder %s352, %s355
      %p364 = scmp.eq.s32.totalorder %s35, 1
      %p365 = por %p363, %p364
      %p366 = scmp.ne.s32.totalorder %s355, %s356
      %p367 = scmp.eq.s32.totalorder %s35, 0
      %p368 = por %p366, %p367
      %p369 = scmp.ne.s32.totalorder %s355, %s356
      %p370 = scmp.eq.s32.totalorder %s36, 1
      %p371 = por %p369, %p370
      %p373 = scmp.ne.s32.totalorder %s356, %s372
      %p374 = scmp.eq.s32.totalorder %s36, 0
      %p375 = por %p373, %p374
      %s376 = ssub.s32 %s30, %s37
      %p377 = scmp.eq.s32.totalorder %s376, 0
      %s379 = sadd.s32 %s378, 1
      %s380 = scalar_select %p377, %s378, %s379
      %p383 = pneg %p377
      %p384 = scmp.eq.s32.totalorder %s30, 1
      %p385 = por %p383, %p384
      %p386 = scmp.ne.s32.totalorder %s378, %s381
      %p387 = scmp.eq.s32.totalorder %s30, 0
      %p388 = por %p386, %p387
      %p389 = scmp.ne.s32.totalorder %s378, %s381
      %p390 = scmp.eq.s32.totalorder %s35, 1
      %p391 = por %p389, %p390
      %p392 = scmp.ne.s32.totalorder %s381, %s382
      %p393 = scmp.eq.s32.totalorder %s35, 0
      %p394 = por %p392, %p393
      %p395 = scmp.ne.s32.totalorder %s381, %s382
      %p396 = scmp.eq.s32.totalorder %s36, 1
      %p397 = por %p395, %p396
      %p399 = scmp.ne.s32.totalorder %s382, %s398
      %p400 = scmp.eq.s32.totalorder %s36, 0
      %p401 = por %p399, %p400
      %s402 = ssub.s32 %s30, %s37
      %p403 = scmp.eq.s32.totalorder %s402, 0
      %s405 = sadd.s32 %s404, 1
      %s406 = scalar_select %p403, %s404, %s405
      %p409 = pneg %p403
      %p410 = scmp.eq.s32.totalorder %s30, 1
      %p411 = por %p409, %p410
      %p412 = scmp.ne.s32.totalorder %s404, %s407
      %p413 = scmp.eq.s32.totalorder %s30, 0
      %p414 = por %p412, %p413
      %p415 = scmp.ne.s32.totalorder %s404, %s407
      %p416 = scmp.eq.s32.totalorder %s35, 1
      %p417 = por %p415, %p416
      %p418 = scmp.ne.s32.totalorder %s407, %s408
      %p419 = scmp.eq.s32.totalorder %s35, 0
      %p420 = por %p418, %p419
      %p421 = scmp.ne.s32.totalorder %s407, %s408
      %p422 = scmp.eq.s32.totalorder %s36, 1
      %p423 = por %p421, %p422
      %p425 = scmp.ne.s32.totalorder %s408, %s424
      %p426 = scmp.eq.s32.totalorder %s36, 0
      %p427 = por %p425, %p426
      %s428 = ssub.s32 %s30, %s37
      %p429 = scmp.eq.s32.totalorder %s428, 0
      %s431 = sadd.s32 %s430, 1
      %s432 = scalar_select %p429, %s430, %s431
      %p435 = pneg %p429
      %p436 = scmp.eq.s32.totalorder %s30, 1
      %p437 = por %p435, %p436
      %p438 = scmp.ne.s32.totalorder %s430, %s433
      %p439 = scmp.eq.s32.totalorder %s30, 0
      %p440 = por %p438, %p439
      %p441 = scmp.ne.s32.totalorder %s430, %s433
      %p442 = scmp.eq.s32.totalorder %s35, 1
      %p443 = por %p441, %p442
      %p444 = scmp.ne.s32.totalorder %s433, %s434
      %p445 = scmp.eq.s32.totalorder %s35, 0
      %p446 = por %p444, %p445
      %p447 = scmp.ne.s32.totalorder %s433, %s434
      %p448 = scmp.eq.s32.totalorder %s36, 1
      %p449 = por %p447, %p448
      %p451 = scmp.ne.s32.totalorder %s434, %s450
      %p452 = scmp.eq.s32.totalorder %s36, 0
      %p453 = por %p451, %p452
      %p454 = scmp.le.s32.totalorder 1, %s30
      %p455 = scmp.lt.s32.totalorder %s30, 3
      %p456 = pnand %p454, %p455
      %p457 = pneg %p456
      // Predicated region
      $region9: #{tpu_custom_call.1} parent=5 // pred_check
        _
      $region10: #{tpu_custom_call.1} parent=5 // pred_check_branch
        %459 = sbr.rel (%p456) target = $region12
      $region11: #{tpu_custom_call.1} parent=5 // pred_region
        %s460 = ssub.s32 %s30, 1
      $region12: #{tpu_custom_call.1} parent=5 // pred_fallthru
        _
      %p461 = scmp.lt.s32.totalorder %s30, 2
      // Predicated region
      $region13: #{tpu_custom_call.1} parent=5 // pred_check
        %p462 = pneg %p461
      $region14: #{tpu_custom_call.1} parent=5 // pred_check_branch
        %464 = sbr.rel (%p462) target = $region16
      $region15: #{tpu_custom_call.1} parent=5 // pred_region
        // Predicated region
        $region17: #{tpu_custom_call.1} parent=15 // pred_check
          %p465 = pneg %p50
        $region18: #{tpu_custom_call.1} parent=15 // pred_check_branch
          %467 = sbr.rel (%p465) target = $region20
        $region19: #{tpu_custom_call.1} parent=15 // pred_region
          %s468 = sand.u32 %s40, 1
          %s469 = scalar_lea.sflag [#allocation3], %s468
          %s470 = sand.u32 %s40, 1
          %s471 = smul.addr %s470, 16
          %s472 = scalar_lea.vmem [#allocation2], %s471
          %s474 = ssub.s32 256, 256
          %475 = vsyncadd %s469, %s474
          %s476 = smul.addr %s30, 2
          %s477 = smul.addr %s476, 128
          %s478 = scalar_lea.hbm %s0, %s477
          %s479 = sshll.u32 %s472, 4
          %s480 = int_to_ptr.vmem [resolvable:$true] %s479
          %485 = dma.hbm_to_vmem [thread:$0]  %s478, 256, %s480, %s469, 128, 128, 8
        $region20: #{tpu_custom_call.1} parent=15 // pred_fallthru
          _
        // Predicated region
        $region21: #{tpu_custom_call.1} parent=15 // pred_check
          %p486 = pneg %p76
        $region22: #{tpu_custom_call.1} parent=15 // pred_check_branch
          %488 = sbr.rel (%p486) target = $region24
        $region23: #{tpu_custom_call.1} parent=15 // pred_region
          %s489 = sand.u32 %s66, 1
          %s490 = scalar_lea.sflag [#allocation6], %s489
          %s491 = sand.u32 %s66, 1
          %s492 = smul.addr %s491, 16
          %s493 = scalar_lea.vmem [#allocation5], %s492
          %s495 = ssub.s32 256, 256
          %496 = vsyncadd %s490, %s495
          %s497 = smul.addr %s30, 2
          %s498 = smul.addr %s497, 128
          %s499 = scalar_lea.hbm %s1, %s498
          %s500 = sshll.u32 %s493, 4
          %s501 = int_to_ptr.vmem [resolvable:$true] %s500
          %506 = dma.hbm_to_vmem [thread:$0]  %s499, 256, %s501, %s490, 128, 128, 8
        $region24: #{tpu_custom_call.1} parent=15 // pred_fallthru
          _
        // Predicated region
        $region25: #{tpu_custom_call.1} parent=15 // pred_check
          %p507 = pneg %p102
        $region26: #{tpu_custom_call.1} parent=15 // pred_check_branch
          %509 = sbr.rel (%p507) target = $region28
        $region27: #{tpu_custom_call.1} parent=15 // pred_region
          %p510 = scmp.lt.s32.totalorder %s30, 1
          %s511 = scalar_select %p510, %s30, 1
          %s512 = smul.addr %s511, 2
          %s513 = scalar_lea.vmem %s2, %s512
        $region28: #{tpu_custom_call.1} parent=15 // pred_fallthru
          _
        // Predicated region
        $region29: #{tpu_custom_call.1} parent=15 // pred_check
          %p514 = pneg %p128
        $region30: #{tpu_custom_call.1} parent=15 // pred_check_branch
          %516 = sbr.rel (%p514) target = $region32
        $region31: #{tpu_custom_call.1} parent=15 // pred_region
          %p517 = scmp.lt.s32.totalorder %s30, 1
          %s518 = scalar_select %p517, %s30, 1
          %s519 = smul.addr %s518, 8
          %s520 = smul.addr %s519, 8
          %s521 = scalar_lea.vmem %s3, %s520
        $region32: #{tpu_custom_call.1} parent=15 // pred_fallthru
          _
        // Predicated region
        $region33: #{tpu_custom_call.1} parent=15 // pred_check
          %p522 = pneg %p154
        $region34: #{tpu_custom_call.1} parent=15 // pred_check_branch
          %524 = sbr.rel (%p522) target = $region36
        $region35: #{tpu_custom_call.1} parent=15 // pred_region
          %p525 = scmp.lt.s32.totalorder %s30, 1
          %s526 = scalar_select %p525, %s30, 1
          %s527 = smul.addr %s526, 2
          %s528 = scalar_lea.vmem %s4, %s527
        $region36: #{tpu_custom_call.1} parent=15 // pred_fallthru
          _
        // Predicated region
        $region37: #{tpu_custom_call.1} parent=15 // pred_check
          %p529 = pneg %p180
        $region38: #{tpu_custom_call.1} parent=15 // pred_check_branch
          %531 = sbr.rel (%p529) target = $region40
        $region39: #{tpu_custom_call.1} parent=15 // pred_region
          %p532 = scmp.lt.s32.totalorder %s30, 1
          %s533 = scalar_select %p532, %s30, 1
          %s534 = smul.addr %s533, 8
          %s535 = smul.addr %s534, 8
          %s536 = scalar_lea.vmem %s5, %s535
        $region40: #{tpu_custom_call.1} parent=15 // pred_fallthru
          _
        // Predicated region
        $region41: #{tpu_custom_call.1} parent=15 // pred_check
          %p537 = pneg %p206
        $region42: #{tpu_custom_call.1} parent=15 // pred_check_branch
          %539 = sbr.rel (%p537) target = $region44
        $region43: #{tpu_custom_call.1} parent=15 // pred_region
          %p540 = scmp.lt.s32.totalorder %s30, 1
          %s541 = scalar_select %p540, %s30, 1
          %s542 = smul.addr %s541, 2
          %s543 = scalar_lea.vmem %s6, %s542
        $region44: #{tpu_custom_call.1} parent=15 // pred_fallthru
          _
        // Predicated region
        $region45: #{tpu_custom_call.1} parent=15 // pred_check
          %p544 = pneg %p232
        $region46: #{tpu_custom_call.1} parent=15 // pred_check_branch
          %546 = sbr.rel (%p544) target = $region48
        $region47: #{tpu_custom_call.1} parent=15 // pred_region
          %p547 = scmp.lt.s32.totalorder %s30, 1
          %s548 = scalar_select %p547, %s30, 1
          %s549 = smul.addr %s548, 2
          %s550 = scalar_lea.vmem %s7, %s549
        $region48: #{tpu_custom_call.1} parent=15 // pred_fallthru
          _
        // Predicated region
        $region49: #{tpu_custom_call.1} parent=15 // pred_check
          %p551 = pneg %p258
        $region50: #{tpu_custom_call.1} parent=15 // pred_check_branch
          %553 = sbr.rel (%p551) target = $region52
        $region51: #{tpu_custom_call.1} parent=15 // pred_region
          %p554 = scmp.lt.s32.totalorder %s30, 1
          %s555 = scalar_select %p554, %s30, 1
          %s556 = smul.addr %s555, 2
          %s557 = scalar_lea.vmem %s8, %s556
        $region52: #{tpu_custom_call.1} parent=15 // pred_fallthru
          _
        // Predicated region
        $region53: #{tpu_custom_call.1} parent=15 // pred_check
          %p558 = pneg %p284
        $region54: #{tpu_custom_call.1} parent=15 // pred_check_branch
          %560 = sbr.rel (%p558) target = $region56
        $region55: #{tpu_custom_call.1} parent=15 // pred_region
          %p561 = scmp.lt.s32.totalorder %s30, 1
          %s562 = scalar_select %p561, %s30, 1
          %s563 = smul.addr %s562, 8
          %s564 = smul.addr %s563, 8
          %s565 = scalar_lea.vmem %s9, %s564
        $region56: #{tpu_custom_call.1} parent=15 // pred_fallthru
          _
        // Predicated region
        $region57: #{tpu_custom_call.1} parent=15 // pred_check
          %p566 = pneg %p310
        $region58: #{tpu_custom_call.1} parent=15 // pred_check_branch
          %568 = sbr.rel (%p566) target = $region60
        $region59: #{tpu_custom_call.1} parent=15 // pred_region
          %p569 = scmp.lt.s32.totalorder %s30, 1
          %s570 = scalar_select %p569, %s30, 1
          %s571 = smul.addr %s570, 2
          %s572 = scalar_lea.vmem %s10, %s571
        $region60: #{tpu_custom_call.1} parent=15 // pred_fallthru
          _
        // Predicated region
        $region61: #{tpu_custom_call.1} parent=15 // pred_check
          %p573 = pneg %p336
        $region62: #{tpu_custom_call.1} parent=15 // pred_check_branch
          %575 = sbr.rel (%p573) target = $region64
        $region63: #{tpu_custom_call.1} parent=15 // pred_region
          %p576 = scmp.lt.s32.totalorder %s30, 1
          %s577 = scalar_select %p576, %s30, 1
          %s578 = smul.addr %s577, 16
          %s579 = smul.addr %s578, 8
          %s580 = scalar_lea.vmem %s11, %s579
        $region64: #{tpu_custom_call.1} parent=15 // pred_fallthru
          _
        // Predicated region
        $region65: #{tpu_custom_call.1} parent=15 // pred_check
          %p581 = pneg %p362
        $region66: #{tpu_custom_call.1} parent=15 // pred_check_branch
          %583 = sbr.rel (%p581) target = $region68
        $region67: #{tpu_custom_call.1} parent=15 // pred_region
          %p584 = scmp.lt.s32.totalorder %s30, 1
          %s585 = scalar_select %p584, %s30, 1
          %s586 = smul.addr %s585, 2
          %s587 = scalar_lea.vmem %s12, %s586
        $region68: #{tpu_custom_call.1} parent=15 // pred_fallthru
          _
        // Predicated region
        $region69: #{tpu_custom_call.1} parent=15 // pred_check
          %p588 = pneg %p388
        $region70: #{tpu_custom_call.1} parent=15 // pred_check_branch
          %590 = sbr.rel (%p588) target = $region72
        $region71: #{tpu_custom_call.1} parent=15 // pred_region
          %p591 = scmp.lt.s32.totalorder %s30, 1
          %s592 = scalar_select %p591, %s30, 1
          %s593 = smul.addr %s592, 2
          %s594 = scalar_lea.vmem %s13, %s593
        $region72: #{tpu_custom_call.1} parent=15 // pred_fallthru
          _
        // Predicated region
        $region73: #{tpu_custom_call.1} parent=15 // pred_check
          %p595 = pneg %p414
        $region74: #{tpu_custom_call.1} parent=15 // pred_check_branch
          %597 = sbr.rel (%p595) target = $region76
        $region75: #{tpu_custom_call.1} parent=15 // pred_region
          %p598 = scmp.lt.s32.totalorder %s30, 1
          %s599 = scalar_select %p598, %s30, 1
          %s600 = smul.addr %s599, 2
          %s601 = scalar_lea.vmem %s14, %s600
        $region76: #{tpu_custom_call.1} parent=15 // pred_fallthru
          _
      $region16: #{tpu_custom_call.1} parent=5 // pred_fallthru
        _
      %p602 = scmp.le.s32.totalorder 1, %s30
      %p603 = scmp.lt.s32.totalorder %s30, 3
      %p604 = pnand %p602, %p603
      %p605 = pneg %p604
      // Predicated region
      $region77: #{tpu_custom_call.1} parent=5 // pred_check
        _
      $region78: #{tpu_custom_call.1} parent=5 // pred_check_branch
        %607 = sbr.rel (%p604) target = $region80
      $region79: #{tpu_custom_call.1} parent=5 // pred_region
        %s608 = ssub.s32 %s30, 1
        %s609 = sand.u32 %s43, 1
        %s610 = scalar_lea.sflag [#allocation3], %s609
        %s611 = sand.u32 %s43, 1
        %s612 = smul.addr %s611, 16
        %s613 = scalar_lea.vmem [#allocation2], %s612
        // Predicated region
        $region81: #{tpu_custom_call.1} parent=79 // pred_check
          %p614 = pneg %p56
        $region82: #{tpu_custom_call.1} parent=79 // pred_check_branch
          %616 = sbr.rel (%p614) target = $region84
        $region83: #{tpu_custom_call.1} parent=79 // pred_region
          %617 = dma.done %s610, 256
        $region84: #{tpu_custom_call.1} parent=79 // pred_fallthru
          _
        %s618 = sand.u32 %s69, 1
        %s619 = scalar_lea.sflag [#allocation6], %s618
        %s620 = sand.u32 %s69, 1
        %s621 = smul.addr %s620, 16
        %s622 = scalar_lea.vmem [#allocation5], %s621
        // Predicated region
        $region85: #{tpu_custom_call.1} parent=79 // pred_check
          %p623 = pneg %p82
        $region86: #{tpu_custom_call.1} parent=79 // pred_check_branch
          %625 = sbr.rel (%p623) target = $region88
        $region87: #{tpu_custom_call.1} parent=79 // pred_region
          %626 = dma.done %s619, 256
        $region88: #{tpu_custom_call.1} parent=79 // pred_fallthru
          _
        %s627 = sand.u32 %s43, 1
        %s628 = scalar_lea.sflag [#allocation3], %s627
        %s629 = sand.u32 %s43, 1
        %s630 = smul.addr %s629, 16
        %s631 = scalar_lea.vmem [#allocation2], %s630
        %p632 = pneg %p56
        %p633 = pneg %p53
        %s634 = sand.u32 %s69, 1
        %s635 = scalar_lea.sflag [#allocation6], %s634
        %s636 = sand.u32 %s69, 1
        %s637 = smul.addr %s636, 16
        %s638 = scalar_lea.vmem [#allocation5], %s637
        %p639 = pneg %p82
        %p640 = pneg %p79
        %p641 = scmp.lt.s32.totalorder %s35, 1
        %s642 = scalar_select %p641, %s35, 1
        %s643 = smul.addr %s642, 2
        %s644 = scalar_lea.vmem %s2, %s643
        %p645 = pneg %p108
        %p646 = pneg %p105
        %p647 = scmp.lt.s32.totalorder %s35, 1
        %s648 = scalar_select %p647, %s35, 1
        %s649 = smul.addr %s648, 8
        %s650 = smul.addr %s649, 8
        %s651 = scalar_lea.vmem %s3, %s650
        %p652 = pneg %p134
        %p653 = pneg %p131
        %p654 = scmp.lt.s32.totalorder %s35, 1
        %s655 = scalar_select %p654, %s35, 1
        %s656 = smul.addr %s655, 2
        %s657 = scalar_lea.vmem %s4, %s656
        %p658 = pneg %p160
        %p659 = pneg %p157
        %p660 = scmp.lt.s32.totalorder %s35, 1
        %s661 = scalar_select %p660, %s35, 1
        %s662 = smul.addr %s661, 8
        %s663 = smul.addr %s662, 8
        %s664 = scalar_lea.vmem %s5, %s663
        %p665 = pneg %p186
        %p666 = pneg %p183
        %p667 = scmp.lt.s32.totalorder %s35, 1
        %s668 = scalar_select %p667, %s35, 1
        %s669 = smul.addr %s668, 2
        %s670 = scalar_lea.vmem %s6, %s669
        %p671 = pneg %p212
        %p672 = pneg %p209
        %p673 = scmp.lt.s32.totalorder %s35, 1
        %s674 = scalar_select %p673, %s35, 1
        %s675 = smul.addr %s674, 2
        %s676 = scalar_lea.vmem %s7, %s675
        %p677 = pneg %p238
        %p678 = pneg %p235
        %p679 = scmp.lt.s32.totalorder %s35, 1
        %s680 = scalar_select %p679, %s35, 1
        %s681 = smul.addr %s680, 2
        %s682 = scalar_lea.vmem %s8, %s681
        %p683 = pneg %p264
        %p684 = pneg %p261
        %p685 = scmp.lt.s32.totalorder %s35, 1
        %s686 = scalar_select %p685, %s35, 1
        %s687 = smul.addr %s686, 8
        %s688 = smul.addr %s687, 8
        %s689 = scalar_lea.vmem %s9, %s688
        %p690 = pneg %p290
        %p691 = pneg %p287
        %p692 = scmp.lt.s32.totalorder %s35, 1
        %s693 = scalar_select %p692, %s35, 1
        %s694 = smul.addr %s693, 2
        %s695 = scalar_lea.vmem %s10, %s694
        %p696 = pneg %p316
        %p697 = pneg %p313
        %p698 = scmp.lt.s32.totalorder %s35, 1
        %s699 = scalar_select %p698, %s35, 1
        %s700 = smul.addr %s699, 16
        %s701 = smul.addr %s700, 8
        %s702 = scalar_lea.vmem %s11, %s701
        %p703 = pneg %p342
        %p704 = pneg %p339
        %p705 = scmp.lt.s32.totalorder %s35, 1
        %s706 = scalar_select %p705, %s35, 1
        %s707 = smul.addr %s706, 2
        %s708 = scalar_lea.vmem %s12, %s707
        %p709 = pneg %p368
        %p710 = pneg %p365
        %p711 = scmp.lt.s32.totalorder %s35, 1
        %s712 = scalar_select %p711, %s35, 1
        %s713 = smul.addr %s712, 2
        %s714 = scalar_lea.vmem %s13, %s713
        %p715 = pneg %p394
        %p716 = pneg %p391
        %p717 = scmp.lt.s32.totalorder %s35, 1
        %s718 = scalar_select %p717, %s35, 1
        %s719 = smul.addr %s718, 2
        %s720 = scalar_lea.vmem %s14, %s719
        %p721 = pneg %p420
        %p722 = pneg %p417
        %p723 = pneg %p446
        %p724 = pneg %p443
        %s725 = sand.u32 %s433, 1
        %s726 = scalar_lea.sflag [#allocation4], %s725
        %s727 = sand.u32 %s433, 1
        %s728 = smul.addr %s727, 2
        %s729 = scalar_lea.vmem [#allocation7], %s728
        %p730 = scmp.lt.s32.totalorder %s35, 1
        %s731 = scalar_select %p730, %s35, 1
        %s732 = smul.addr %s731, 2
        %s733 = scalar_lea.vmem %s2, %s732
        %p734 = scmp.lt.s32.totalorder %s35, 1
        %s735 = scalar_select %p734, %s35, 1
        %s736 = smul.addr %s735, 8
        %s737 = smul.addr %s736, 8
        %s738 = scalar_lea.vmem %s3, %s737
        %p739 = scmp.lt.s32.totalorder %s35, 1
        %s740 = scalar_select %p739, %s35, 1
        %s741 = smul.addr %s740, 2
        %s742 = scalar_lea.vmem %s4, %s741
        %p743 = scmp.lt.s32.totalorder %s35, 1
        %s744 = scalar_select %p743, %s35, 1
        %s745 = smul.addr %s744, 8
        %s746 = smul.addr %s745, 8
        %s747 = scalar_lea.vmem %s5, %s746
        %p748 = scmp.lt.s32.totalorder %s35, 1
        %s749 = scalar_select %p748, %s35, 1
        %s750 = smul.addr %s749, 2
        %s751 = scalar_lea.vmem %s6, %s750
        %p752 = scmp.lt.s32.totalorder %s35, 1
        %s753 = scalar_select %p752, %s35, 1
        %s754 = smul.addr %s753, 2
        %s755 = scalar_lea.vmem %s7, %s754
        %p756 = scmp.lt.s32.totalorder %s35, 1
        %s757 = scalar_select %p756, %s35, 1
        %s758 = smul.addr %s757, 2
        %s759 = scalar_lea.vmem %s8, %s758
        %p760 = scmp.lt.s32.totalorder %s35, 1
        %s761 = scalar_select %p760, %s35, 1
        %s762 = smul.addr %s761, 8
        %s763 = smul.addr %s762, 8
        %s764 = scalar_lea.vmem %s9, %s763
        %p765 = scmp.lt.s32.totalorder %s35, 1
        %s766 = scalar_select %p765, %s35, 1
        %s767 = smul.addr %s766, 2
        %s768 = scalar_lea.vmem %s10, %s767
        %p769 = scmp.lt.s32.totalorder %s35, 1
        %s770 = scalar_select %p769, %s35, 1
        %s771 = smul.addr %s770, 16
        %s772 = smul.addr %s771, 8
        %s773 = scalar_lea.vmem %s11, %s772
        %p774 = scmp.lt.s32.totalorder %s35, 1
        %s775 = scalar_select %p774, %s35, 1
        %s776 = smul.addr %s775, 2
        %s777 = scalar_lea.vmem %s12, %s776
        %p778 = scmp.lt.s32.totalorder %s35, 1
        %s779 = scalar_select %p778, %s35, 1
        %s780 = smul.addr %s779, 2
        %s781 = scalar_lea.vmem %s13, %s780
        %p782 = scmp.lt.s32.totalorder %s35, 1
        %s783 = scalar_select %p782, %s35, 1
        %s784 = smul.addr %s783, 2
        %s785 = scalar_lea.vmem %s14, %s784
        %v786 = vld [vmem:[%s613] sm:$0xff]
        %v787 = vld [vmem:[%s613 + $0x8] sm:$0xff]
        %v788 = vld [vmem:[%s622] sm:$0xff]
        %v789 = vld [vmem:[%s622 + $0x8] sm:$0xff]
        %v790 = vld [vmem:[%s733] sm:$0x3]
        %v791 = vld [vmem:[%s738] sm:$0xff]
        %v792 = vld [vmem:[%s738 + $0x8] sm:$0xff]
        %v793 = vld [vmem:[%s738 + $0x10] sm:$0xff]
        %v794 = vld [vmem:[%s738 + $0x18] sm:$0xff]
        %v795 = vld [vmem:[%s742] sm:$0x1]
        %v797 = vlaneseq
        %v798 = vshrl.u32 %v797, 7
        %v799 = vsub.s32 0, %v798
        %v800 = vrot.slane %v795, %v799
        %vm802 = vcmask 261120
        %v804 = vsel %vm802, %v786, 0
        %v807 = vsel %vm802, %v787, 0
        %809 = vmatprep.subr.mxu0 0.0
        %810 = vmatpush1.msra.mxu0 %v791
        %811 = vmatprep.subr.mxu0 0.0
        %812 = vmatpush1.msra.mxu0 %v792
        %813 = vmatprep.subr.mxu0 0.0
        %814 = vmatpush1.msra.mxu0 %v793
        %815 = vmatprep.subr.mxu0 0.0
        %816 = vmatpush1.msra.mxu0 %v794
        %817 = vmatprep.subr.mxu0 0.0
        %818 = vmatpush1.msra.mxu0 0.0
        %819 = vmatprep.subr.mxu0 0.0
        %820 = vmatpush1.msra.mxu0 0.0
        %821 = vmatprep.subr.mxu0 0.0
        %822 = vmatpush1.msra.mxu0 0.0
        %823 = vmatprep.subr.mxu0 0.0
        %824 = vmatpush1.msra.mxu0 0.0
        %825 = vmatprep.subr.mxu0 0.0
        %826 = vmatpush1.msra.mxu0 0.0
        %827 = vmatprep.subr.mxu0 0.0
        %828 = vmatpush1.msra.mxu0 0.0
        %829 = vmatprep.subr.mxu0 0.0
        %830 = vmatpush1.msra.mxu0 0.0
        %831 = vmatprep.subr.mxu0 0.0
        %832 = vmatpush1.msra.mxu0 0.0
        %833 = vmatprep.subr.mxu0 0.0
        %834 = vmatpush1.msra.mxu0 0.0
        %835 = vmatprep.subr.mxu0 0.0
        %836 = vmatpush1.msra.mxu0 0.0
        %837 = vmatprep.subr.mxu0 0.0
        %838 = vmatpush1.msra.mxu0 0.0
        %839 = vmatprep.subr.mxu0 0.0
        %840 = vmatpush1.msra.mxu0 0.0
        %841 = vmatprep.subr.mxu0 0.0
        %842 = vmatpush1.msra.mxu0 0.0
        %843 = vmatprep.subr.mxu0 0.0
        %844 = vmatpush1.msra.mxu0 0.0
        %845 = vmatprep.subr.mxu0 0.0
        %846 = vmatpush1.msra.mxu0 0.0
        %847 = vmatprep.subr.mxu0 0.0
        %848 = vmatpush1.msra.mxu0 0.0
        %849 = vmatprep.subr.mxu0 0.0
        %850 = vmatpush1.msra.mxu0 0.0
        %851 = vmatprep.subr.mxu0 0.0
        %852 = vmatpush1.msra.mxu0 0.0
        %853 = vmatprep.subr.mxu0 0.0
        %854 = vmatpush1.msra.mxu0 0.0
        %855 = vmatprep.subr.mxu0 0.0
        %856 = vmatpush1.msra.mxu0 0.0
        %857 = vmatprep.subr.mxu0 0.0
        %858 = vmatpush1.msra.mxu0 0.0
        %859 = vmatprep.subr.mxu0 0.0
        %860 = vmatpush1.msra.mxu0 0.0
        %861 = vmatprep.subr.mxu0 0.0
        %862 = vmatpush1.msra.mxu0 0.0
        %863 = vmatprep.subr.mxu0 0.0
        %864 = vmatpush1.msra.mxu0 0.0
        %865 = vmatprep.subr.mxu0 0.0
        %866 = vmatpush1.msra.mxu0 0.0
        %867 = vmatprep.subr.mxu0 0.0
        %868 = vmatpush1.msra.mxu0 0.0
        %869 = vmatprep.subr.mxu0 0.0
        %870 = vmatpush1.msra.mxu0 0.0
        %871 = vmatprep.subr.mxu0 0.0
        %872 = vmatpush1.msra.mxu0 0.0
        %873 = vmatprep.mubr.f32.mxu0 0.0
        %874 = vmatmul.mubr.f32.gmra.mrb[0].mxu0 %v804
        %v875 = vpop.f32.mrb[0].mxu0
        %v876 = vadd.f32 %v800, %v875
        %v877 = vpop.f32.mrb[0].mxu0
        %878 = vmatprep.mubr.f32.mxu0 0.0
        %879 = vmatmul.mubr.f32.gmra.mrb[0].mxu0 %v807
        %v880 = vpop.f32.mrb[0].mxu0
        %v881 = vadd.f32 %v800, %v880
        %v882 = vpop.f32.mrb[0].mxu0
        %883 = vdwg.mxu0
        %886 = vrot.lane.b32.xlu0 %v876, 96
        %v887 = vpop.permute.xlu0 %886
        %888 = vrot.lane.b32.xlu0 %v881, 96
        %v889 = vpop.permute.xlu0 %888
        %vm890 = vcmask 130048
        %v891 = vsel %vm890, %v876, 0
        %v893 = vsel %vm890, %v881, 0
        %v895 = vsel %vm890, %v887, 0
        %v897 = vsel %vm890, %v889, 0
        %899 = vmatprep.subr.mxu0 0.0
        %900 = vmatpush1.xpose.msra.mxu0 %v895
        %901 = vmatprep.subr.mxu0 0.0
        %902 = vmatpush1.xpose.msra.mxu0 %v897
        %903 = vmatprep.subr.mxu0 0.0
        %904 = vmatpush1.xpose.msra.mxu0 0.0
        %905 = vmatprep.subr.mxu0 0.0
        %906 = vmatpush1.xpose.msra.mxu0 0.0
        %907 = vmatprep.subr.mxu0 0.0
        %908 = vmatpush1.xpose.msra.mxu0 0.0
        %909 = vmatprep.subr.mxu0 0.0
        %910 = vmatpush1.xpose.msra.mxu0 0.0
        %911 = vmatprep.subr.mxu0 0.0
        %912 = vmatpush1.xpose.msra.mxu0 0.0
        %913 = vmatprep.subr.mxu0 0.0
        %914 = vmatpush1.xpose.msra.mxu0 0.0
        %915 = vmatprep.subr.mxu0 0.0
        %916 = vmatpush1.xpose.msra.mxu0 0.0
        %917 = vmatprep.subr.mxu0 0.0
        %918 = vmatpush1.xpose.msra.mxu0 0.0
        %919 = vmatprep.subr.mxu0 0.0
        %920 = vmatpush1.xpose.msra.mxu0 0.0
        %921 = vmatprep.subr.mxu0 0.0
        %922 = vmatpush1.xpose.msra.mxu0 0.0
        %923 = vmatprep.subr.mxu0 0.0
        %924 = vmatpush1.xpose.msra.mxu0 0.0
        %925 = vmatprep.subr.mxu0 0.0
        %926 = vmatpush1.xpose.msra.mxu0 0.0
        %927 = vmatprep.subr.mxu0 0.0
        %928 = vmatpush1.xpose.msra.mxu0 0.0
        %929 = vmatprep.subr.mxu0 0.0
        %930 = vmatpush1.xpose.msra.mxu0 0.0
        %931 = vmatprep.subr.mxu0 0.0
        %932 = vmatpush1.xpose.msra.mxu0 0.0
        %933 = vmatprep.subr.mxu0 0.0
        %934 = vmatpush1.xpose.msra.mxu0 0.0
        %935 = vmatprep.subr.mxu0 0.0
        %936 = vmatpush1.xpose.msra.mxu0 0.0
        %937 = vmatprep.subr.mxu0 0.0
        %938 = vmatpush1.xpose.msra.mxu0 0.0
        %939 = vmatprep.subr.mxu0 0.0
        %940 = vmatpush1.xpose.msra.mxu0 0.0
        %941 = vmatprep.subr.mxu0 0.0
        %942 = vmatpush1.xpose.msra.mxu0 0.0
        %943 = vmatprep.subr.mxu0 0.0
        %944 = vmatpush1.xpose.msra.mxu0 0.0
        %945 = vmatprep.subr.mxu0 0.0
        %946 = vmatpush1.xpose.msra.mxu0 0.0
        %947 = vmatprep.subr.mxu0 0.0
        %948 = vmatpush1.xpose.msra.mxu0 0.0
        %949 = vmatprep.subr.mxu0 0.0
        %950 = vmatpush1.xpose.msra.mxu0 0.0
        %951 = vmatprep.subr.mxu0 0.0
        %952 = vmatpush1.xpose.msra.mxu0 0.0
        %953 = vmatprep.subr.mxu0 0.0
        %954 = vmatpush1.xpose.msra.mxu0 0.0
        %955 = vmatprep.subr.mxu0 0.0
        %956 = vmatpush1.xpose.msra.mxu0 0.0
        %957 = vmatprep.subr.mxu0 0.0
        %958 = vmatpush1.xpose.msra.mxu0 0.0
        %959 = vmatprep.subr.mxu0 0.0
        %960 = vmatpush1.xpose.msra.mxu0 0.0
        %961 = vmatprep.subr.mxu0 0.0
        %962 = vmatpush1.xpose.msra.mxu0 0.0
        %963 = vmatprep.mubr.f32.mxu0 0.0
        %964 = vmatmul.mubr.f32.gmra.mrb[0].mxu0 %v891
        %v965 = vpop.f32.mrb[0].mxu0
        %v966 = vadd.f32 0.0, %v965
        %v967 = vpop.f32.mrb[0].mxu0
        %968 = vmatprep.mubr.f32.mxu0 0.0
        %969 = vmatmul.mubr.f32.gmra.mrb[0].mxu0 %v893
        %v970 = vpop.f32.mrb[0].mxu0
        %v971 = vadd.f32 0.0, %v970
        %v972 = vpop.f32.mrb[0].mxu0
        %973 = vdwg.mxu0
        %v974 = vmul.f32 %v966, 0.25
        %v975 = vmul.f32 %v971, 0.25
        %v976 = vadd.f32 %v974, %v788
        %v977 = vadd.f32 %v975, %v789
        %v978 = vsel %vm890, %v976, -inf
        %979 = vmax.xlane.f32.xlu0 %v978
        %v980 = vpop.xlane.xlu0 %979
        %v981 = vsel %vm890, %v977, -inf
        %982 = vmax.xlane.f32.xlu0 %v981
        %v983 = vpop.xlane.xlu0 %982
        %v984 = vsub.f32 %v976, %v980
        %v985 = vsub.f32 %v977, %v983
        %v986 = vmul.f32 %v984, 1.442695
        %v987 = vpow.pop %v986
        %v988 = vmul.f32 %v985, 1.442695
        %v989 = vpow.pop %v988
        %v990 = vsel %vm890, %v987, 0.0
        %991 = vadd.xlane.f32.xlu0 %v990
        %v992 = vpop.xlane.xlu0 %991
        %v993 = vsel %vm890, %v989, 0.0
        %994 = vadd.xlane.f32.xlu0 %v993
        %v995 = vpop.xlane.xlu0 %994
        %v996 = vrcp.pop %v992
        %v997 = vrcp.pop %v995
        %v998 = vmul.f32 %v987, %v996
        %v999 = vmul.f32 %v989, %v997
        %1000 = vrot.lane.b32.xlu0 %v876, 64
        %v1001 = vpop.permute.xlu0 %1000
        %1002 = vrot.lane.b32.xlu0 %v881, 64
        %v1003 = vpop.permute.xlu0 %1002
        %v1007 = vsel %vm890, %v998, 0
        %v1010 = vsel %vm890, %v999, 0
        %1012 = vmatprep.subr.mxu0 0.0
        %1013 = vmatpush1.msra.mxu0 %v1001
        %1014 = vmatprep.subr.mxu0 0.0
        %1015 = vmatpush1.msra.mxu0 %v1003
        %1016 = vmatprep.subr.mxu0 0.0
        %1017 = vmatpush1.msra.mxu0 0.0
        %1018 = vmatprep.subr.mxu0 0.0
        %1019 = vmatpush1.msra.mxu0 0.0
        %1020 = vmatprep.subr.mxu0 0.0
        %1021 = vmatpush1.msra.mxu0 0.0
        %1022 = vmatprep.subr.mxu0 0.0
        %1023 = vmatpush1.msra.mxu0 0.0
        %1024 = vmatprep.subr.mxu0 0.0
        %1025 = vmatpush1.msra.mxu0 0.0
        %1026 = vmatprep.subr.mxu0 0.0
        %1027 = vmatpush1.msra.mxu0 0.0
        %1028 = vmatprep.subr.mxu0 0.0
        %1029 = vmatpush1.msra.mxu0 0.0
        %1030 = vmatprep.subr.mxu0 0.0
        %1031 = vmatpush1.msra.mxu0 0.0
        %1032 = vmatprep.subr.mxu0 0.0
        %1033 = vmatpush1.msra.mxu0 0.0
        %1034 = vmatprep.subr.mxu0 0.0
        %1035 = vmatpush1.msra.mxu0 0.0
        %1036 = vmatprep.subr.mxu0 0.0
        %1037 = vmatpush1.msra.mxu0 0.0
        %1038 = vmatprep.subr.mxu0 0.0
        %1039 = vmatpush1.msra.mxu0 0.0
        %1040 = vmatprep.subr.mxu0 0.0
        %1041 = vmatpush1.msra.mxu0 0.0
        %1042 = vmatprep.subr.mxu0 0.0
        %1043 = vmatpush1.msra.mxu0 0.0
        %1044 = vmatprep.subr.mxu0 0.0
        %1045 = vmatpush1.msra.mxu0 0.0
        %1046 = vmatprep.subr.mxu0 0.0
        %1047 = vmatpush1.msra.mxu0 0.0
        %1048 = vmatprep.subr.mxu0 0.0
        %1049 = vmatpush1.msra.mxu0 0.0
        %1050 = vmatprep.subr.mxu0 0.0
        %1051 = vmatpush1.msra.mxu0 0.0
        %1052 = vmatprep.subr.mxu0 0.0
        %1053 = vmatpush1.msra.mxu0 0.0
        %1054 = vmatprep.subr.mxu0 0.0
        %1055 = vmatpush1.msra.mxu0 0.0
        %1056 = vmatprep.subr.mxu0 0.0
        %1057 = vmatpush1.msra.mxu0 0.0
        %1058 = vmatprep.subr.mxu0 0.0
        %1059 = vmatpush1.msra.mxu0 0.0
        %1060 = vmatprep.subr.mxu0 0.0
        %1061 = vmatpush1.msra.mxu0 0.0
        %1062 = vmatprep.subr.mxu0 0.0
        %1063 = vmatpush1.msra.mxu0 0.0
        %1064 = vmatprep.subr.mxu0 0.0
        %1065 = vmatpush1.msra.mxu0 0.0
        %1066 = vmatprep.subr.mxu0 0.0
        %1067 = vmatpush1.msra.mxu0 0.0
        %1068 = vmatprep.subr.mxu0 0.0
        %1069 = vmatpush1.msra.mxu0 0.0
        %1070 = vmatprep.subr.mxu0 0.0
        %1071 = vmatpush1.msra.mxu0 0.0
        %1072 = vmatprep.subr.mxu0 0.0
        %1073 = vmatpush1.msra.mxu0 0.0
        %1074 = vmatprep.subr.mxu0 0.0
        %1075 = vmatpush1.msra.mxu0 0.0
        %1076 = vmatprep.mubr.f32.mxu0 0.0
        %1077 = vmatmul.mubr.f32.gmra.mrb[0].mxu0 %v1007
        %v1078 = vpop.f32.mrb[0].mxu0
        %v1079 = vadd.f32 0.0, %v1078
        %v1080 = vpop.f32.mrb[0].mxu0
        %1081 = vmatprep.mubr.f32.mxu0 0.0
        %1082 = vmatmul.mubr.f32.gmra.mrb[0].mxu0 %v1010
        %v1083 = vpop.f32.mrb[0].mxu0
        %v1084 = vadd.f32 0.0, %v1083
        %v1085 = vpop.f32.mrb[0].mxu0
        %1086 = vdwg.mxu0
        %1087 = vrot.lane.b32.xlu0 %v876, 112
        %v1088 = vpop.permute.xlu0 %1087
        %1089 = vrot.lane.b32.xlu0 %v881, 112
        %v1090 = vpop.permute.xlu0 %1089
        %1091 = vrot.lane.b32.xlu0 %v876, 80
        %v1092 = vpop.permute.xlu0 %1091
        %1093 = vrot.lane.b32.xlu0 %v881, 80
        %v1094 = vpop.permute.xlu0 %1093
        %v1095 = vsel %vm890, %v1088, 0
        %v1097 = vsel %vm890, %v1090, 0
        %v1099 = vsel %vm890, %v1092, 0
        %v1101 = vsel %vm890, %v1094, 0
        %1103 = vmatprep.subr.mxu0 0.0
        %1104 = vmatpush1.xpose.msra.mxu0 %v1099
        %1105 = vmatprep.subr.mxu0 0.0
        %1106 = vmatpush1.xpose.msra.mxu0 %v1101
        %1107 = vmatprep.subr.mxu0 0.0
        %1108 = vmatpush1.xpose.msra.mxu0 0.0
        %1109 = vmatprep.subr.mxu0 0.0
        %1110 = vmatpush1.xpose.msra.mxu0 0.0
        %1111 = vmatprep.subr.mxu0 0.0
        %1112 = vmatpush1.xpose.msra.mxu0 0.0
        %1113 = vmatprep.subr.mxu0 0.0
        %1114 = vmatpush1.xpose.msra.mxu0 0.0
        %1115 = vmatprep.subr.mxu0 0.0
        %1116 = vmatpush1.xpose.msra.mxu0 0.0
        %1117 = vmatprep.subr.mxu0 0.0
        %1118 = vmatpush1.xpose.msra.mxu0 0.0
        %1119 = vmatprep.subr.mxu0 0.0
        %1120 = vmatpush1.xpose.msra.mxu0 0.0
        %1121 = vmatprep.subr.mxu0 0.0
        %1122 = vmatpush1.xpose.msra.mxu0 0.0
        %1123 = vmatprep.subr.mxu0 0.0
        %1124 = vmatpush1.xpose.msra.mxu0 0.0
        %1125 = vmatprep.subr.mxu0 0.0
        %1126 = vmatpush1.xpose.msra.mxu0 0.0
        %1127 = vmatprep.subr.mxu0 0.0
        %1128 = vmatpush1.xpose.msra.mxu0 0.0
        %1129 = vmatprep.subr.mxu0 0.0
        %1130 = vmatpush1.xpose.msra.mxu0 0.0
        %1131 = vmatprep.subr.mxu0 0.0
        %1132 = vmatpush1.xpose.msra.mxu0 0.0
        %1133 = vmatprep.subr.mxu0 0.0
        %1134 = vmatpush1.xpose.msra.mxu0 0.0
        %1135 = vmatprep.subr.mxu0 0.0
        %1136 = vmatpush1.xpose.msra.mxu0 0.0
        %1137 = vmatprep.subr.mxu0 0.0
        %1138 = vmatpush1.xpose.msra.mxu0 0.0
        %1139 = vmatprep.subr.mxu0 0.0
        %1140 = vmatpush1.xpose.msra.mxu0 0.0
        %1141 = vmatprep.subr.mxu0 0.0
        %1142 = vmatpush1.xpose.msra.mxu0 0.0
        %1143 = vmatprep.subr.mxu0 0.0
        %1144 = vmatpush1.xpose.msra.mxu0 0.0
        %1145 = vmatprep.subr.mxu0 0.0
        %1146 = vmatpush1.xpose.msra.mxu0 0.0
        %1147 = vmatprep.subr.mxu0 0.0
        %1148 = vmatpush1.xpose.msra.mxu0 0.0
        %1149 = vmatprep.subr.mxu0 0.0
        %1150 = vmatpush1.xpose.msra.mxu0 0.0
        %1151 = vmatprep.subr.mxu0 0.0
        %1152 = vmatpush1.xpose.msra.mxu0 0.0
        %1153 = vmatprep.subr.mxu0 0.0
        %1154 = vmatpush1.xpose.msra.mxu0 0.0
        %1155 = vmatprep.subr.mxu0 0.0
        %1156 = vmatpush1.xpose.msra.mxu0 0.0
        %1157 = vmatprep.subr.mxu0 0.0
        %1158 = vmatpush1.xpose.msra.mxu0 0.0
        %1159 = vmatprep.subr.mxu0 0.0
        %1160 = vmatpush1.xpose.msra.mxu0 0.0
        %1161 = vmatprep.subr.mxu0 0.0
        %1162 = vmatpush1.xpose.msra.mxu0 0.0
        %1163 = vmatprep.subr.mxu0 0.0
        %1164 = vmatpush1.xpose.msra.mxu0 0.0
        %1165 = vmatprep.subr.mxu0 0.0
        %1166 = vmatpush1.xpose.msra.mxu0 0.0
        %1167 = vmatprep.mubr.f32.mxu0 0.0
        %1168 = vmatmul.mubr.f32.gmra.mrb[0].mxu0 %v1095
        %v1169 = vpop.f32.mrb[0].mxu0
        %v1170 = vadd.f32 0.0, %v1169
        %v1171 = vpop.f32.mrb[0].mxu0
        %1172 = vmatprep.mubr.f32.mxu0 0.0
        %1173 = vmatmul.mubr.f32.gmra.mrb[0].mxu0 %v1097
        %v1174 = vpop.f32.mrb[0].mxu0
        %v1175 = vadd.f32 0.0, %v1174
        %v1176 = vpop.f32.mrb[0].mxu0
        %1177 = vdwg.mxu0
        %v1178 = vmul.f32 %v1170, 0.25
        %v1179 = vmul.f32 %v1175, 0.25
        %v1180 = vadd.f32 %v1178, %v788
        %v1181 = vadd.f32 %v1179, %v789
        %v1182 = vsel %vm890, %v1180, -inf
        %1183 = vmax.xlane.f32.xlu0 %v1182
        %v1184 = vpop.xlane.xlu0 %1183
        %v1185 = vsel %vm890, %v1181, -inf
        %1186 = vmax.xlane.f32.xlu0 %v1185
        %v1187 = vpop.xlane.xlu0 %1186
        %v1188 = vsub.f32 %v1180, %v1184
        %v1189 = vsub.f32 %v1181, %v1187
        %v1190 = vmul.f32 %v1188, 1.442695
        %v1191 = vpow.pop %v1190
        %v1192 = vmul.f32 %v1189, 1.442695
        %v1193 = vpow.pop %v1192
        %v1194 = vsel %vm890, %v1191, 0.0
        %1195 = vadd.xlane.f32.xlu0 %v1194
        %v1196 = vpop.xlane.xlu0 %1195
        %v1197 = vsel %vm890, %v1193, 0.0
        %1198 = vadd.xlane.f32.xlu0 %v1197
        %v1199 = vpop.xlane.xlu0 %1198
        %v1200 = vrcp.pop %v1196
        %v1201 = vrcp.pop %v1199
        %v1202 = vmul.f32 %v1191, %v1200
        %v1203 = vmul.f32 %v1193, %v1201
        %1204 = vrot.lane.b32.xlu0 %v876, 48
        %v1205 = vpop.permute.xlu0 %1204
        %1206 = vrot.lane.b32.xlu0 %v881, 48
        %v1207 = vpop.permute.xlu0 %1206
        %v1211 = vsel %vm890, %v1202, 0
        %v1214 = vsel %vm890, %v1203, 0
        %1216 = vmatprep.subr.mxu0 0.0
        %1217 = vmatpush1.msra.mxu0 %v1205
        %1218 = vmatprep.subr.mxu0 0.0
        %1219 = vmatpush1.msra.mxu0 %v1207
        %1220 = vmatprep.subr.mxu0 0.0
        %1221 = vmatpush1.msra.mxu0 0.0
        %1222 = vmatprep.subr.mxu0 0.0
        %1223 = vmatpush1.msra.mxu0 0.0
        %1224 = vmatprep.subr.mxu0 0.0
        %1225 = vmatpush1.msra.mxu0 0.0
        %1226 = vmatprep.subr.mxu0 0.0
        %1227 = vmatpush1.msra.mxu0 0.0
        %1228 = vmatprep.subr.mxu0 0.0
        %1229 = vmatpush1.msra.mxu0 0.0
        %1230 = vmatprep.subr.mxu0 0.0
        %1231 = vmatpush1.msra.mxu0 0.0
        %1232 = vmatprep.subr.mxu0 0.0
        %1233 = vmatpush1.msra.mxu0 0.0
        %1234 = vmatprep.subr.mxu0 0.0
        %1235 = vmatpush1.msra.mxu0 0.0
        %1236 = vmatprep.subr.mxu0 0.0
        %1237 = vmatpush1.msra.mxu0 0.0
        %1238 = vmatprep.subr.mxu0 0.0
        %1239 = vmatpush1.msra.mxu0 0.0
        %1240 = vmatprep.subr.mxu0 0.0
        %1241 = vmatpush1.msra.mxu0 0.0
        %1242 = vmatprep.subr.mxu0 0.0
        %1243 = vmatpush1.msra.mxu0 0.0
        %1244 = vmatprep.subr.mxu0 0.0
        %1245 = vmatpush1.msra.mxu0 0.0
        %1246 = vmatprep.subr.mxu0 0.0
        %1247 = vmatpush1.msra.mxu0 0.0
        %1248 = vmatprep.subr.mxu0 0.0
        %1249 = vmatpush1.msra.mxu0 0.0
        %1250 = vmatprep.subr.mxu0 0.0
        %1251 = vmatpush1.msra.mxu0 0.0
        %1252 = vmatprep.subr.mxu0 0.0
        %1253 = vmatpush1.msra.mxu0 0.0
        %1254 = vmatprep.subr.mxu0 0.0
        %1255 = vmatpush1.msra.mxu0 0.0
        %1256 = vmatprep.subr.mxu0 0.0
        %1257 = vmatpush1.msra.mxu0 0.0
        %1258 = vmatprep.subr.mxu0 0.0
        %1259 = vmatpush1.msra.mxu0 0.0
        %1260 = vmatprep.subr.mxu0 0.0
        %1261 = vmatpush1.msra.mxu0 0.0
        %1262 = vmatprep.subr.mxu0 0.0
        %1263 = vmatpush1.msra.mxu0 0.0
        %1264 = vmatprep.subr.mxu0 0.0
        %1265 = vmatpush1.msra.mxu0 0.0
        %1266 = vmatprep.subr.mxu0 0.0
        %1267 = vmatpush1.msra.mxu0 0.0
        %1268 = vmatprep.subr.mxu0 0.0
        %1269 = vmatpush1.msra.mxu0 0.0
        %1270 = vmatprep.subr.mxu0 0.0
        %1271 = vmatpush1.msra.mxu0 0.0
        %1272 = vmatprep.subr.mxu0 0.0
        %1273 = vmatpush1.msra.mxu0 0.0
        %1274 = vmatprep.subr.mxu0 0.0
        %1275 = vmatpush1.msra.mxu0 0.0
        %1276 = vmatprep.subr.mxu0 0.0
        %1277 = vmatpush1.msra.mxu0 0.0
        %1278 = vmatprep.subr.mxu0 0.0
        %1279 = vmatpush1.msra.mxu0 0.0
        %1280 = vmatprep.mubr.f32.mxu0 0.0
        %1281 = vmatmul.mubr.f32.gmra.mrb[0].mxu0 %v1211
        %v1282 = vpop.f32.mrb[0].mxu0
        %v1283 = vadd.f32 0.0, %v1282
        %v1284 = vpop.f32.mrb[0].mxu0
        %1285 = vmatprep.mubr.f32.mxu0 0.0
        %1286 = vmatmul.mubr.f32.gmra.mrb[0].mxu0 %v1214
        %v1287 = vpop.f32.mrb[0].mxu0
        %v1288 = vadd.f32 0.0, %v1287
        %v1289 = vpop.f32.mrb[0].mxu0
        %1290 = vdwg.mxu0
        %1293 = vrot.lane.b32.xlu0 %v1283, 16
        %v1294 = vpop.permute.xlu0 %1293
        %1295 = vrot.lane.b32.xlu0 %v1288, 16
        %v1296 = vpop.permute.xlu0 %1295
        %v1299 = vsel %vm890, %v1079, %v1294
        %v1300 = vsel %vm890, %v1084, %v1296
        %v1301 = vld [vmem:[%s747] sm:$0xff]
        %v1302 = vld [vmem:[%s747 + $0x8] sm:$0xff]
        %v1303 = vld [vmem:[%s747 + $0x10] sm:$0xff]
        %v1304 = vld [vmem:[%s747 + $0x18] sm:$0xff]
        %v1305 = vld [vmem:[%s751] sm:$0x1]
        %v1307 = vlaneseq
        %v1308 = vshrl.u32 %v1307, 7
        %v1309 = vsub.s32 0, %v1308
        %v1310 = vrot.slane %v1305, %v1309
        %v1313 = vsel %vm802, %v1299, 0
        %v1316 = vsel %vm802, %v1300, 0
        %1318 = vmatprep.subr.mxu0 0.0
        %1319 = vmatpush1.msra.mxu0 %v1301
        %1320 = vmatprep.subr.mxu0 0.0
        %1321 = vmatpush1.msra.mxu0 %v1302
        %1322 = vmatprep.subr.mxu0 0.0
        %1323 = vmatpush1.msra.mxu0 %v1303
        %1324 = vmatprep.subr.mxu0 0.0
        %1325 = vmatpush1.msra.mxu0 %v1304
        %1326 = vmatprep.subr.mxu0 0.0
        %1327 = vmatpush1.msra.mxu0 0.0
        %1328 = vmatprep.subr.mxu0 0.0
        %1329 = vmatpush1.msra.mxu0 0.0
        %1330 = vmatprep.subr.mxu0 0.0
        %1331 = vmatpush1.msra.mxu0 0.0
        %1332 = vmatprep.subr.mxu0 0.0
        %1333 = vmatpush1.msra.mxu0 0.0
        %1334 = vmatprep.subr.mxu0 0.0
        %1335 = vmatpush1.msra.mxu0 0.0
        %1336 = vmatprep.subr.mxu0 0.0
        %1337 = vmatpush1.msra.mxu0 0.0
        %1338 = vmatprep.subr.mxu0 0.0
        %1339 = vmatpush1.msra.mxu0 0.0
        %1340 = vmatprep.subr.mxu0 0.0
        %1341 = vmatpush1.msra.mxu0 0.0
        %1342 = vmatprep.subr.mxu0 0.0
        %1343 = vmatpush1.msra.mxu0 0.0
        %1344 = vmatprep.subr.mxu0 0.0
        %1345 = vmatpush1.msra.mxu0 0.0
        %1346 = vmatprep.subr.mxu0 0.0
        %1347 = vmatpush1.msra.mxu0 0.0
        %1348 = vmatprep.subr.mxu0 0.0
        %1349 = vmatpush1.msra.mxu0 0.0
        %1350 = vmatprep.subr.mxu0 0.0
        %1351 = vmatpush1.msra.mxu0 0.0
        %1352 = vmatprep.subr.mxu0 0.0
        %1353 = vmatpush1.msra.mxu0 0.0
        %1354 = vmatprep.subr.mxu0 0.0
        %1355 = vmatpush1.msra.mxu0 0.0
        %1356 = vmatprep.subr.mxu0 0.0
        %1357 = vmatpush1.msra.mxu0 0.0
        %1358 = vmatprep.subr.mxu0 0.0
        %1359 = vmatpush1.msra.mxu0 0.0
        %1360 = vmatprep.subr.mxu0 0.0
        %1361 = vmatpush1.msra.mxu0 0.0
        %1362 = vmatprep.subr.mxu0 0.0
        %1363 = vmatpush1.msra.mxu0 0.0
        %1364 = vmatprep.subr.mxu0 0.0
        %1365 = vmatpush1.msra.mxu0 0.0
        %1366 = vmatprep.subr.mxu0 0.0
        %1367 = vmatpush1.msra.mxu0 0.0
        %1368 = vmatprep.subr.mxu0 0.0
        %1369 = vmatpush1.msra.mxu0 0.0
        %1370 = vmatprep.subr.mxu0 0.0
        %1371 = vmatpush1.msra.mxu0 0.0
        %1372 = vmatprep.subr.mxu0 0.0
        %1373 = vmatpush1.msra.mxu0 0.0
        %1374 = vmatprep.subr.mxu0 0.0
        %1375 = vmatpush1.msra.mxu0 0.0
        %1376 = vmatprep.subr.mxu0 0.0
        %1377 = vmatpush1.msra.mxu0 0.0
        %1378 = vmatprep.subr.mxu0 0.0
        %1379 = vmatpush1.msra.mxu0 0.0
        %1380 = vmatprep.subr.mxu0 0.0
        %1381 = vmatpush1.msra.mxu0 0.0
        %1382 = vmatprep.mubr.f32.mxu0 0.0
        %1383 = vmatmul.mubr.f32.gmra.mrb[0].mxu0 %v1313
        %v1384 = vpop.f32.mrb[0].mxu0
        %v1385 = vadd.f32 %v1310, %v1384
        %v1386 = vpop.f32.mrb[0].mxu0
        %1387 = vmatprep.mubr.f32.mxu0 0.0
        %1388 = vmatmul.mubr.f32.gmra.mrb[0].mxu0 %v1316
        %v1389 = vpop.f32.mrb[0].mxu0
        %v1390 = vadd.f32 %v1310, %v1389
        %v1391 = vpop.f32.mrb[0].mxu0
        %1392 = vdwg.mxu0
        %v1393 = vadd.f32 %v786, %v1385
        %v1394 = vadd.f32 %v787, %v1390
        %v1395 = vld [vmem:[%s755] sm:$0x1]
        %v1396 = vld [vmem:[%s759] sm:$0x1]
        %v1397 = vsel %vm802, %v1393, 0.0
        %1398 = vadd.xlane.f32.xlu0 %v1397
        %v1399 = vpop.xlane.xlu0 %1398
        %v1400 = vsel %vm802, %v1394, 0.0
        %1401 = vadd.xlane.f32.xlu0 %v1400
        %v1402 = vpop.xlane.xlu0 %1401
        %v1403 = vrcp.pop 32.0
        %v1404 = vmul.f32 %v1399, %v1403
        %v1405 = vmul.f32 %v1402, %v1403
        %v1406 = vsub.f32 %v1393, %v1404
        %v1407 = vsub.f32 %v1394, %v1405
        %v1408 = vmul.f32 %v1406, %v1406
        %v1409 = vmul.f32 %v1407, %v1407
        %v1410 = vsel %vm802, %v1408, 0.0
        %1411 = vadd.xlane.f32.xlu0 %v1410
        %v1412 = vpop.xlane.xlu0 %1411
        %v1413 = vsel %vm802, %v1409, 0.0
        %1414 = vadd.xlane.f32.xlu0 %v1413
        %v1415 = vpop.xlane.xlu0 %1414
        %v1416 = vmul.f32 %v1412, %v1403
        %v1417 = vmul.f32 %v1415, %v1403
        %v1418 = vadd.f32 %v1416, 1e-12
        %v1419 = vadd.f32 %v1417, 1e-12
        %v1420 = vrsqrt.pop %v1418
        %v1421 = vrsqrt.pop %v1419
        %v1422 = vmul.f32 %v1406, %v1420
        %v1423 = vmul.f32 %v1407, %v1421
        %v1425 = vlaneseq
        %v1426 = vshrl.u32 %v1425, 7
        %v1427 = vsub.s32 0, %v1426
        %v1428 = vrot.slane %v1395, %v1427
        %v1430 = vmul.f32 %v1422, %v1428
        %v1431 = vmul.f32 %v1423, %v1428
        %v1433 = vlaneseq
        %v1434 = vshrl.u32 %v1433, 7
        %v1435 = vsub.s32 0, %v1434
        %v1436 = vrot.slane %v1396, %v1435
        %v1438 = vadd.f32 %v1430, %v1436
        %v1439 = vadd.f32 %v1431, %v1436
        %v1440 = vld [vmem:[%s764] sm:$0xff]
        %v1441 = vld [vmem:[%s764 + $0x8] sm:$0xff]
        %v1442 = vld [vmem:[%s764 + $0x10] sm:$0xff]
        %v1443 = vld [vmem:[%s764 + $0x18] sm:$0xff]
        %v1444 = vld [vmem:[%s768] sm:$0x1]
        %v1446 = vlaneseq
        %v1447 = vshrl.u32 %v1446, 7
        %v1448 = vsub.s32 0, %v1447
        %v1449 = vrot.slane %v1444, %v1448
        %v1452 = vsel %vm802, %v1438, 0
        %v1455 = vsel %vm802, %v1439, 0
        %1457 = vmatprep.subr.mxu0 0.0
        %1458 = vmatpush1.msra.mxu0 %v1440
        %1459 = vmatprep.subr.mxu0 0.0
        %1460 = vmatpush1.msra.mxu0 %v1441
        %1461 = vmatprep.subr.mxu0 0.0
        %1462 = vmatpush1.msra.mxu0 %v1442
        %1463 = vmatprep.subr.mxu0 0.0
        %1464 = vmatpush1.msra.mxu0 %v1443
        %1465 = vmatprep.subr.mxu0 0.0
        %1466 = vmatpush1.msra.mxu0 0.0
        %1467 = vmatprep.subr.mxu0 0.0
        %1468 = vmatpush1.msra.mxu0 0.0
        %1469 = vmatprep.subr.mxu0 0.0
        %1470 = vmatpush1.msra.mxu0 0.0
        %1471 = vmatprep.subr.mxu0 0.0
        %1472 = vmatpush1.msra.mxu0 0.0
        %1473 = vmatprep.subr.mxu0 0.0
        %1474 = vmatpush1.msra.mxu0 0.0
        %1475 = vmatprep.subr.mxu0 0.0
        %1476 = vmatpush1.msra.mxu0 0.0
        %1477 = vmatprep.subr.mxu0 0.0
        %1478 = vmatpush1.msra.mxu0 0.0
        %1479 = vmatprep.subr.mxu0 0.0
        %1480 = vmatpush1.msra.mxu0 0.0
        %1481 = vmatprep.subr.mxu0 0.0
        %1482 = vmatpush1.msra.mxu0 0.0
        %1483 = vmatprep.subr.mxu0 0.0
        %1484 = vmatpush1.msra.mxu0 0.0
        %1485 = vmatprep.subr.mxu0 0.0
        %1486 = vmatpush1.msra.mxu0 0.0
        %1487 = vmatprep.subr.mxu0 0.0
        %1488 = vmatpush1.msra.mxu0 0.0
        %1489 = vmatprep.subr.mxu0 0.0
        %1490 = vmatpush1.msra.mxu0 0.0
        %1491 = vmatprep.subr.mxu0 0.0
        %1492 = vmatpush1.msra.mxu0 0.0
        %1493 = vmatprep.subr.mxu0 0.0
        %1494 = vmatpush1.msra.mxu0 0.0
        %1495 = vmatprep.subr.mxu0 0.0
        %1496 = vmatpush1.msra.mxu0 0.0
        %1497 = vmatprep.subr.mxu0 0.0
        %1498 = vmatpush1.msra.mxu0 0.0
        %1499 = vmatprep.subr.mxu0 0.0
        %1500 = vmatpush1.msra.mxu0 0.0
        %1501 = vmatprep.subr.mxu0 0.0
        %1502 = vmatpush1.msra.mxu0 0.0
        %1503 = vmatprep.subr.mxu0 0.0
        %1504 = vmatpush1.msra.mxu0 0.0
        %1505 = vmatprep.subr.mxu0 0.0
        %1506 = vmatpush1.msra.mxu0 0.0
        %1507 = vmatprep.subr.mxu0 0.0
        %1508 = vmatpush1.msra.mxu0 0.0
        %1509 = vmatprep.subr.mxu0 0.0
        %1510 = vmatpush1.msra.mxu0 0.0
        %1511 = vmatprep.subr.mxu0 0.0
        %1512 = vmatpush1.msra.mxu0 0.0
        %1513 = vmatprep.subr.mxu0 0.0
        %1514 = vmatpush1.msra.mxu0 0.0
        %1515 = vmatprep.subr.mxu0 0.0
        %1516 = vmatpush1.msra.mxu0 0.0
        %1517 = vmatprep.subr.mxu0 0.0
        %1518 = vmatpush1.msra.mxu0 0.0
        %1519 = vmatprep.subr.mxu0 0.0
        %1520 = vmatpush1.msra.mxu0 0.0
        %1521 = vmatprep.mubr.f32.mxu0 0.0
        %1522 = vmatmul.mubr.f32.gmra.mrb[0].mxu0 %v1452
        %v1523 = vpop.f32.mrb[0].mxu0
        %v1524 = vadd.f32 %v1449, %v1523
        %v1525 = vpop.f32.mrb[0].mxu0
        %1526 = vmatprep.mubr.f32.mxu0 0.0
        %1527 = vmatmul.mubr.f32.gmra.mrb[0].mxu0 %v1455
        %v1528 = vpop.f32.mrb[0].mxu0
        %v1529 = vadd.f32 %v1449, %v1528
        %v1530 = vpop.f32.mrb[0].mxu0
        %1531 = vdwg.mxu0
        %v1532 = vmul.f32 %v1524, 0.5
        %v1533 = vmul.f32 %v1529, 0.5
        %v1534 = vmul.f32 %v1524, 0.70710677
        %v1535 = vmul.f32 %v1529, 0.70710677
        %vm1536 = vcmp.ge.f32.partialorder %v1534, 0.0
        %vm1537 = vcmp.ge.f32.partialorder %v1535, 0.0
        %v1538 = vsel %vm1536, 1.0, -1.0
        %v1539 = vsel %vm1537, 1.0, -1.0
        %v1540 = vand.u32 2147483647, %v1534
        %v1541 = vand.u32 2147483647, %v1535
        %v1542 = vmul.f32 %v1540, 0.3275911
        %v1543 = vmul.f32 %v1541, 0.3275911
        %v1544 = vadd.f32 %v1542, 1.0
        %v1545 = vadd.f32 %v1543, 1.0
        %v1546 = vrcp.pop %v1544
        %v1547 = vmul.f32 1.0, %v1546
        %v1548 = vrcp.pop %v1545
        %v1549 = vmul.f32 1.0, %v1548
        %v1550 = vmul.f32 %v1547, 1.0614054
        %v1551 = vmul.f32 %v1549, 1.0614054
        %v1552 = vadd.f32 %v1550, -1.4531521
        %v1553 = vadd.f32 %v1551, -1.4531521
        %v1554 = vmul.f32 %v1547, %v1552
        %v1555 = vmul.f32 %v1549, %v1553
        %v1556 = vadd.f32 %v1554, 1.4214138
        %v1557 = vadd.f32 %v1555, 1.4214138
        %v1558 = vmul.f32 %v1547, %v1556
        %v1559 = vmul.f32 %v1549, %v1557
        %v1560 = vadd.f32 %v1558, -0.28449672
        %v1561 = vadd.f32 %v1559, -0.28449672
        %v1562 = vmul.f32 %v1547, %v1560
        %v1563 = vmul.f32 %v1549, %v1561
        %v1564 = vadd.f32 %v1562, 0.2548296
        %v1565 = vadd.f32 %v1563, 0.2548296
        %v1566 = vmul.f32 %v1547, %v1564
        %v1567 = vmul.f32 %v1549, %v1565
        %v1568 = vsub.f32 0.0, %v1540
        %v1569 = vsub.f32 0.0, %v1541
        %v1570 = vmul.f32 %v1568, %v1540
        %v1571 = vmul.f32 %v1569, %v1541
        %v1572 = vmul.f32 %v1570, 1.442695
        %v1573 = vpow.pop %v1572
        %v1574 = vmul.f32 %v1571, 1.442695
        %v1575 = vpow.pop %v1574
        %v1576 = vmul.f32 %v1566, %v1573
        %v1577 = vmul.f32 %v1567, %v1575
        %v1578 = vsub.f32 1.0, %v1576
        %v1579 = vsub.f32 1.0, %v1577
        %v1580 = vmul.f32 %v1538, %v1578
        %v1581 = vmul.f32 %v1539, %v1579
        %v1582 = vadd.f32 %v1580, 1.0
        %v1583 = vadd.f32 %v1581, 1.0
        %v1584 = vmul.f32 %v1532, %v1582
        %v1585 = vmul.f32 %v1533, %v1583
        %v1586 = vld [vmem:[%s773] sm:$0xff]
        %v1587 = vld [vmem:[%s773 + $0x8] sm:$0xff]
        %v1588 = vld [vmem:[%s773 + $0x10] sm:$0xff]
        %v1589 = vld [vmem:[%s773 + $0x18] sm:$0xff]
        %v1590 = vld [vmem:[%s773 + $0x20] sm:$0xff]
        %v1591 = vld [vmem:[%s773 + $0x28] sm:$0xff]
        %v1592 = vld [vmem:[%s773 + $0x30] sm:$0xff]
        %v1593 = vld [vmem:[%s773 + $0x38] sm:$0xff]
        %v1594 = vld [vmem:[%s777] sm:$0x1]
        %v1596 = vlaneseq
        %v1597 = vshrl.u32 %v1596, 7
        %v1598 = vsub.s32 0, %v1597
        %v1599 = vrot.slane %v1594, %v1598
        %vm1601 = vcmask 523264
        %v1603 = vsel %vm1601, %v1584, 0
        %v1606 = vsel %vm1601, %v1585, 0
        %1608 = vmatprep.subr.mxu0 0.0
        %1609 = vmatpush1.msra.mxu0 %v1586
        %1610 = vmatprep.subr.mxu0 0.0
        %1611 = vmatpush1.msra.mxu0 %v1587
        %1612 = vmatprep.subr.mxu0 0.0
        %1613 = vmatpush1.msra.mxu0 %v1588
        %1614 = vmatprep.subr.mxu0 0.0
        %1615 = vmatpush1.msra.mxu0 %v1589
        %1616 = vmatprep.subr.mxu0 0.0
        %1617 = vmatpush1.msra.mxu0 %v1590
        %1618 = vmatprep.subr.mxu0 0.0
        %1619 = vmatpush1.msra.mxu0 %v1591
        %1620 = vmatprep.subr.mxu0 0.0
        %1621 = vmatpush1.msra.mxu0 %v1592
        %1622 = vmatprep.subr.mxu0 0.0
        %1623 = vmatpush1.msra.mxu0 %v1593
        %1624 = vmatprep.subr.mxu0 0.0
        %1625 = vmatpush1.msra.mxu0 0.0
        %1626 = vmatprep.subr.mxu0 0.0
        %1627 = vmatpush1.msra.mxu0 0.0
        %1628 = vmatprep.subr.mxu0 0.0
        %1629 = vmatpush1.msra.mxu0 0.0
        %1630 = vmatprep.subr.mxu0 0.0
        %1631 = vmatpush1.msra.mxu0 0.0
        %1632 = vmatprep.subr.mxu0 0.0
        %1633 = vmatpush1.msra.mxu0 0.0
        %1634 = vmatprep.subr.mxu0 0.0
        %1635 = vmatpush1.msra.mxu0 0.0
        %1636 = vmatprep.subr.mxu0 0.0
        %1637 = vmatpush1.msra.mxu0 0.0
        %1638 = vmatprep.subr.mxu0 0.0
        %1639 = vmatpush1.msra.mxu0 0.0
        %1640 = vmatprep.subr.mxu0 0.0
        %1641 = vmatpush1.msra.mxu0 0.0
        %1642 = vmatprep.subr.mxu0 0.0
        %1643 = vmatpush1.msra.mxu0 0.0
        %1644 = vmatprep.subr.mxu0 0.0
        %1645 = vmatpush1.msra.mxu0 0.0
        %1646 = vmatprep.subr.mxu0 0.0
        %1647 = vmatpush1.msra.mxu0 0.0
        %1648 = vmatprep.subr.mxu0 0.0
        %1649 = vmatpush1.msra.mxu0 0.0
        %1650 = vmatprep.subr.mxu0 0.0
        %1651 = vmatpush1.msra.mxu0 0.0
        %1652 = vmatprep.subr.mxu0 0.0
        %1653 = vmatpush1.msra.mxu0 0.0
        %1654 = vmatprep.subr.mxu0 0.0
        %1655 = vmatpush1.msra.mxu0 0.0
        %1656 = vmatprep.subr.mxu0 0.0
        %1657 = vmatpush1.msra.mxu0 0.0
        %1658 = vmatprep.subr.mxu0 0.0
        %1659 = vmatpush1.msra.mxu0 0.0
        %1660 = vmatprep.subr.mxu0 0.0
        %1661 = vmatpush1.msra.mxu0 0.0
        %1662 = vmatprep.subr.mxu0 0.0
        %1663 = vmatpush1.msra.mxu0 0.0
        %1664 = vmatprep.subr.mxu0 0.0
        %1665 = vmatpush1.msra.mxu0 0.0
        %1666 = vmatprep.subr.mxu0 0.0
        %1667 = vmatpush1.msra.mxu0 0.0
        %1668 = vmatprep.subr.mxu0 0.0
        %1669 = vmatpush1.msra.mxu0 0.0
        %1670 = vmatprep.subr.mxu0 0.0
        %1671 = vmatpush1.msra.mxu0 0.0
        %1672 = vmatprep.mubr.f32.mxu0 0.0
        %1673 = vmatmul.mubr.f32.gmra.mrb[0].mxu0 %v1603
        %v1674 = vpop.f32.mrb[0].mxu0
        %v1675 = vadd.f32 %v1599, %v1674
        %v1676 = vpop.f32.mrb[0].mxu0
        %1677 = vmatprep.mubr.f32.mxu0 0.0
        %1678 = vmatmul.mubr.f32.gmra.mrb[0].mxu0 %v1606
        %v1679 = vpop.f32.mrb[0].mxu0
        %v1680 = vadd.f32 %v1599, %v1679
        %v1681 = vpop.f32.mrb[0].mxu0
        %1682 = vdwg.mxu0
        %v1683 = vadd.f32 %v1438, %v1675
        %v1684 = vadd.f32 %v1439, %v1680
        %v1685 = vld [vmem:[%s781] sm:$0x1]
        %v1686 = vld [vmem:[%s785] sm:$0x1]
        %v1687 = vsel %vm802, %v1683, 0.0
        %1688 = vadd.xlane.f32.xlu0 %v1687
        %v1689 = vpop.xlane.xlu0 %1688
        %v1690 = vsel %vm802, %v1684, 0.0
        %1691 = vadd.xlane.f32.xlu0 %v1690
        %v1692 = vpop.xlane.xlu0 %1691
        %v1693 = vmul.f32 %v1689, %v1403
        %v1694 = vmul.f32 %v1692, %v1403
        %v1695 = vsub.f32 %v1683, %v1693
        %v1696 = vsub.f32 %v1684, %v1694
        %v1697 = vmul.f32 %v1695, %v1695
        %v1698 = vmul.f32 %v1696, %v1696
        %v1699 = vsel %vm802, %v1697, 0.0
        %1700 = vadd.xlane.f32.xlu0 %v1699
        %v1701 = vpop.xlane.xlu0 %1700
        %v1702 = vsel %vm802, %v1698, 0.0
        %1703 = vadd.xlane.f32.xlu0 %v1702
        %v1704 = vpop.xlane.xlu0 %1703
        %v1705 = vmul.f32 %v1701, %v1403
        %v1706 = vmul.f32 %v1704, %v1403
        %v1707 = vadd.f32 %v1705, 1e-12
        %v1708 = vadd.f32 %v1706, 1e-12
        %v1709 = vrsqrt.pop %v1707
        %v1710 = vrsqrt.pop %v1708
        %v1711 = vmul.f32 %v1695, %v1709
        %v1712 = vmul.f32 %v1696, %v1710
        %v1714 = vlaneseq
        %v1715 = vshrl.u32 %v1714, 7
        %v1716 = vsub.s32 0, %v1715
        %v1717 = vrot.slane %v1685, %v1716
        %v1719 = vmul.f32 %v1711, %v1717
        %v1720 = vmul.f32 %v1712, %v1717
        %v1722 = vlaneseq
        %v1723 = vshrl.u32 %v1722, 7
        %v1724 = vsub.s32 0, %v1723
        %v1725 = vrot.slane %v1686, %v1724
        %v1727 = vadd.f32 %v1719, %v1725
        %v1728 = vadd.f32 %v1720, %v1725
        %s1729 = scalar_lea.vmem %s738, 32
        %v1730 = vld [vmem:[%s1729] sm:$0xff]
        %v1731 = vld [vmem:[%s1729 + $0x8] sm:$0xff]
        %v1732 = vld [vmem:[%s1729 + $0x10] sm:$0xff]
        %v1733 = vld [vmem:[%s1729 + $0x18] sm:$0xff]
        %s1734 = scalar_lea.vmem %s742, 1
        %v1735 = vld [vmem:[%s1734] sm:$0x1]
        %v1737 = vlaneseq
        %v1738 = vshrl.u32 %v1737, 7
        %v1739 = vsub.s32 0, %v1738
        %v1740 = vrot.slane %v1735, %v1739
        %v1743 = vsel %vm802, %v1727, 0
        %v1746 = vsel %vm802, %v1728, 0
        %1748 = vmatprep.subr.mxu0 0.0
        %1749 = vmatpush1.msra.mxu0 %v1730
        %1750 = vmatprep.subr.mxu0 0.0
        %1751 = vmatpush1.msra.mxu0 %v1731
        %1752 = vmatprep.subr.mxu0 0.0
        %1753 = vmatpush1.msra.mxu0 %v1732
        %1754 = vmatprep.subr.mxu0 0.0
        %1755 = vmatpush1.msra.mxu0 %v1733
        %1756 = vmatprep.subr.mxu0 0.0
        %1757 = vmatpush1.msra.mxu0 0.0
        %1758 = vmatprep.subr.mxu0 0.0
        %1759 = vmatpush1.msra.mxu0 0.0
        %1760 = vmatprep.subr.mxu0 0.0
        %1761 = vmatpush1.msra.mxu0 0.0
        %1762 = vmatprep.subr.mxu0 0.0
        %1763 = vmatpush1.msra.mxu0 0.0
        %1764 = vmatprep.subr.mxu0 0.0
        %1765 = vmatpush1.msra.mxu0 0.0
        %1766 = vmatprep.subr.mxu0 0.0
        %1767 = vmatpush1.msra.mxu0 0.0
        %1768 = vmatprep.subr.mxu0 0.0
        %1769 = vmatpush1.msra.mxu0 0.0
        %1770 = vmatprep.subr.mxu0 0.0
        %1771 = vmatpush1.msra.mxu0 0.0
        %1772 = vmatprep.subr.mxu0 0.0
        %1773 = vmatpush1.msra.mxu0 0.0
        %1774 = vmatprep.subr.mxu0 0.0
        %1775 = vmatpush1.msra.mxu0 0.0
        %1776 = vmatprep.subr.mxu0 0.0
        %1777 = vmatpush1.msra.mxu0 0.0
        %1778 = vmatprep.subr.mxu0 0.0
        %1779 = vmatpush1.msra.mxu0 0.0
        %1780 = vmatprep.subr.mxu0 0.0
        %1781 = vmatpush1.msra.mxu0 0.0
        %1782 = vmatprep.subr.mxu0 0.0
        %1783 = vmatpush1.msra.mxu0 0.0
        %1784 = vmatprep.subr.mxu0 0.0
        %1785 = vmatpush1.msra.mxu0 0.0
        %1786 = vmatprep.subr.mxu0 0.0
        %1787 = vmatpush1.msra.mxu0 0.0
        %1788 = vmatprep.subr.mxu0 0.0
        %1789 = vmatpush1.msra.mxu0 0.0
        %1790 = vmatprep.subr.mxu0 0.0
        %1791 = vmatpush1.msra.mxu0 0.0
        %1792 = vmatprep.subr.mxu0 0.0
        %1793 = vmatpush1.msra.mxu0 0.0
        %1794 = vmatprep.subr.mxu0 0.0
        %1795 = vmatpush1.msra.mxu0 0.0
        %1796 = vmatprep.subr.mxu0 0.0
        %1797 = vmatpush1.msra.mxu0 0.0
        %1798 = vmatprep.subr.mxu0 0.0
        %1799 = vmatpush1.msra.mxu0 0.0
        %1800 = vmatprep.subr.mxu0 0.0
        %1801 = vmatpush1.msra.mxu0 0.0
        %1802 = vmatprep.subr.mxu0 0.0
        %1803 = vmatpush1.msra.mxu0 0.0
        %1804 = vmatprep.subr.mxu0 0.0
        %1805 = vmatpush1.msra.mxu0 0.0
        %1806 = vmatprep.subr.mxu0 0.0
        %1807 = vmatpush1.msra.mxu0 0.0
        %1808 = vmatprep.subr.mxu0 0.0
        %1809 = vmatpush1.msra.mxu0 0.0
        %1810 = vmatprep.subr.mxu0 0.0
        %1811 = vmatpush1.msra.mxu0 0.0
        %1812 = vmatprep.mubr.f32.mxu0 0.0
        %1813 = vmatmul.mubr.f32.gmra.mrb[0].mxu0 %v1743
        %v1814 = vpop.f32.mrb[0].mxu0
        %v1815 = vadd.f32 %v1740, %v1814
        %v1816 = vpop.f32.mrb[0].mxu0
        %1817 = vmatprep.mubr.f32.mxu0 0.0
        %1818 = vmatmul.mubr.f32.gmra.mrb[0].mxu0 %v1746
        %v1819 = vpop.f32.mrb[0].mxu0
        %v1820 = vadd.f32 %v1740, %v1819
        %v1821 = vpop.f32.mrb[0].mxu0
        %1822 = vdwg.mxu0
        %1825 = vrot.lane.b32.xlu0 %v1815, 96
        %v1826 = vpop.permute.xlu0 %1825
        %1827 = vrot.lane.b32.xlu0 %v1820, 96
        %v1828 = vpop.permute.xlu0 %1827
        %v1829 = vsel %vm890, %v1815, 0
        %v1831 = vsel %vm890, %v1820, 0
        %v1833 = vsel %vm890, %v1826, 0
        %v1835 = vsel %vm890, %v1828, 0
        %1837 = vmatprep.subr.mxu0 0.0
        %1838 = vmatpush1.xpose.msra.mxu0 %v1833
        %1839 = vmatprep.subr.mxu0 0.0
        %1840 = vmatpush1.xpose.msra.mxu0 %v1835
        %1841 = vmatprep.subr.mxu0 0.0
        %1842 = vmatpush1.xpose.msra.mxu0 0.0
        %1843 = vmatprep.subr.mxu0 0.0
        %1844 = vmatpush1.xpose.msra.mxu0 0.0
        %1845 = vmatprep.subr.mxu0 0.0
        %1846 = vmatpush1.xpose.msra.mxu0 0.0
        %1847 = vmatprep.subr.mxu0 0.0
        %1848 = vmatpush1.xpose.msra.mxu0 0.0
        %1849 = vmatprep.subr.mxu0 0.0
        %1850 = vmatpush1.xpose.msra.mxu0 0.0
        %1851 = vmatprep.subr.mxu0 0.0
        %1852 = vmatpush1.xpose.msra.mxu0 0.0
        %1853 = vmatprep.subr.mxu0 0.0
        %1854 = vmatpush1.xpose.msra.mxu0 0.0
        %1855 = vmatprep.subr.mxu0 0.0
        %1856 = vmatpush1.xpose.msra.mxu0 0.0
        %1857 = vmatprep.subr.mxu0 0.0
        %1858 = vmatpush1.xpose.msra.mxu0 0.0
        %1859 = vmatprep.subr.mxu0 0.0
        %1860 = vmatpush1.xpose.msra.mxu0 0.0
        %1861 = vmatprep.subr.mxu0 0.0
        %1862 = vmatpush1.xpose.msra.mxu0 0.0
        %1863 = vmatprep.subr.mxu0 0.0
        %1864 = vmatpush1.xpose.msra.mxu0 0.0
        %1865 = vmatprep.subr.mxu0 0.0
        %1866 = vmatpush1.xpose.msra.mxu0 0.0
        %1867 = vmatprep.subr.mxu0 0.0
        %1868 = vmatpush1.xpose.msra.mxu0 0.0
        %1869 = vmatprep.subr.mxu0 0.0
        %1870 = vmatpush1.xpose.msra.mxu0 0.0
        %1871 = vmatprep.subr.mxu0 0.0
        %1872 = vmatpush1.xpose.msra.mxu0 0.0
        %1873 = vmatprep.subr.mxu0 0.0
        %1874 = vmatpush1.xpose.msra.mxu0 0.0
        %1875 = vmatprep.subr.mxu0 0.0
        %1876 = vmatpush1.xpose.msra.mxu0 0.0
        %1877 = vmatprep.subr.mxu0 0.0
        %1878 = vmatpush1.xpose.msra.mxu0 0.0
        %1879 = vmatprep.subr.mxu0 0.0
        %1880 = vmatpush1.xpose.msra.mxu0 0.0
        %1881 = vmatprep.subr.mxu0 0.0
        %1882 = vmatpush1.xpose.msra.mxu0 0.0
        %1883 = vmatprep.subr.mxu0 0.0
        %1884 = vmatpush1.xpose.msra.mxu0 0.0
        %1885 = vmatprep.subr.mxu0 0.0
        %1886 = vmatpush1.xpose.msra.mxu0 0.0
        %1887 = vmatprep.subr.mxu0 0.0
        %1888 = vmatpush1.xpose.msra.mxu0 0.0
        %1889 = vmatprep.subr.mxu0 0.0
        %1890 = vmatpush1.xpose.msra.mxu0 0.0
        %1891 = vmatprep.subr.mxu0 0.0
        %1892 = vmatpush1.xpose.msra.mxu0 0.0
        %1893 = vmatprep.subr.mxu0 0.0
        %1894 = vmatpush1.xpose.msra.mxu0 0.0
        %1895 = vmatprep.subr.mxu0 0.0
        %1896 = vmatpush1.xpose.msra.mxu0 0.0
        %1897 = vmatprep.subr.mxu0 0.0
        %1898 = vmatpush1.xpose.msra.mxu0 0.0
        %1899 = vmatprep.subr.mxu0 0.0
        %1900 = vmatpush1.xpose.msra.mxu0 0.0
        %1901 = vmatprep.mubr.f32.mxu0 0.0
        %1902 = vmatmul.mubr.f32.gmra.mrb[0].mxu0 %v1829
        %v1903 = vpop.f32.mrb[0].mxu0
        %v1904 = vadd.f32 0.0, %v1903
        %v1905 = vpop.f32.mrb[0].mxu0
        %1906 = vmatprep.mubr.f32.mxu0 0.0
        %1907 = vmatmul.mubr.f32.gmra.mrb[0].mxu0 %v1831
        %v1908 = vpop.f32.mrb[0].mxu0
        %v1909 = vadd.f32 0.0, %v1908
        %v1910 = vpop.f32.mrb[0].mxu0
        %1911 = vdwg.mxu0
        %v1912 = vmul.f32 %v1904, 0.25
        %v1913 = vmul.f32 %v1909, 0.25
        %v1914 = vadd.f32 %v1912, %v788
        %v1915 = vadd.f32 %v1913, %v789
        %v1916 = vsel %vm890, %v1914, -inf
        %1917 = vmax.xlane.f32.xlu0 %v1916
        %v1918 = vpop.xlane.xlu0 %1917
        %v1919 = vsel %vm890, %v1915, -inf
        %1920 = vmax.xlane.f32.xlu0 %v1919
        %v1921 = vpop.xlane.xlu0 %1920
        %v1922 = vsub.f32 %v1914, %v1918
        %v1923 = vsub.f32 %v1915, %v1921
        %v1924 = vmul.f32 %v1922, 1.442695
        %v1925 = vpow.pop %v1924
        %v1926 = vmul.f32 %v1923, 1.442695
        %v1927 = vpow.pop %v1926
        %v1928 = vsel %vm890, %v1925, 0.0
        %1929 = vadd.xlane.f32.xlu0 %v1928
        %v1930 = vpop.xlane.xlu0 %1929
        %v1931 = vsel %vm890, %v1927, 0.0
        %1932 = vadd.xlane.f32.xlu0 %v1931
        %v1933 = vpop.xlane.xlu0 %1932
        %v1934 = vrcp.pop %v1930
        %v1935 = vrcp.pop %v1933
        %v1936 = vmul.f32 %v1925, %v1934
        %v1937 = vmul.f32 %v1927, %v1935
        %1938 = vrot.lane.b32.xlu0 %v1815, 64
        %v1939 = vpop.permute.xlu0 %1938
        %1940 = vrot.lane.b32.xlu0 %v1820, 64
        %v1941 = vpop.permute.xlu0 %1940
        %v1945 = vsel %vm890, %v1936, 0
        %v1948 = vsel %vm890, %v1937, 0
        %1950 = vmatprep.subr.mxu0 0.0
        %1951 = vmatpush1.msra.mxu0 %v1939
        %1952 = vmatprep.subr.mxu0 0.0
        %1953 = vmatpush1.msra.mxu0 %v1941
        %1954 = vmatprep.subr.mxu0 0.0
        %1955 = vmatpush1.msra.mxu0 0.0
        %1956 = vmatprep.subr.mxu0 0.0
        %1957 = vmatpush1.msra.mxu0 0.0
        %1958 = vmatprep.subr.mxu0 0.0
        %1959 = vmatpush1.msra.mxu0 0.0
        %1960 = vmatprep.subr.mxu0 0.0
        %1961 = vmatpush1.msra.mxu0 0.0
        %1962 = vmatprep.subr.mxu0 0.0
        %1963 = vmatpush1.msra.mxu0 0.0
        %1964 = vmatprep.subr.mxu0 0.0
        %1965 = vmatpush1.msra.mxu0 0.0
        %1966 = vmatprep.subr.mxu0 0.0
        %1967 = vmatpush1.msra.mxu0 0.0
        %1968 = vmatprep.subr.mxu0 0.0
        %1969 = vmatpush1.msra.mxu0 0.0
        %1970 = vmatprep.subr.mxu0 0.0
        %1971 = vmatpush1.msra.mxu0 0.0
        %1972 = vmatprep.subr.mxu0 0.0
        %1973 = vmatpush1.msra.mxu0 0.0
        %1974 = vmatprep.subr.mxu0 0.0
        %1975 = vmatpush1.msra.mxu0 0.0
        %1976 = vmatprep.subr.mxu0 0.0
        %1977 = vmatpush1.msra.mxu0 0.0
        %1978 = vmatprep.subr.mxu0 0.0
        %1979 = vmatpush1.msra.mxu0 0.0
        %1980 = vmatprep.subr.mxu0 0.0
        %1981 = vmatpush1.msra.mxu0 0.0
        %1982 = vmatprep.subr.mxu0 0.0
        %1983 = vmatpush1.msra.mxu0 0.0
        %1984 = vmatprep.subr.mxu0 0.0
        %1985 = vmatpush1.msra.mxu0 0.0
        %1986 = vmatprep.subr.mxu0 0.0
        %1987 = vmatpush1.msra.mxu0 0.0
        %1988 = vmatprep.subr.mxu0 0.0
        %1989 = vmatpush1.msra.mxu0 0.0
        %1990 = vmatprep.subr.mxu0 0.0
        %1991 = vmatpush1.msra.mxu0 0.0
        %1992 = vmatprep.subr.mxu0 0.0
        %1993 = vmatpush1.msra.mxu0 0.0
        %1994 = vmatprep.subr.mxu0 0.0
        %1995 = vmatpush1.msra.mxu0 0.0
        %1996 = vmatprep.subr.mxu0 0.0
        %1997 = vmatpush1.msra.mxu0 0.0
        %1998 = vmatprep.subr.mxu0 0.0
        %1999 = vmatpush1.msra.mxu0 0.0
        %2000 = vmatprep.subr.mxu0 0.0
        %2001 = vmatpush1.msra.mxu0 0.0
        %2002 = vmatprep.subr.mxu0 0.0
        %2003 = vmatpush1.msra.mxu0 0.0
        %2004 = vmatprep.subr.mxu0 0.0
        %2005 = vmatpush1.msra.mxu0 0.0
        %2006 = vmatprep.subr.mxu0 0.0
        %2007 = vmatpush1.msra.mxu0 0.0
        %2008 = vmatprep.subr.mxu0 0.0
        %2009 = vmatpush1.msra.mxu0 0.0
        %2010 = vmatprep.subr.mxu0 0.0
        %2011 = vmatpush1.msra.mxu0 0.0
        %2012 = vmatprep.subr.mxu0 0.0
        %2013 = vmatpush1.msra.mxu0 0.0
        %2014 = vmatprep.mubr.f32.mxu0 0.0
        %2015 = vmatmul.mubr.f32.gmra.mrb[0].mxu0 %v1945
        %v2016 = vpop.f32.mrb[0].mxu0
        %v2017 = vadd.f32 0.0, %v2016
        %v2018 = vpop.f32.mrb[0].mxu0
        %2019 = vmatprep.mubr.f32.mxu0 0.0
        %2020 = vmatmul.mubr.f32.gmra.mrb[0].mxu0 %v1948
        %v2021 = vpop.f32.mrb[0].mxu0
        %v2022 = vadd.f32 0.0, %v2021
        %v2023 = vpop.f32.mrb[0].mxu0
        %2024 = vdwg.mxu0
        %2025 = vrot.lane.b32.xlu0 %v1815, 112
        %v2026 = vpop.permute.xlu0 %2025
        %2027 = vrot.lane.b32.xlu0 %v1820, 112
        %v2028 = vpop.permute.xlu0 %2027
        %2029 = vrot.lane.b32.xlu0 %v1815, 80
        %v2030 = vpop.permute.xlu0 %2029
        %2031 = vrot.lane.b32.xlu0 %v1820, 80
        %v2032 = vpop.permute.xlu0 %2031
        %v2033 = vsel %vm890, %v2026, 0
        %v2035 = vsel %vm890, %v2028, 0
        %v2037 = vsel %vm890, %v2030, 0
        %v2039 = vsel %vm890, %v2032, 0
        %2041 = vmatprep.subr.mxu0 0.0
        %2042 = vmatpush1.xpose.msra.mxu0 %v2037
        %2043 = vmatprep.subr.mxu0 0.0
        %2044 = vmatpush1.xpose.msra.mxu0 %v2039
        %2045 = vmatprep.subr.mxu0 0.0
        %2046 = vmatpush1.xpose.msra.mxu0 0.0
        %2047 = vmatprep.subr.mxu0 0.0
        %2048 = vmatpush1.xpose.msra.mxu0 0.0
        %2049 = vmatprep.subr.mxu0 0.0
        %2050 = vmatpush1.xpose.msra.mxu0 0.0
        %2051 = vmatprep.subr.mxu0 0.0
        %2052 = vmatpush1.xpose.msra.mxu0 0.0
        %2053 = vmatprep.subr.mxu0 0.0
        %2054 = vmatpush1.xpose.msra.mxu0 0.0
        %2055 = vmatprep.subr.mxu0 0.0
        %2056 = vmatpush1.xpose.msra.mxu0 0.0
        %2057 = vmatprep.subr.mxu0 0.0
        %2058 = vmatpush1.xpose.msra.mxu0 0.0
        %2059 = vmatprep.subr.mxu0 0.0
        %2060 = vmatpush1.xpose.msra.mxu0 0.0
        %2061 = vmatprep.subr.mxu0 0.0
        %2062 = vmatpush1.xpose.msra.mxu0 0.0
        %2063 = vmatprep.subr.mxu0 0.0
        %2064 = vmatpush1.xpose.msra.mxu0 0.0
        %2065 = vmatprep.subr.mxu0 0.0
        %2066 = vmatpush1.xpose.msra.mxu0 0.0
        %2067 = vmatprep.subr.mxu0 0.0
        %2068 = vmatpush1.xpose.msra.mxu0 0.0
        %2069 = vmatprep.subr.mxu0 0.0
        %2070 = vmatpush1.xpose.msra.mxu0 0.0
        %2071 = vmatprep.subr.mxu0 0.0
        %2072 = vmatpush1.xpose.msra.mxu0 0.0
        %2073 = vmatprep.subr.mxu0 0.0
        %2074 = vmatpush1.xpose.msra.mxu0 0.0
        %2075 = vmatprep.subr.mxu0 0.0
        %2076 = vmatpush1.xpose.msra.mxu0 0.0
        %2077 = vmatprep.subr.mxu0 0.0
        %2078 = vmatpush1.xpose.msra.mxu0 0.0
        %2079 = vmatprep.subr.mxu0 0.0
        %2080 = vmatpush1.xpose.msra.mxu0 0.0
        %2081 = vmatprep.subr.mxu0 0.0
        %2082 = vmatpush1.xpose.msra.mxu0 0.0
        %2083 = vmatprep.subr.mxu0 0.0
        %2084 = vmatpush1.xpose.msra.mxu0 0.0
        %2085 = vmatprep.subr.mxu0 0.0
        %2086 = vmatpush1.xpose.msra.mxu0 0.0
        %2087 = vmatprep.subr.mxu0 0.0
        %2088 = vmatpush1.xpose.msra.mxu0 0.0
        %2089 = vmatprep.subr.mxu0 0.0
        %2090 = vmatpush1.xpose.msra.mxu0 0.0
        %2091 = vmatprep.subr.mxu0 0.0
        %2092 = vmatpush1.xpose.msra.mxu0 0.0
        %2093 = vmatprep.subr.mxu0 0.0
        %2094 = vmatpush1.xpose.msra.mxu0 0.0
        %2095 = vmatprep.subr.mxu0 0.0
        %2096 = vmatpush1.xpose.msra.mxu0 0.0
        %2097 = vmatprep.subr.mxu0 0.0
        %2098 = vmatpush1.xpose.msra.mxu0 0.0
        %2099 = vmatprep.subr.mxu0 0.0
        %2100 = vmatpush1.xpose.msra.mxu0 0.0
        %2101 = vmatprep.subr.mxu0 0.0
        %2102 = vmatpush1.xpose.msra.mxu0 0.0
        %2103 = vmatprep.subr.mxu0 0.0
        %2104 = vmatpush1.xpose.msra.mxu0 0.0
        %2105 = vmatprep.mubr.f32.mxu0 0.0
        %2106 = vmatmul.mubr.f32.gmra.mrb[0].mxu0 %v2033
        %v2107 = vpop.f32.mrb[0].mxu0
        %v2108 = vadd.f32 0.0, %v2107
        %v2109 = vpop.f32.mrb[0].mxu0
        %2110 = vmatprep.mubr.f32.mxu0 0.0
        %2111 = vmatmul.mubr.f32.gmra.mrb[0].mxu0 %v2035
        %v2112 = vpop.f32.mrb[0].mxu0
        %v2113 = vadd.f32 0.0, %v2112
        %v2114 = vpop.f32.mrb[0].mxu0
        %2115 = vdwg.mxu0
        %v2116 = vmul.f32 %v2108, 0.25
        %v2117 = vmul.f32 %v2113, 0.25
        %v2118 = vadd.f32 %v2116, %v788
        %v2119 = vadd.f32 %v2117, %v789
        %v2120 = vsel %vm890, %v2118, -inf
        %2121 = vmax.xlane.f32.xlu0 %v2120
        %v2122 = vpop.xlane.xlu0 %2121
        %v2123 = vsel %vm890, %v2119, -inf
        %2124 = vmax.xlane.f32.xlu0 %v2123
        %v2125 = vpop.xlane.xlu0 %2124
        %v2126 = vsub.f32 %v2118, %v2122
        %v2127 = vsub.f32 %v2119, %v2125
        %v2128 = vmul.f32 %v2126, 1.442695
        %v2129 = vpow.pop %v2128
        %v2130 = vmul.f32 %v2127, 1.442695
        %v2131 = vpow.pop %v2130
        %v2132 = vsel %vm890, %v2129, 0.0
        %2133 = vadd.xlane.f32.xlu0 %v2132
        %v2134 = vpop.xlane.xlu0 %2133
        %v2135 = vsel %vm890, %v2131, 0.0
        %2136 = vadd.xlane.f32.xlu0 %v2135
        %v2137 = vpop.xlane.xlu0 %2136
        %v2138 = vrcp.pop %v2134
        %v2139 = vrcp.pop %v2137
        %v2140 = vmul.f32 %v2129, %v2138
        %v2141 = vmul.f32 %v2131, %v2139
        %2142 = vrot.lane.b32.xlu0 %v1815, 48
        %v2143 = vpop.permute.xlu0 %2142
        %2144 = vrot.lane.b32.xlu0 %v1820, 48
        %v2145 = vpop.permute.xlu0 %2144
        %v2149 = vsel %vm890, %v2140, 0
        %v2152 = vsel %vm890, %v2141, 0
        %2154 = vmatprep.subr.mxu0 0.0
        %2155 = vmatpush1.msra.mxu0 %v2143
        %2156 = vmatprep.subr.mxu0 0.0
        %2157 = vmatpush1.msra.mxu0 %v2145
        %2158 = vmatprep.subr.mxu0 0.0
        %2159 = vmatpush1.msra.mxu0 0.0
        %2160 = vmatprep.subr.mxu0 0.0
        %2161 = vmatpush1.msra.mxu0 0.0
        %2162 = vmatprep.subr.mxu0 0.0
        %2163 = vmatpush1.msra.mxu0 0.0
        %2164 = vmatprep.subr.mxu0 0.0
        %2165 = vmatpush1.msra.mxu0 0.0
        %2166 = vmatprep.subr.mxu0 0.0
        %2167 = vmatpush1.msra.mxu0 0.0
        %2168 = vmatprep.subr.mxu0 0.0
        %2169 = vmatpush1.msra.mxu0 0.0
        %2170 = vmatprep.subr.mxu0 0.0
        %2171 = vmatpush1.msra.mxu0 0.0
        %2172 = vmatprep.subr.mxu0 0.0
        %2173 = vmatpush1.msra.mxu0 0.0
        %2174 = vmatprep.subr.mxu0 0.0
        %2175 = vmatpush1.msra.mxu0 0.0
        %2176 = vmatprep.subr.mxu0 0.0
        %2177 = vmatpush1.msra.mxu0 0.0
        %2178 = vmatprep.subr.mxu0 0.0
        %2179 = vmatpush1.msra.mxu0 0.0
        %2180 = vmatprep.subr.mxu0 0.0
        %2181 = vmatpush1.msra.mxu0 0.0
        %2182 = vmatprep.subr.mxu0 0.0
        %2183 = vmatpush1.msra.mxu0 0.0
        %2184 = vmatprep.subr.mxu0 0.0
        %2185 = vmatpush1.msra.mxu0 0.0
        %2186 = vmatprep.subr.mxu0 0.0
        %2187 = vmatpush1.msra.mxu0 0.0
        %2188 = vmatprep.subr.mxu0 0.0
        %2189 = vmatpush1.msra.mxu0 0.0
        %2190 = vmatprep.subr.mxu0 0.0
        %2191 = vmatpush1.msra.mxu0 0.0
        %2192 = vmatprep.subr.mxu0 0.0
        %2193 = vmatpush1.msra.mxu0 0.0
        %2194 = vmatprep.subr.mxu0 0.0
        %2195 = vmatpush1.msra.mxu0 0.0
        %2196 = vmatprep.subr.mxu0 0.0
        %2197 = vmatpush1.msra.mxu0 0.0
        %2198 = vmatprep.subr.mxu0 0.0
        %2199 = vmatpush1.msra.mxu0 0.0
        %2200 = vmatprep.subr.mxu0 0.0
        %2201 = vmatpush1.msra.mxu0 0.0
        %2202 = vmatprep.subr.mxu0 0.0
        %2203 = vmatpush1.msra.mxu0 0.0
        %2204 = vmatprep.subr.mxu0 0.0
        %2205 = vmatpush1.msra.mxu0 0.0
        %2206 = vmatprep.subr.mxu0 0.0
        %2207 = vmatpush1.msra.mxu0 0.0
        %2208 = vmatprep.subr.mxu0 0.0
        %2209 = vmatpush1.msra.mxu0 0.0
        %2210 = vmatprep.subr.mxu0 0.0
        %2211 = vmatpush1.msra.mxu0 0.0
        %2212 = vmatprep.subr.mxu0 0.0
        %2213 = vmatpush1.msra.mxu0 0.0
        %2214 = vmatprep.subr.mxu0 0.0
        %2215 = vmatpush1.msra.mxu0 0.0
        %2216 = vmatprep.subr.mxu0 0.0
        %2217 = vmatpush1.msra.mxu0 0.0
        %2218 = vmatprep.mubr.f32.mxu0 0.0
        %2219 = vmatmul.mubr.f32.gmra.mrb[0].mxu0 %v2149
        %v2220 = vpop.f32.mrb[0].mxu0
        %v2221 = vadd.f32 0.0, %v2220
        %v2222 = vpop.f32.mrb[0].mxu0
        %2223 = vmatprep.mubr.f32.mxu0 0.0
        %2224 = vmatmul.mubr.f32.gmra.mrb[0].mxu0 %v2152
        %v2225 = vpop.f32.mrb[0].mxu0
        %v2226 = vadd.f32 0.0, %v2225
        %v2227 = vpop.f32.mrb[0].mxu0
        %2228 = vdwg.mxu0
        %2231 = vrot.lane.b32.xlu0 %v2221, 16
        %v2232 = vpop.permute.xlu0 %2231
        %2233 = vrot.lane.b32.xlu0 %v2226, 16
        %v2234 = vpop.permute.xlu0 %2233
        %v2237 = vsel %vm890, %v2017, %v2232
        %v2238 = vsel %vm890, %v2022, %v2234
        %s2239 = scalar_lea.vmem %s747, 32
        %v2240 = vld [vmem:[%s2239] sm:$0xff]
        %v2241 = vld [vmem:[%s2239 + $0x8] sm:$0xff]
        %v2242 = vld [vmem:[%s2239 + $0x10] sm:$0xff]
        %v2243 = vld [vmem:[%s2239 + $0x18] sm:$0xff]
        %s2244 = scalar_lea.vmem %s751, 1
        %v2245 = vld [vmem:[%s2244] sm:$0x1]
        %v2247 = vlaneseq
        %v2248 = vshrl.u32 %v2247, 7
        %v2249 = vsub.s32 0, %v2248
        %v2250 = vrot.slane %v2245, %v2249
        %v2253 = vsel %vm802, %v2237, 0
        %v2256 = vsel %vm802, %v2238, 0
        %2258 = vmatprep.subr.mxu0 0.0
        %2259 = vmatpush1.msra.mxu0 %v2240
        %2260 = vmatprep.subr.mxu0 0.0
        %2261 = vmatpush1.msra.mxu0 %v2241
        %2262 = vmatprep.subr.mxu0 0.0
        %2263 = vmatpush1.msra.mxu0 %v2242
        %2264 = vmatprep.subr.mxu0 0.0
        %2265 = vmatpush1.msra.mxu0 %v2243
        %2266 = vmatprep.subr.mxu0 0.0
        %2267 = vmatpush1.msra.mxu0 0.0
        %2268 = vmatprep.subr.mxu0 0.0
        %2269 = vmatpush1.msra.mxu0 0.0
        %2270 = vmatprep.subr.mxu0 0.0
        %2271 = vmatpush1.msra.mxu0 0.0
        %2272 = vmatprep.subr.mxu0 0.0
        %2273 = vmatpush1.msra.mxu0 0.0
        %2274 = vmatprep.subr.mxu0 0.0
        %2275 = vmatpush1.msra.mxu0 0.0
        %2276 = vmatprep.subr.mxu0 0.0
        %2277 = vmatpush1.msra.mxu0 0.0
        %2278 = vmatprep.subr.mxu0 0.0
        %2279 = vmatpush1.msra.mxu0 0.0
        %2280 = vmatprep.subr.mxu0 0.0
        %2281 = vmatpush1.msra.mxu0 0.0
        %2282 = vmatprep.subr.mxu0 0.0
        %2283 = vmatpush1.msra.mxu0 0.0
        %2284 = vmatprep.subr.mxu0 0.0
        %2285 = vmatpush1.msra.mxu0 0.0
        %2286 = vmatprep.subr.mxu0 0.0
        %2287 = vmatpush1.msra.mxu0 0.0
        %2288 = vmatprep.subr.mxu0 0.0
        %2289 = vmatpush1.msra.mxu0 0.0
        %2290 = vmatprep.subr.mxu0 0.0
        %2291 = vmatpush1.msra.mxu0 0.0
        %2292 = vmatprep.subr.mxu0 0.0
        %2293 = vmatpush1.msra.mxu0 0.0
        %2294 = vmatprep.subr.mxu0 0.0
        %2295 = vmatpush1.msra.mxu0 0.0
        %2296 = vmatprep.subr.mxu0 0.0
        %2297 = vmatpush1.msra.mxu0 0.0
        %2298 = vmatprep.subr.mxu0 0.0
        %2299 = vmatpush1.msra.mxu0 0.0
        %2300 = vmatprep.subr.mxu0 0.0
        %2301 = vmatpush1.msra.mxu0 0.0
        %2302 = vmatprep.subr.mxu0 0.0
        %2303 = vmatpush1.msra.mxu0 0.0
        %2304 = vmatprep.subr.mxu0 0.0
        %2305 = vmatpush1.msra.mxu0 0.0
        %2306 = vmatprep.subr.mxu0 0.0
        %2307 = vmatpush1.msra.mxu0 0.0
        %2308 = vmatprep.subr.mxu0 0.0
        %2309 = vmatpush1.msra.mxu0 0.0
        %2310 = vmatprep.subr.mxu0 0.0
        %2311 = vmatpush1.msra.mxu0 0.0
        %2312 = vmatprep.subr.mxu0 0.0
        %2313 = vmatpush1.msra.mxu0 0.0
        %2314 = vmatprep.subr.mxu0 0.0
        %2315 = vmatpush1.msra.mxu0 0.0
        %2316 = vmatprep.subr.mxu0 0.0
        %2317 = vmatpush1.msra.mxu0 0.0
        %2318 = vmatprep.subr.mxu0 0.0
        %2319 = vmatpush1.msra.mxu0 0.0
        %2320 = vmatprep.subr.mxu0 0.0
        %2321 = vmatpush1.msra.mxu0 0.0
        %2322 = vmatprep.mubr.f32.mxu0 0.0
        %2323 = vmatmul.mubr.f32.gmra.mrb[0].mxu0 %v2253
        %v2324 = vpop.f32.mrb[0].mxu0
        %v2325 = vadd.f32 %v2250, %v2324
        %v2326 = vpop.f32.mrb[0].mxu0
        %2327 = vmatprep.mubr.f32.mxu0 0.0
        %2328 = vmatmul.mubr.f32.gmra.mrb[0].mxu0 %v2256
        %v2329 = vpop.f32.mrb[0].mxu0
        %v2330 = vadd.f32 %v2250, %v2329
        %v2331 = vpop.f32.mrb[0].mxu0
        %2332 = vdwg.mxu0
        %v2333 = vadd.f32 %v1727, %v2325
        %v2334 = vadd.f32 %v1728, %v2330
        %s2335 = scalar_lea.vmem %s755, 1
        %v2336 = vld [vmem:[%s2335] sm:$0x1]
        %s2337 = scalar_lea.vmem %s759, 1
        %v2338 = vld [vmem:[%s2337] sm:$0x1]
        %v2339 = vsel %vm802, %v2333, 0.0
        %2340 = vadd.xlane.f32.xlu0 %v2339
        %v2341 = vpop.xlane.xlu0 %2340
        %v2342 = vsel %vm802, %v2334, 0.0
        %2343 = vadd.xlane.f32.xlu0 %v2342
        %v2344 = vpop.xlane.xlu0 %2343
        %v2345 = vmul.f32 %v2341, %v1403
        %v2346 = vmul.f32 %v2344, %v1403
        %v2347 = vsub.f32 %v2333, %v2345
        %v2348 = vsub.f32 %v2334, %v2346
        %v2349 = vmul.f32 %v2347, %v2347
        %v2350 = vmul.f32 %v2348, %v2348
        %v2351 = vsel %vm802, %v2349, 0.0
        %2352 = vadd.xlane.f32.xlu0 %v2351
        %v2353 = vpop.xlane.xlu0 %2352
        %v2354 = vsel %vm802, %v2350, 0.0
        %2355 = vadd.xlane.f32.xlu0 %v2354
        %v2356 = vpop.xlane.xlu0 %2355
        %v2357 = vmul.f32 %v2353, %v1403
        %v2358 = vmul.f32 %v2356, %v1403
        %v2359 = vadd.f32 %v2357, 1e-12
        %v2360 = vadd.f32 %v2358, 1e-12
        %v2361 = vrsqrt.pop %v2359
        %v2362 = vrsqrt.pop %v2360
        %v2363 = vmul.f32 %v2347, %v2361
        %v2364 = vmul.f32 %v2348, %v2362
        %v2366 = vlaneseq
        %v2367 = vshrl.u32 %v2366, 7
        %v2368 = vsub.s32 0, %v2367
        %v2369 = vrot.slane %v2336, %v2368
        %v2371 = vmul.f32 %v2363, %v2369
        %v2372 = vmul.f32 %v2364, %v2369
        %v2374 = vlaneseq
        %v2375 = vshrl.u32 %v2374, 7
        %v2376 = vsub.s32 0, %v2375
        %v2377 = vrot.slane %v2338, %v2376
        %v2379 = vadd.f32 %v2371, %v2377
        %v2380 = vadd.f32 %v2372, %v2377
        %s2381 = scalar_lea.vmem %s764, 32
        %v2382 = vld [vmem:[%s2381] sm:$0xff]
        %v2383 = vld [vmem:[%s2381 + $0x8] sm:$0xff]
        %v2384 = vld [vmem:[%s2381 + $0x10] sm:$0xff]
        %v2385 = vld [vmem:[%s2381 + $0x18] sm:$0xff]
        %s2386 = scalar_lea.vmem %s768, 1
        %v2387 = vld [vmem:[%s2386] sm:$0x1]
        %v2389 = vlaneseq
        %v2390 = vshrl.u32 %v2389, 7
        %v2391 = vsub.s32 0, %v2390
        %v2392 = vrot.slane %v2387, %v2391
        %v2395 = vsel %vm802, %v2379, 0
        %v2398 = vsel %vm802, %v2380, 0
        %2400 = vmatprep.subr.mxu0 0.0
        %2401 = vmatpush1.msra.mxu0 %v2382
        %2402 = vmatprep.subr.mxu0 0.0
        %2403 = vmatpush1.msra.mxu0 %v2383
        %2404 = vmatprep.subr.mxu0 0.0
        %2405 = vmatpush1.msra.mxu0 %v2384
        %2406 = vmatprep.subr.mxu0 0.0
        %2407 = vmatpush1.msra.mxu0 %v2385
        %2408 = vmatprep.subr.mxu0 0.0
        %2409 = vmatpush1.msra.mxu0 0.0
        %2410 = vmatprep.subr.mxu0 0.0
        %2411 = vmatpush1.msra.mxu0 0.0
        %2412 = vmatprep.subr.mxu0 0.0
        %2413 = vmatpush1.msra.mxu0 0.0
        %2414 = vmatprep.subr.mxu0 0.0
        %2415 = vmatpush1.msra.mxu0 0.0
        %2416 = vmatprep.subr.mxu0 0.0
        %2417 = vmatpush1.msra.mxu0 0.0
        %2418 = vmatprep.subr.mxu0 0.0
        %2419 = vmatpush1.msra.mxu0 0.0
        %2420 = vmatprep.subr.mxu0 0.0
        %2421 = vmatpush1.msra.mxu0 0.0
        %2422 = vmatprep.subr.mxu0 0.0
        %2423 = vmatpush1.msra.mxu0 0.0
        %2424 = vmatprep.subr.mxu0 0.0
        %2425 = vmatpush1.msra.mxu0 0.0
        %2426 = vmatprep.subr.mxu0 0.0
        %2427 = vmatpush1.msra.mxu0 0.0
        %2428 = vmatprep.subr.mxu0 0.0
        %2429 = vmatpush1.msra.mxu0 0.0
        %2430 = vmatprep.subr.mxu0 0.0
        %2431 = vmatpush1.msra.mxu0 0.0
        %2432 = vmatprep.subr.mxu0 0.0
        %2433 = vmatpush1.msra.mxu0 0.0
        %2434 = vmatprep.subr.mxu0 0.0
        %2435 = vmatpush1.msra.mxu0 0.0
        %2436 = vmatprep.subr.mxu0 0.0
        %2437 = vmatpush1.msra.mxu0 0.0
        %2438 = vmatprep.subr.mxu0 0.0
        %2439 = vmatpush1.msra.mxu0 0.0
        %2440 = vmatprep.subr.mxu0 0.0
        %2441 = vmatpush1.msra.mxu0 0.0
        %2442 = vmatprep.subr.mxu0 0.0
        %2443 = vmatpush1.msra.mxu0 0.0
        %2444 = vmatprep.subr.mxu0 0.0
        %2445 = vmatpush1.msra.mxu0 0.0
        %2446 = vmatprep.subr.mxu0 0.0
        %2447 = vmatpush1.msra.mxu0 0.0
        %2448 = vmatprep.subr.mxu0 0.0
        %2449 = vmatpush1.msra.mxu0 0.0
        %2450 = vmatprep.subr.mxu0 0.0
        %2451 = vmatpush1.msra.mxu0 0.0
        %2452 = vmatprep.subr.mxu0 0.0
        %2453 = vmatpush1.msra.mxu0 0.0
        %2454 = vmatprep.subr.mxu0 0.0
        %2455 = vmatpush1.msra.mxu0 0.0
        %2456 = vmatprep.subr.mxu0 0.0
        %2457 = vmatpush1.msra.mxu0 0.0
        %2458 = vmatprep.subr.mxu0 0.0
        %2459 = vmatpush1.msra.mxu0 0.0
        %2460 = vmatprep.subr.mxu0 0.0
        %2461 = vmatpush1.msra.mxu0 0.0
        %2462 = vmatprep.subr.mxu0 0.0
        %2463 = vmatpush1.msra.mxu0 0.0
        %2464 = vmatprep.mubr.f32.mxu0 0.0
        %2465 = vmatmul.mubr.f32.gmra.mrb[0].mxu0 %v2395
        %v2466 = vpop.f32.mrb[0].mxu0
        %v2467 = vadd.f32 %v2392, %v2466
        %v2468 = vpop.f32.mrb[0].mxu0
        %2469 = vmatprep.mubr.f32.mxu0 0.0
        %2470 = vmatmul.mubr.f32.gmra.mrb[0].mxu0 %v2398
        %v2471 = vpop.f32.mrb[0].mxu0
        %v2472 = vadd.f32 %v2392, %v2471
        %v2473 = vpop.f32.mrb[0].mxu0
        %2474 = vdwg.mxu0
        %v2475 = vmul.f32 %v2467, 0.5
        %v2476 = vmul.f32 %v2472, 0.5
        %v2477 = vmul.f32 %v2467, 0.70710677
        %v2478 = vmul.f32 %v2472, 0.70710677
        %vm2479 = vcmp.ge.f32.partialorder %v2477, 0.0
        %vm2480 = vcmp.ge.f32.partialorder %v2478, 0.0
        %v2481 = vsel %vm2479, 1.0, -1.0
        %v2482 = vsel %vm2480, 1.0, -1.0
        %v2483 = vand.u32 2147483647, %v2477
        %v2484 = vand.u32 2147483647, %v2478
        %v2485 = vmul.f32 %v2483, 0.3275911
        %v2486 = vmul.f32 %v2484, 0.3275911
        %v2487 = vadd.f32 %v2485, 1.0
        %v2488 = vadd.f32 %v2486, 1.0
        %v2489 = vrcp.pop %v2487
        %v2490 = vmul.f32 1.0, %v2489
        %v2491 = vrcp.pop %v2488
        %v2492 = vmul.f32 1.0, %v2491
        %v2493 = vmul.f32 %v2490, 1.0614054
        %v2494 = vmul.f32 %v2492, 1.0614054
        %v2495 = vadd.f32 %v2493, -1.4531521
        %v2496 = vadd.f32 %v2494, -1.4531521
        %v2497 = vmul.f32 %v2490, %v2495
        %v2498 = vmul.f32 %v2492, %v2496
        %v2499 = vadd.f32 %v2497, 1.4214138
        %v2500 = vadd.f32 %v2498, 1.4214138
        %v2501 = vmul.f32 %v2490, %v2499
        %v2502 = vmul.f32 %v2492, %v2500
        %v2503 = vadd.f32 %v2501, -0.28449672
        %v2504 = vadd.f32 %v2502, -0.28449672
        %v2505 = vmul.f32 %v2490, %v2503
        %v2506 = vmul.f32 %v2492, %v2504
        %v2507 = vadd.f32 %v2505, 0.2548296
        %v2508 = vadd.f32 %v2506, 0.2548296
        %v2509 = vmul.f32 %v2490, %v2507
        %v2510 = vmul.f32 %v2492, %v2508
        %v2511 = vsub.f32 0.0, %v2483
        %v2512 = vsub.f32 0.0, %v2484
        %v2513 = vmul.f32 %v2511, %v2483
        %v2514 = vmul.f32 %v2512, %v2484
        %v2515 = vmul.f32 %v2513, 1.442695
        %v2516 = vpow.pop %v2515
        %v2517 = vmul.f32 %v2514, 1.442695
        %v2518 = vpow.pop %v2517
        %v2519 = vmul.f32 %v2509, %v2516
        %v2520 = vmul.f32 %v2510, %v2518
        %v2521 = vsub.f32 1.0, %v2519
        %v2522 = vsub.f32 1.0, %v2520
        %v2523 = vmul.f32 %v2481, %v2521
        %v2524 = vmul.f32 %v2482, %v2522
        %v2525 = vadd.f32 %v2523, 1.0
        %v2526 = vadd.f32 %v2524, 1.0
        %v2527 = vmul.f32 %v2475, %v2525
        %v2528 = vmul.f32 %v2476, %v2526
        %s2529 = scalar_lea.vmem %s773, 64
        %v2530 = vld [vmem:[%s2529] sm:$0xff]
        %v2531 = vld [vmem:[%s2529 + $0x8] sm:$0xff]
        %v2532 = vld [vmem:[%s2529 + $0x10] sm:$0xff]
        %v2533 = vld [vmem:[%s2529 + $0x18] sm:$0xff]
        %v2534 = vld [vmem:[%s2529 + $0x20] sm:$0xff]
        %v2535 = vld [vmem:[%s2529 + $0x28] sm:$0xff]
        %v2536 = vld [vmem:[%s2529 + $0x30] sm:$0xff]
        %v2537 = vld [vmem:[%s2529 + $0x38] sm:$0xff]
        %s2538 = scalar_lea.vmem %s777, 1
        %v2539 = vld [vmem:[%s2538] sm:$0x1]
        %v2541 = vlaneseq
        %v2542 = vshrl.u32 %v2541, 7
        %v2543 = vsub.s32 0, %v2542
        %v2544 = vrot.slane %v2539, %v2543
        %v2547 = vsel %vm1601, %v2527, 0
        %v2550 = vsel %vm1601, %v2528, 0
        %2552 = vmatprep.subr.mxu0 0.0
        %2553 = vmatpush1.msra.mxu0 %v2530
        %2554 = vmatprep.subr.mxu0 0.0
        %2555 = vmatpush1.msra.mxu0 %v2531
        %2556 = vmatprep.subr.mxu0 0.0
        %2557 = vmatpush1.msra.mxu0 %v2532
        %2558 = vmatprep.subr.mxu0 0.0
        %2559 = vmatpush1.msra.mxu0 %v2533
        %2560 = vmatprep.subr.mxu0 0.0
        %2561 = vmatpush1.msra.mxu0 %v2534
        %2562 = vmatprep.subr.mxu0 0.0
        %2563 = vmatpush1.msra.mxu0 %v2535
        %2564 = vmatprep.subr.mxu0 0.0
        %2565 = vmatpush1.msra.mxu0 %v2536
        %2566 = vmatprep.subr.mxu0 0.0
        %2567 = vmatpush1.msra.mxu0 %v2537
        %2568 = vmatprep.subr.mxu0 0.0
        %2569 = vmatpush1.msra.mxu0 0.0
        %2570 = vmatprep.subr.mxu0 0.0
        %2571 = vmatpush1.msra.mxu0 0.0
        %2572 = vmatprep.subr.mxu0 0.0
        %2573 = vmatpush1.msra.mxu0 0.0
        %2574 = vmatprep.subr.mxu0 0.0
        %2575 = vmatpush1.msra.mxu0 0.0
        %2576 = vmatprep.subr.mxu0 0.0
        %2577 = vmatpush1.msra.mxu0 0.0
        %2578 = vmatprep.subr.mxu0 0.0
        %2579 = vmatpush1.msra.mxu0 0.0
        %2580 = vmatprep.subr.mxu0 0.0
        %2581 = vmatpush1.msra.mxu0 0.0
        %2582 = vmatprep.subr.mxu0 0.0
        %2583 = vmatpush1.msra.mxu0 0.0
        %2584 = vmatprep.subr.mxu0 0.0
        %2585 = vmatpush1.msra.mxu0 0.0
        %2586 = vmatprep.subr.mxu0 0.0
        %2587 = vmatpush1.msra.mxu0 0.0
        %2588 = vmatprep.subr.mxu0 0.0
        %2589 = vmatpush1.msra.mxu0 0.0
        %2590 = vmatprep.subr.mxu0 0.0
        %2591 = vmatpush1.msra.mxu0 0.0
        %2592 = vmatprep.subr.mxu0 0.0
        %2593 = vmatpush1.msra.mxu0 0.0
        %2594 = vmatprep.subr.mxu0 0.0
        %2595 = vmatpush1.msra.mxu0 0.0
        %2596 = vmatprep.subr.mxu0 0.0
        %2597 = vmatpush1.msra.mxu0 0.0
        %2598 = vmatprep.subr.mxu0 0.0
        %2599 = vmatpush1.msra.mxu0 0.0
        %2600 = vmatprep.subr.mxu0 0.0
        %2601 = vmatpush1.msra.mxu0 0.0
        %2602 = vmatprep.subr.mxu0 0.0
        %2603 = vmatpush1.msra.mxu0 0.0
        %2604 = vmatprep.subr.mxu0 0.0
        %2605 = vmatpush1.msra.mxu0 0.0
        %2606 = vmatprep.subr.mxu0 0.0
        %2607 = vmatpush1.msra.mxu0 0.0
        %2608 = vmatprep.subr.mxu0 0.0
        %2609 = vmatpush1.msra.mxu0 0.0
        %2610 = vmatprep.subr.mxu0 0.0
        %2611 = vmatpush1.msra.mxu0 0.0
        %2612 = vmatprep.subr.mxu0 0.0
        %2613 = vmatpush1.msra.mxu0 0.0
        %2614 = vmatprep.subr.mxu0 0.0
        %2615 = vmatpush1.msra.mxu0 0.0
        %2616 = vmatprep.mubr.f32.mxu0 0.0
        %2617 = vmatmul.mubr.f32.gmra.mrb[0].mxu0 %v2547
        %v2618 = vpop.f32.mrb[0].mxu0
        %v2619 = vadd.f32 %v2544, %v2618
        %v2620 = vpop.f32.mrb[0].mxu0
        %2621 = vmatprep.mubr.f32.mxu0 0.0
        %2622 = vmatmul.mubr.f32.gmra.mrb[0].mxu0 %v2550
        %v2623 = vpop.f32.mrb[0].mxu0
        %v2624 = vadd.f32 %v2544, %v2623
        %v2625 = vpop.f32.mrb[0].mxu0
        %2626 = vdwg.mxu0
        %v2627 = vadd.f32 %v2379, %v2619
        %v2628 = vadd.f32 %v2380, %v2624
        %s2629 = scalar_lea.vmem %s781, 1
        %v2630 = vld [vmem:[%s2629] sm:$0x1]
        %s2631 = scalar_lea.vmem %s785, 1
        %v2632 = vld [vmem:[%s2631] sm:$0x1]
        %v2633 = vsel %vm802, %v2627, 0.0
        %2634 = vadd.xlane.f32.xlu0 %v2633
        %v2635 = vpop.xlane.xlu0 %2634
        %v2636 = vsel %vm802, %v2628, 0.0
        %2637 = vadd.xlane.f32.xlu0 %v2636
        %v2638 = vpop.xlane.xlu0 %2637
        %v2639 = vmul.f32 %v2635, %v1403
        %v2640 = vmul.f32 %v2638, %v1403
        %v2641 = vsub.f32 %v2627, %v2639
        %v2642 = vsub.f32 %v2628, %v2640
        %v2643 = vmul.f32 %v2641, %v2641
        %v2644 = vmul.f32 %v2642, %v2642
        %v2645 = vsel %vm802, %v2643, 0.0
        %2646 = vadd.xlane.f32.xlu0 %v2645
        %v2647 = vpop.xlane.xlu0 %2646
        %v2648 = vsel %vm802, %v2644, 0.0
        %2649 = vadd.xlane.f32.xlu0 %v2648
        %v2650 = vpop.xlane.xlu0 %2649
        %v2651 = vmul.f32 %v2647, %v1403
        %v2652 = vmul.f32 %v2650, %v1403
        %v2653 = vadd.f32 %v2651, 1e-12
        %v2654 = vadd.f32 %v2652, 1e-12
        %v2655 = vrsqrt.pop %v2653
        %v2656 = vrsqrt.pop %v2654
        %v2657 = vmul.f32 %v2641, %v2655
        %v2658 = vmul.f32 %v2642, %v2656
        %v2660 = vlaneseq
        %v2661 = vshrl.u32 %v2660, 7
        %v2662 = vsub.s32 0, %v2661
        %v2663 = vrot.slane %v2630, %v2662
        %v2665 = vmul.f32 %v2657, %v2663
        %v2666 = vmul.f32 %v2658, %v2663
        %v2668 = vlaneseq
        %v2669 = vshrl.u32 %v2668, 7
        %v2670 = vsub.s32 0, %v2669
        %v2671 = vrot.slane %v2632, %v2670
        %v2673 = vadd.f32 %v2665, %v2671
        %v2674 = vadd.f32 %v2666, %v2671
        %v2676 = vsel %vm890, %v790, 0
        %2678 = vmatprep.subr.mxu0 0.0
        %2679 = vmatpush1.msra.mxu0 %v2673
        %2680 = vmatprep.subr.mxu0 0.0
        %2681 = vmatpush1.msra.mxu0 %v2674
        %2682 = vmatprep.subr.mxu0 0.0
        %2683 = vmatpush1.msra.mxu0 0.0
        %2684 = vmatprep.subr.mxu0 0.0
        %2685 = vmatpush1.msra.mxu0 0.0
        %2686 = vmatprep.subr.mxu0 0.0
        %2687 = vmatpush1.msra.mxu0 0.0
        %2688 = vmatprep.subr.mxu0 0.0
        %2689 = vmatpush1.msra.mxu0 0.0
        %2690 = vmatprep.subr.mxu0 0.0
        %2691 = vmatpush1.msra.mxu0 0.0
        %2692 = vmatprep.subr.mxu0 0.0
        %2693 = vmatpush1.msra.mxu0 0.0
        %2694 = vmatprep.subr.mxu0 0.0
        %2695 = vmatpush1.msra.mxu0 0.0
        %2696 = vmatprep.subr.mxu0 0.0
        %2697 = vmatpush1.msra.mxu0 0.0
        %2698 = vmatprep.subr.mxu0 0.0
        %2699 = vmatpush1.msra.mxu0 0.0
        %2700 = vmatprep.subr.mxu0 0.0
        %2701 = vmatpush1.msra.mxu0 0.0
        %2702 = vmatprep.subr.mxu0 0.0
        %2703 = vmatpush1.msra.mxu0 0.0
        %2704 = vmatprep.subr.mxu0 0.0
        %2705 = vmatpush1.msra.mxu0 0.0
        %2706 = vmatprep.subr.mxu0 0.0
        %2707 = vmatpush1.msra.mxu0 0.0
        %2708 = vmatprep.subr.mxu0 0.0
        %2709 = vmatpush1.msra.mxu0 0.0
        %2710 = vmatprep.subr.mxu0 0.0
        %2711 = vmatpush1.msra.mxu0 0.0
        %2712 = vmatprep.subr.mxu0 0.0
        %2713 = vmatpush1.msra.mxu0 0.0
        %2714 = vmatprep.subr.mxu0 0.0
        %2715 = vmatpush1.msra.mxu0 0.0
        %2716 = vmatprep.subr.mxu0 0.0
        %2717 = vmatpush1.msra.mxu0 0.0
        %2718 = vmatprep.subr.mxu0 0.0
        %2719 = vmatpush1.msra.mxu0 0.0
        %2720 = vmatprep.subr.mxu0 0.0
        %2721 = vmatpush1.msra.mxu0 0.0
        %2722 = vmatprep.subr.mxu0 0.0
        %2723 = vmatpush1.msra.mxu0 0.0
        %2724 = vmatprep.subr.mxu0 0.0
        %2725 = vmatpush1.msra.mxu0 0.0
        %2726 = vmatprep.subr.mxu0 0.0
        %2727 = vmatpush1.msra.mxu0 0.0
        %2728 = vmatprep.subr.mxu0 0.0
        %2729 = vmatpush1.msra.mxu0 0.0
        %2730 = vmatprep.subr.mxu0 0.0
        %2731 = vmatpush1.msra.mxu0 0.0
        %2732 = vmatprep.subr.mxu0 0.0
        %2733 = vmatpush1.msra.mxu0 0.0
        %2734 = vmatprep.subr.mxu0 0.0
        %2735 = vmatpush1.msra.mxu0 0.0
        %2736 = vmatprep.subr.mxu0 0.0
        %2737 = vmatpush1.msra.mxu0 0.0
        %2738 = vmatprep.subr.mxu0 0.0
        %2739 = vmatpush1.msra.mxu0 0.0
        %2740 = vmatprep.subr.mxu0 0.0
        %2741 = vmatpush1.msra.mxu0 0.0
        %2742 = vmatprep.mubr.f32.mxu0 0.0
        %2743 = vmatmul.mubr.f32.gmra.mrb[0].mxu0 %v2676
        %v2744 = vpop.f32.mrb[0].mxu0
        %v2745 = vadd.f32 0.0, %v2744
        %v2746 = vpop.f32.mrb[0].mxu0
        %2747 = vdwg.mxu0
        %vm2748 = vcmask 123904
        %v2749 = vsel %vm2748, %v790, 0.0
        %2750 = vadd.xlane.f32.xlu0 %v2749
        %v2751 = vpop.xlane.xlu0 %2750
        %v2752 = vmax.f32 %v2751, 1e-09
        %v2753 = vrcp.pop %v2752
        %v2754 = vmul.f32 %v2745, %v2753
        %v2755 = vmul.f32 %v2754, %v2754
        %vm2756 = vcmask 254976
        %v2757 = vsel %vm2756, %v2755, 0.0
        %2758 = vadd.xlane.f32.xlu0 %v2757
        %v2759 = vpop.xlane.xlu0 %2758
        %v2760 = vmax.f32 %v2759, 1e-24
        %v2761 = vrsqrt.pop %v2760
        %v2762 = vmul.f32 %v2754, %v2761
        %2763 = vst.msk [vmem:[%s729] sm:$0x3] %vm2756, %v2762
        %s2764 = sand.u32 %s433, 1
        %s2765 = scalar_lea.sflag [#allocation4], %s2764
        %s2766 = sand.u32 %s433, 1
        %s2767 = smul.addr %s2766, 2
        %s2768 = scalar_lea.vmem [#allocation7], %s2767
        // Predicated region
        $region89: #{tpu_custom_call.1} parent=79 // pred_check
          %p2769 = pneg %p443
        $region90: #{tpu_custom_call.1} parent=79 // pred_check_branch
          %2771 = sbr.rel (%p2769) target = $region92
        $region91: #{tpu_custom_call.1} parent=79 // pred_region
          %s2773 = ssub.s32 32, 32
          %2774 = vsyncadd %s2765, %s2773
          %s2775 = smul.addr %s35, 32
          %s2776 = scalar_lea.hbm %s15, %s2775
          %s2778 = sshll.u32 %s2768, 4
          %s2779 = int_to_ptr.vmem [resolvable:$true] %s2778
          %2781 = dma.vmem_to_hbm [thread:$0]  %s2779, 32, %s2776, %s2765
        $region92: #{tpu_custom_call.1} parent=79 // pred_fallthru
          _
      $region80: #{tpu_custom_call.1} parent=5 // pred_fallthru
        _
      %p2782 = scmp.le.s32.totalorder 2, %s30
      // Predicated region
      $region93: #{tpu_custom_call.1} parent=5 // pred_check
        %p2783 = pneg %p2782
      $region94: #{tpu_custom_call.1} parent=5 // pred_check_branch
        %2785 = sbr.rel (%p2783) target = $region96
      $region95: #{tpu_custom_call.1} parent=5 // pred_region
        %s2786 = ssub.s32 %s30, 2
        // Predicated region
        $region97: #{tpu_custom_call.1} parent=95 // pred_check
          %p2787 = pneg %p449
        $region98: #{tpu_custom_call.1} parent=95 // pred_check_branch
          %2789 = sbr.rel (%p2787) target = $region100
        $region99: #{tpu_custom_call.1} parent=95 // pred_region
          %s2790 = sand.u32 %s434, 1
          %s2791 = scalar_lea.sflag [#allocation4], %s2790
          %s2792 = sand.u32 %s434, 1
          %s2793 = smul.addr %s2792, 2
          %s2794 = scalar_lea.vmem [#allocation7], %s2793
          %2795 = dma.done %s2791, 32
        $region100: #{tpu_custom_call.1} parent=95 // pred_fallthru
          _
      $region96: #{tpu_custom_call.1} parent=5 // pred_fallthru
        _
    $region6: #{tpu_custom_call.1} parent=1 // loop_footer
      %s34 = sadd.s32 1, %s30
    $region7: #{tpu_custom_call.1} parent=1 // loop_footer_branch
      %29 = sbr.rel target = $region3
    $region8: #{tpu_custom_call.1} parent=1 // loop_exit
      _
    %2796 = vsyncpa [#allocation3], 1
    %s2797 = scalar_lea.sflag [#allocation3], 1
    %2798 = vsyncpa %s2797, 1
    %2799 = vsyncpa [#allocation6], 1
    %s2800 = scalar_lea.sflag [#allocation6], 1
    %2801 = vsyncpa %s2800, 1
    %2802 = vsyncpa [#allocation4], 1
    %s2803 = scalar_lea.sflag [#allocation4], 1
    %2804 = vsyncpa %s2803, 1

</llo_original>
